<compile_context>
chip_gen: v7x
topology: tpu7x:2x2x1
jax: 0.10.0
libtpu: 0.0.40
codegen_flags: <defaults>
</compile_context>

<pallas_src>
import functools

import jax
import jax.numpy as jnp
from jax.experimental import pallas as pl
from jax.experimental.pallas import tpu as pltpu


# tap order t = (dy+1)*3 + (dx+1), matching a (kh, kw) row-major 3x3 kernel
_OFFSETS = tuple((dy, dx) for dy in (-1, 0, 1) for dx in (-1, 0, 1))


# ----------------------------------------------------------------------------
# Fused kernel (one batch element per grid step)
# ----------------------------------------------------------------------------

def _encoder_kernel(mask_ref, x_ref, w0_ref, b0_ref,
                    w1_ref, b1_ref, w2_ref, b2_ref,
                    w3_ref, b3_ref, w4_ref, b4_ref,
                    prim_ref, feat_ref, *, W):
    """Layout: feature maps are (C, H*W) — flattened spatial axis on lanes.

    mask_ref : (9, HW)        per-tap source-validity masks (host-built)
    x_ref    : (1, 7, HW)     input image
    w0_ref   : (9, C1, 7)     primary conv, per-tap weight
    b0_ref   : (C1, 1)
    wK_ref   : (9, Cout, Cin) DWS block K: depthwise+pointwise+BN folded per tap
    bK_ref   : (Cout, 1)      folded bias (pointwise bias + dw bias + BN shift)
    prim_ref : (1, C1, HW)    primary feature   (output 1)
    feat_ref : (1, C2, HW)    encoded feature   (output 2)
    """
    HW = x_ref.shape[-1]

    # Load the 9 masks once; reused by all 5 conv layers.
    masks = [mask_ref[pl.ds(t, 1), :] for t in range(9)]   # each (1, HW)

    def conv3x3(feat, w_ref, b_ref):
        """feat: (Cin, HW) -> relu(sum_t w_ref[t] @ masked_shift_t(feat) + b)."""
        # Center tap (dy=dx=0): no roll, mask is all-ones -> skip both.
        acc = jnp.dot(w_ref[4], feat, preferred_element_type=jnp.float32)
        for t, (dy, dx) in enumerate(_OFFSETS):
            if t == 4:
                continue
            s = dy * W + dx                               # flat source shift
            tap = pltpu.roll(feat, shift=(-s) % HW, axis=1)
            tap = tap * masks[t]                          # zero out-of-image
            acc = acc + jnp.dot(w_ref[t], tap,
                                preferred_element_type=jnp.float32)
        return jnp.maximum(acc + b_ref[...], 0.0)

    # ---- primary_encoder: Conv2d(7, C1, 3, pad=1) + ReLU
    x = x_ref[0].astype(jnp.float32)                      # (7, HW)
    prim = conv3x3(x, w0_ref, b0_ref)                     # (C1, HW)
    prim_ref[0] = prim.astype(prim_ref.dtype)

    # ---- main_encoder: 4 x [DWSConv 3x3 -> BN -> ReLU], all folded per tap
    feat = conv3x3(prim, w1_ref, b1_ref)
    feat = conv3x3(feat, w2_ref, b2_ref)
    feat = conv3x3(feat, w3_ref, b3_ref)
    feat = conv3x3(feat, w4_ref, b4_ref)
    feat_ref[0] = feat.astype(feat_ref.dtype)


def _make_tap_mask(H, W):
    """(9, H*W) f32 masks: 1 where the tap's source pixel is inside the image."""
    HW = H * W
    f = jnp.arange(HW, dtype=jnp.int32)
    y = f // W
    x = f % W
    rows = []
    for dy, dx in _OFFSETS:
        rows.append((y + dy >= 0) & (y + dy < H) & (x + dx >= 0) & (x + dx < W))
    return jnp.stack(rows, axis=0).astype(jnp.float32)


# ----------------------------------------------------------------------------
# Wrapper (accepts / returns NCHW like the PyTorch module)
# ----------------------------------------------------------------------------

def encoder_forward_pallas(kp, x_nchw):
    N, Cin, H, W = x_nchw.shape
    HW = H * W
    x = x_nchw.reshape(N, Cin, HW)                        # free reshape, no pad
    mask = _make_tap_mask(H, W)                           # (9, HW)

    c1 = kp["w0"].shape[1]
    c2 = kp["blocks"][-1]["w"].shape[1]

    def const_spec(a):
        nd = a.ndim
        return pl.BlockSpec(a.shape, lambda n, _nd=nd: (0,) * _nd)

    args = [mask, x, kp["w0"], kp["b0"]]
    in_specs = [const_spec(mask),
                pl.BlockSpec((1, Cin, HW), lambda n: (n, 0, 0)),
                const_spec(kp["w0"]), const_spec(kp["b0"])]
    for blk in kp["blocks"]:
        args += [blk["w"], blk["b"]]
        in_specs += [const_spec(blk["w"]), const_spec(blk["b"])]

    kernel = functools.partial(_encoder_kernel, W=W)
    prim, feat = pl.pallas_call(
        kernel,
        out_shape=(jax.ShapeDtypeStruct((N, c1, HW), x_nchw.dtype),
                   jax.ShapeDtypeStruct((N, c2, HW), x_nchw.dtype)),
        grid=(N,),
        in_specs=in_specs,
        out_specs=(pl.BlockSpec((1, c1, HW), lambda n: (n, 0, 0)),
                   pl.BlockSpec((1, c2, HW), lambda n: (n, 0, 0))),
        compiler_params=pltpu.CompilerParams(
            dimension_semantics=("parallel",),
            vmem_limit_bytes=48 * 1024 * 1024),
    )(*args)

    return prim.reshape(N, c1, H, W), feat.reshape(N, c2, H, W)


# ----------------------------------------------------------------------------
# Parameters (synthetic, deterministic) + one-time folding / re-layout
# ----------------------------------------------------------------------------

def _normal(key, shape, scale=0.1):
    return scale * jax.random.normal(key, shape, dtype=jnp.float32)


def make_encoder_params(out_channels, key):
    """Synthetic parameters, PyTorch-module-like layout."""
    c1, c2, c3 = out_channels * 2, out_channels, out_channels * 3 // 4
    keys = iter(jax.random.split(key, 64))
    params = {
        "primary_w": _normal(next(keys), (3, 3, 7, c1)),   # HWIO
        "primary_b": _normal(next(keys), (c1,)),
        "blocks": [],
    }
    for cin, cout in [(c1, c2), (c2, c3), (c3, c3), (c3, c2)]:
        params["blocks"].append({
            "dw": _normal(next(keys), (3, 3, cin)),        # depthwise taps
            "db": _normal(next(keys), (cin,)),
            "pw": _normal(next(keys), (cin, cout)),        # pointwise (in, out)
            "pb": _normal(next(keys), (cout,)),
            "bn_gamma": 1.0 + _normal(next(keys), (cout,), 0.05),
            "bn_beta": _normal(next(keys), (cout,), 0.05),
            "bn_mean": _normal(next(keys), (cout,), 0.05),
            "bn_var": 1.0 + jnp.abs(_normal(next(keys), (cout,), 0.05)),
        })
    return params


def prepare_kernel_params(params, eps=1e-5):
    """Fold eval-mode BN + depthwise weights/bias into per-tap pointwise
    matrices, re-layout for the fused kernel. Done ONCE, outside the forward."""
    w = params["primary_w"]                              # (3, 3, 7, c1)
    _, _, cin, c1 = w.shape
    w0 = jnp.transpose(w.reshape(9, cin, c1), (0, 2, 1))  # (9, c1, 7)
    kp = {"w0": w0, "b0": params["primary_b"].reshape(c1, 1), "blocks": []}
    for blk in params["blocks"]:
        s = blk["bn_gamma"] / jnp.sqrt(blk["bn_var"] + eps)
        pw_f = blk["pw"] * s[None, :]                    # (cin, cout), BN scale
        pb_f = blk["pb"] * s + (blk["bn_beta"] - blk["bn_mean"] * s)
        pb_eff = pw_f.T @ blk["db"] + pb_f               # fold depthwise bias
        cin_b = blk["dw"].shape[-1]
        dwr = blk["dw"].reshape(9, cin_b)                # (9, cin)
        wt = pw_f.T[None, :, :] * dwr[:, None, :]        # (9, cout, cin)
        kp["blocks"].append({"w": wt, "b": pb_eff.reshape(-1, 1)})
    return kp


# ----------------------------------------------------------------------------
# Pure-JAX reference (XLA convs) for a numerics check
# ----------------------------------------------------------------------------

def _reference_forward(params, x, eps=1e-5):
    dn = ("NCHW", "HWIO", "NCHW")
    hp = jax.lax.Precision.HIGHEST
    y = jax.lax.conv_general_dilated(x, params["primary_w"], (1, 1),
                                     ((1, 1), (1, 1)), dimension_numbers=dn,
                                     precision=hp)
    prim = jax.nn.relu(y + params["primary_b"][None, :, None, None])
    feat = prim
    for blk in params["blocks"]:
        cin = blk["dw"].shape[-1]
        d = jax.lax.conv_general_dilated(
            feat, blk["dw"][:, :, None, :], (1, 1), ((1, 1), (1, 1)),
            dimension_numbers=dn, feature_group_count=cin, precision=hp)
        d = d + blk["db"][None, :, None, None]
        y = jax.lax.conv_general_dilated(
            d, blk["pw"][None, None, :, :], (1, 1), ((0, 0), (0, 0)),
            dimension_numbers=dn, precision=hp)
        y = y + blk["pb"][None, :, None, None]
        s = blk["bn_gamma"] / jnp.sqrt(blk["bn_var"] + eps)
        y = (s[None, :, None, None] * (y - blk["bn_mean"][None, :, None, None])
             + blk["bn_beta"][None, :, None, None])
        feat = jax.nn.relu(y)
    return prim, feat


if __name__ == "__main__":
    out_channels = 8            # channel1=16, channel2=8, channel3=6
    N, Cin, H, W = 2, 7, 16, 16

    key = jax.random.PRNGKey(0)
    k_params, k_x = jax.random.split(key)
    params = make_encoder_params(out_channels, k_params)
    kparams = prepare_kernel_params(params)          # BN / dw fold, done once
    x = jax.random.normal(k_x, (N, Cin, H, W), dtype=jnp.float32)

    fwd = jax.jit(encoder_forward_pallas)
    primary_feature, feature = fwd(kparams, x)
    jax.block_until_ready((primary_feature, feature))

    assert primary_feature.shape == (N, out_channels * 2, H, W)
    assert feature.shape == (N, out_channels, H, W)

    ref_prim, ref_feat = _reference_forward(params, x)
    assert jnp.allclose(primary_feature, ref_prim, atol=5e-2, rtol=5e-2), \
        float(jnp.max(jnp.abs(primary_feature - ref_prim)))
    assert jnp.allclose(feature, ref_feat, atol=5e-2, rtol=5e-2), \
        float(jnp.max(jnp.abs(feature - ref_feat)))

    print("KERNEL_OK")
</pallas_src>

<mosaic_0001>
module attributes {stable_mosaic.version = 11 : i64} {
  func.func @_encoder_kernel(%arg0: i32, %arg1: memref<9x256xf32, #tpu.memory_space<vmem>>, %arg2: memref<1x7x256xf32, #tpu.memory_space<vmem>>, %arg3: memref<9x16x7xf32, #tpu.memory_space<vmem>>, %arg4: memref<16x1xf32, #tpu.memory_space<vmem>>, %arg5: memref<9x8x16xf32, #tpu.memory_space<vmem>>, %arg6: memref<8x1xf32, #tpu.memory_space<vmem>>, %arg7: memref<9x6x8xf32, #tpu.memory_space<vmem>>, %arg8: memref<6x1xf32, #tpu.memory_space<vmem>>, %arg9: memref<9x6x6xf32, #tpu.memory_space<vmem>>, %arg10: memref<6x1xf32, #tpu.memory_space<vmem>>, %arg11: memref<9x8x6xf32, #tpu.memory_space<vmem>>, %arg12: memref<8x1xf32, #tpu.memory_space<vmem>>, %arg13: memref<1x16x256xf32, #tpu.memory_space<vmem>>, %arg14: memref<1x8x256xf32, #tpu.memory_space<vmem>>) attributes {dimension_semantics = [#tpu.dimension_semantics<parallel>], iteration_bounds = array<i64: 2>, scalar_prefetch = 0 : i64, scratch_operands = 0 : i64, tpu.core_type = #tpu.core_type<tc>, window_params = [{pipeline_mode = #tpu.pipeline_mode<synchronous>, transform_indices = @transform_0, window_bounds = array<i64: 9, 256>}, {transform_indices = @transform_1, window_bounds = array<i64: 1, 7, 256>}, {pipeline_mode = #tpu.pipeline_mode<synchronous>, transform_indices = @transform_2, window_bounds = array<i64: 9, 16, 7>}, {pipeline_mode = #tpu.pipeline_mode<synchronous>, transform_indices = @transform_3, window_bounds = array<i64: 16, 1>}, {pipeline_mode = #tpu.pipeline_mode<synchronous>, transform_indices = @transform_4, window_bounds = array<i64: 9, 8, 16>}, {pipeline_mode = #tpu.pipeline_mode<synchronous>, transform_indices = @transform_5, window_bounds = array<i64: 8, 1>}, {pipeline_mode = #tpu.pipeline_mode<synchronous>, transform_indices = @transform_6, window_bounds = array<i64: 9, 6, 8>}, {pipeline_mode = #tpu.pipeline_mode<synchronous>, transform_indices = @transform_7, window_bounds = array<i64: 6, 1>}, {pipeline_mode = #tpu.pipeline_mode<synchronous>, transform_indices = @transform_8, window_bounds = array<i64: 9, 6, 6>}, {pipeline_mode = #tpu.pipeline_mode<synchronous>, transform_indices = @transform_9, window_bounds = array<i64: 6, 1>}, {pipeline_mode = #tpu.pipeline_mode<synchronous>, transform_indices = @transform_10, window_bounds = array<i64: 9, 8, 6>}, {pipeline_mode = #tpu.pipeline_mode<synchronous>, transform_indices = @transform_11, window_bounds = array<i64: 8, 1>}, {transform_indices = @transform_12, window_bounds = array<i64: 1, 16, 256>}, {transform_indices = @transform_13, window_bounds = array<i64: 1, 8, 256>}]} {
    %c0 = arith.constant 0 : index
    %c0_0 = arith.constant 0 : index
    %0 = vector.load %arg1[%c0, %c0_0] : memref<9x256xf32, #tpu.memory_space<vmem>>, vector<1x256xf32>
    %c1 = arith.constant 1 : index
    %c0_1 = arith.constant 0 : index
    %1 = vector.load %arg1[%c1, %c0_1] : memref<9x256xf32, #tpu.memory_space<vmem>>, vector<1x256xf32>
    %c2 = arith.constant 2 : index
    %c0_2 = arith.constant 0 : index
    %2 = vector.load %arg1[%c2, %c0_2] : memref<9x256xf32, #tpu.memory_space<vmem>>, vector<1x256xf32>
    %c3 = arith.constant 3 : index
    %c0_3 = arith.constant 0 : index
    %3 = vector.load %arg1[%c3, %c0_3] : memref<9x256xf32, #tpu.memory_space<vmem>>, vector<1x256xf32>
    %c5 = arith.constant 5 : index
    %c0_4 = arith.constant 0 : index
    %4 = vector.load %arg1[%c5, %c0_4] : memref<9x256xf32, #tpu.memory_space<vmem>>, vector<1x256xf32>
    %c6 = arith.constant 6 : index
    %c0_5 = arith.constant 0 : index
    %5 = vector.load %arg1[%c6, %c0_5] : memref<9x256xf32, #tpu.memory_space<vmem>>, vector<1x256xf32>
    %c7 = arith.constant 7 : index
    %c0_6 = arith.constant 0 : index
    %6 = vector.load %arg1[%c7, %c0_6] : memref<9x256xf32, #tpu.memory_space<vmem>>, vector<1x256xf32>
    %c8 = arith.constant 8 : index
    %c0_7 = arith.constant 0 : index
    %7 = vector.load %arg1[%c8, %c0_7] : memref<9x256xf32, #tpu.memory_space<vmem>>, vector<1x256xf32>
    %c0_8 = arith.constant 0 : index
    %c0_9 = arith.constant 0 : index
    %c0_10 = arith.constant 0 : index
    %8 = vector.load %arg2[%c0_8, %c0_9, %c0_10] : memref<1x7x256xf32, #tpu.memory_space<vmem>>, vector<1x7x256xf32>
    %9 = vector.shape_cast %8 : vector<1x7x256xf32> to vector<7x256xf32>
    %c4 = arith.constant 4 : index
    %c0_11 = arith.constant 0 : index
    %c0_12 = arith.constant 0 : index
    %10 = vector.load %arg3[%c4, %c0_11, %c0_12] : memref<9x16x7xf32, #tpu.memory_space<vmem>>, vector<1x16x7xf32>
    %11 = vector.shape_cast %10 : vector<1x16x7xf32> to vector<16x7xf32>
    %cst = arith.constant dense<0.000000e+00> : vector<16x256xf32>
    %12 = tpu.matmul %11, %9, %cst {dimension_numbers = #tpu.dot_dimension_numbers<[1], [0], [0], [1], [0, 0, 1, 1], [], []>} : vector<16x7xf32>, vector<7x256xf32>, vector<16x256xf32> -> vector<16x256xf32>
    %c17_i32 = arith.constant 17 : i32
    %13 = tpu.dynamic_rotate %9 by %c17_i32 dim 1 : vector<7x256xf32>, i32 -> vector<7x256xf32>
    %14 = vector.broadcast %0 : vector<1x256xf32> to vector<7x256xf32>
    %15 = arith.mulf %13, %14 : vector<7x256xf32>
    %c0_13 = arith.constant 0 : index
    %c0_14 = arith.constant 0 : index
    %c0_15 = arith.constant 0 : index
    %16 = vector.load %arg3[%c0_13, %c0_14, %c0_15] : memref<9x16x7xf32, #tpu.memory_space<vmem>>, vector<1x16x7xf32>
    %17 = vector.shape_cast %16 : vector<1x16x7xf32> to vector<16x7xf32>
    %cst_16 = arith.constant dense<0.000000e+00> : vector<16x256xf32>
    %18 = tpu.matmul %17, %15, %cst_16 {dimension_numbers = #tpu.dot_dimension_numbers<[1], [0], [0], [1], [0, 0, 1, 1], [], []>} : vector<16x7xf32>, vector<7x256xf32>, vector<16x256xf32> -> vector<16x256xf32>
    %19 = arith.addf %12, %18 : vector<16x256xf32>
    %c16_i32 = arith.constant 16 : i32
    %20 = tpu.dynamic_rotate %9 by %c16_i32 dim 1 : vector<7x256xf32>, i32 -> vector<7x256xf32>
    %21 = vector.broadcast %1 : vector<1x256xf32> to vector<7x256xf32>
    %22 = arith.mulf %20, %21 : vector<7x256xf32>
    %c1_17 = arith.constant 1 : index
    %c0_18 = arith.constant 0 : index
    %c0_19 = arith.constant 0 : index
    %23 = vector.load %arg3[%c1_17, %c0_18, %c0_19] : memref<9x16x7xf32, #tpu.memory_space<vmem>>, vector<1x16x7xf32>
    %24 = vector.shape_cast %23 : vector<1x16x7xf32> to vector<16x7xf32>
    %cst_20 = arith.constant dense<0.000000e+00> : vector<16x256xf32>
    %25 = tpu.matmul %24, %22, %cst_20 {dimension_numbers = #tpu.dot_dimension_numbers<[1], [0], [0], [1], [0, 0, 1, 1], [], []>} : vector<16x7xf32>, vector<7x256xf32>, vector<16x256xf32> -> vector<16x256xf32>
    %26 = arith.addf %19, %25 : vector<16x256xf32>
    %c15_i32 = arith.constant 15 : i32
    %27 = tpu.dynamic_rotate %9 by %c15_i32 dim 1 : vector<7x256xf32>, i32 -> vector<7x256xf32>
    %28 = vector.broadcast %2 : vector<1x256xf32> to vector<7x256xf32>
    %29 = arith.mulf %27, %28 : vector<7x256xf32>
    %c2_21 = arith.constant 2 : index
    %c0_22 = arith.constant 0 : index
    %c0_23 = arith.constant 0 : index
    %30 = vector.load %arg3[%c2_21, %c0_22, %c0_23] : memref<9x16x7xf32, #tpu.memory_space<vmem>>, vector<1x16x7xf32>
    %31 = vector.shape_cast %30 : vector<1x16x7xf32> to vector<16x7xf32>
    %cst_24 = arith.constant dense<0.000000e+00> : vector<16x256xf32>
    %32 = tpu.matmul %31, %29, %cst_24 {dimension_numbers = #tpu.dot_dimension_numbers<[1], [0], [0], [1], [0, 0, 1, 1], [], []>} : vector<16x7xf32>, vector<7x256xf32>, vector<16x256xf32> -> vector<16x256xf32>
    %33 = arith.addf %26, %32 : vector<16x256xf32>
    %c1_i32 = arith.constant 1 : i32
    %34 = tpu.dynamic_rotate %9 by %c1_i32 dim 1 : vector<7x256xf32>, i32 -> vector<7x256xf32>
    %35 = vector.broadcast %3 : vector<1x256xf32> to vector<7x256xf32>
    %36 = arith.mulf %34, %35 : vector<7x256xf32>
    %c3_25 = arith.constant 3 : index
    %c0_26 = arith.constant 0 : index
    %c0_27 = arith.constant 0 : index
    %37 = vector.load %arg3[%c3_25, %c0_26, %c0_27] : memref<9x16x7xf32, #tpu.memory_space<vmem>>, vector<1x16x7xf32>
    %38 = vector.shape_cast %37 : vector<1x16x7xf32> to vector<16x7xf32>
    %cst_28 = arith.constant dense<0.000000e+00> : vector<16x256xf32>
    %39 = tpu.matmul %38, %36, %cst_28 {dimension_numbers = #tpu.dot_dimension_numbers<[1], [0], [0], [1], [0, 0, 1, 1], [], []>} : vector<16x7xf32>, vector<7x256xf32>, vector<16x256xf32> -> vector<16x256xf32>
    %40 = arith.addf %33, %39 : vector<16x256xf32>
    %c255_i32 = arith.constant 255 : i32
    %41 = tpu.dynamic_rotate %9 by %c255_i32 dim 1 : vector<7x256xf32>, i32 -> vector<7x256xf32>
    %42 = vector.broadcast %4 : vector<1x256xf32> to vector<7x256xf32>
    %43 = arith.mulf %41, %42 : vector<7x256xf32>
    %c5_29 = arith.constant 5 : index
    %c0_30 = arith.constant 0 : index
    %c0_31 = arith.constant 0 : index
    %44 = vector.load %arg3[%c5_29, %c0_30, %c0_31] : memref<9x16x7xf32, #tpu.memory_space<vmem>>, vector<1x16x7xf32>
    %45 = vector.shape_cast %44 : vector<1x16x7xf32> to vector<16x7xf32>
    %cst_32 = arith.constant dense<0.000000e+00> : vector<16x256xf32>
    %46 = tpu.matmul %45, %43, %cst_32 {dimension_numbers = #tpu.dot_dimension_numbers<[1], [0], [0], [1], [0, 0, 1, 1], [], []>} : vector<16x7xf32>, vector<7x256xf32>, vector<16x256xf32> -> vector<16x256xf32>
    %47 = arith.addf %40, %46 : vector<16x256xf32>
    %c241_i32 = arith.constant 241 : i32
    %48 = tpu.dynamic_rotate %9 by %c241_i32 dim 1 : vector<7x256xf32>, i32 -> vector<7x256xf32>
    %49 = vector.broadcast %5 : vector<1x256xf32> to vector<7x256xf32>
    %50 = arith.mulf %48, %49 : vector<7x256xf32>
    %c6_33 = arith.constant 6 : index
    %c0_34 = arith.constant 0 : index
    %c0_35 = arith.constant 0 : index
    %51 = vector.load %arg3[%c6_33, %c0_34, %c0_35] : memref<9x16x7xf32, #tpu.memory_space<vmem>>, vector<1x16x7xf32>
    %52 = vector.shape_cast %51 : vector<1x16x7xf32> to vector<16x7xf32>
    %cst_36 = arith.constant dense<0.000000e+00> : vector<16x256xf32>
    %53 = tpu.matmul %52, %50, %cst_36 {dimension_numbers = #tpu.dot_dimension_numbers<[1], [0], [0], [1], [0, 0, 1, 1], [], []>} : vector<16x7xf32>, vector<7x256xf32>, vector<16x256xf32> -> vector<16x256xf32>
    %54 = arith.addf %47, %53 : vector<16x256xf32>
    %c240_i32 = arith.constant 240 : i32
    %55 = tpu.dynamic_rotate %9 by %c240_i32 dim 1 : vector<7x256xf32>, i32 -> vector<7x256xf32>
    %56 = vector.broadcast %6 : vector<1x256xf32> to vector<7x256xf32>
    %57 = arith.mulf %55, %56 : vector<7x256xf32>
    %c7_37 = arith.constant 7 : index
    %c0_38 = arith.constant 0 : index
    %c0_39 = arith.constant 0 : index
    %58 = vector.load %arg3[%c7_37, %c0_38, %c0_39] : memref<9x16x7xf32, #tpu.memory_space<vmem>>, vector<1x16x7xf32>
    %59 = vector.shape_cast %58 : vector<1x16x7xf32> to vector<16x7xf32>
    %cst_40 = arith.constant dense<0.000000e+00> : vector<16x256xf32>
    %60 = tpu.matmul %59, %57, %cst_40 {dimension_numbers = #tpu.dot_dimension_numbers<[1], [0], [0], [1], [0, 0, 1, 1], [], []>} : vector<16x7xf32>, vector<7x256xf32>, vector<16x256xf32> -> vector<16x256xf32>
    %61 = arith.addf %54, %60 : vector<16x256xf32>
    %c239_i32 = arith.constant 239 : i32
    %62 = tpu.dynamic_rotate %9 by %c239_i32 dim 1 : vector<7x256xf32>, i32 -> vector<7x256xf32>
    %63 = vector.broadcast %7 : vector<1x256xf32> to vector<7x256xf32>
    %64 = arith.mulf %62, %63 : vector<7x256xf32>
    %c8_41 = arith.constant 8 : index
    %c0_42 = arith.constant 0 : index
    %c0_43 = arith.constant 0 : index
    %65 = vector.load %arg3[%c8_41, %c0_42, %c0_43] : memref<9x16x7xf32, #tpu.memory_space<vmem>>, vector<1x16x7xf32>
    %66 = vector.shape_cast %65 : vector<1x16x7xf32> to vector<16x7xf32>
    %cst_44 = arith.constant dense<0.000000e+00> : vector<16x256xf32>
    %67 = tpu.matmul %66, %64, %cst_44 {dimension_numbers = #tpu.dot_dimension_numbers<[1], [0], [0], [1], [0, 0, 1, 1], [], []>} : vector<16x7xf32>, vector<7x256xf32>, vector<16x256xf32> -> vector<16x256xf32>
    %68 = arith.addf %61, %67 : vector<16x256xf32>
    %c0_45 = arith.constant 0 : index
    %c0_46 = arith.constant 0 : index
    %69 = vector.load %arg4[%c0_45, %c0_46] : memref<16x1xf32, #tpu.memory_space<vmem>>, vector<16x1xf32>
    %70 = vector.broadcast %69 : vector<16x1xf32> to vector<16x256xf32>
    %71 = arith.addf %68, %70 : vector<16x256xf32>
    %cst_47 = arith.constant 0.000000e+00 : f32
    %72 = vector.broadcast %cst_47 : f32 to vector<16x256xf32>
    %73 = arith.maximumf %71, %72 : vector<16x256xf32>
    %c0_48 = arith.constant 0 : index
    %c0_49 = arith.constant 0 : index
    %c0_50 = arith.constant 0 : index
    %74 = vector.load %arg13[%c0_48, %c0_49, %c0_50] : memref<1x16x256xf32, #tpu.memory_space<vmem>>, vector<1x16x256xf32>
    %75 = vector.shape_cast %74 : vector<1x16x256xf32> to vector<16x256xf32>
    %76 = vector.shape_cast %73 : vector<16x256xf32> to vector<1x16x256xf32>
    tpu.vector_store %arg13[%c0_48, %c0_49, %c0_50], %76 {strides = array<i32>} : memref<1x16x256xf32, #tpu.memory_space<vmem>>, vector<1x16x256xf32>,
    %c4_51 = arith.constant 4 : index
    %c0_52 = arith.constant 0 : index
    %c0_53 = arith.constant 0 : index
    %77 = vector.load %arg5[%c4_51, %c0_52, %c0_53] : memref<9x8x16xf32, #tpu.memory_space<vmem>>, vector<1x8x16xf32>
    %78 = vector.shape_cast %77 : vector<1x8x16xf32> to vector<8x16xf32>
    %cst_54 = arith.constant dense<0.000000e+00> : vector<8x256xf32>
    %79 = tpu.matmul %78, %73, %cst_54 {dimension_numbers = #tpu.dot_dimension_numbers<[1], [0], [0], [1], [0, 0, 1, 1], [], []>} : vector<8x16xf32>, vector<16x256xf32>, vector<8x256xf32> -> vector<8x256xf32>
    %c17_i32_55 = arith.constant 17 : i32
    %80 = tpu.dynamic_rotate %73 by %c17_i32_55 dim 1 : vector<16x256xf32>, i32 -> vector<16x256xf32>
    %81 = vector.broadcast %0 : vector<1x256xf32> to vector<16x256xf32>
    %82 = arith.mulf %80, %81 : vector<16x256xf32>
    %c0_56 = arith.constant 0 : index
    %c0_57 = arith.constant 0 : index
    %c0_58 = arith.constant 0 : index
    %83 = vector.load %arg5[%c0_56, %c0_57, %c0_58] : memref<9x8x16xf32, #tpu.memory_space<vmem>>, vector<1x8x16xf32>
    %84 = vector.shape_cast %83 : vector<1x8x16xf32> to vector<8x16xf32>
    %cst_59 = arith.constant dense<0.000000e+00> : vector<8x256xf32>
    %85 = tpu.matmul %84, %82, %cst_59 {dimension_numbers = #tpu.dot_dimension_numbers<[1], [0], [0], [1], [0, 0, 1, 1], [], []>} : vector<8x16xf32>, vector<16x256xf32>, vector<8x256xf32> -> vector<8x256xf32>
    %86 = arith.addf %79, %85 : vector<8x256xf32>
    %c16_i32_60 = arith.constant 16 : i32
    %87 = tpu.dynamic_rotate %73 by %c16_i32_60 dim 1 : vector<16x256xf32>, i32 -> vector<16x256xf32>
    %88 = vector.broadcast %1 : vector<1x256xf32> to vector<16x256xf32>
    %89 = arith.mulf %87, %88 : vector<16x256xf32>
    %c1_61 = arith.constant 1 : index
    %c0_62 = arith.constant 0 : index
    %c0_63 = arith.constant 0 : index
    %90 = vector.load %arg5[%c1_61, %c0_62, %c0_63] : memref<9x8x16xf32, #tpu.memory_space<vmem>>, vector<1x8x16xf32>
    %91 = vector.shape_cast %90 : vector<1x8x16xf32> to vector<8x16xf32>
    %cst_64 = arith.constant dense<0.000000e+00> : vector<8x256xf32>
    %92 = tpu.matmul %91, %89, %cst_64 {dimension_numbers = #tpu.dot_dimension_numbers<[1], [0], [0], [1], [0, 0, 1, 1], [], []>} : vector<8x16xf32>, vector<16x256xf32>, vector<8x256xf32> -> vector<8x256xf32>
    %93 = arith.addf %86, %92 : vector<8x256xf32>
    %c15_i32_65 = arith.constant 15 : i32
    %94 = tpu.dynamic_rotate %73 by %c15_i32_65 dim 1 : vector<16x256xf32>, i32 -> vector<16x256xf32>
    %95 = vector.broadcast %2 : vector<1x256xf32> to vector<16x256xf32>
    %96 = arith.mulf %94, %95 : vector<16x256xf32>
    %c2_66 = arith.constant 2 : index
    %c0_67 = arith.constant 0 : index
    %c0_68 = arith.constant 0 : index
    %97 = vector.load %arg5[%c2_66, %c0_67, %c0_68] : memref<9x8x16xf32, #tpu.memory_space<vmem>>, vector<1x8x16xf32>
    %98 = vector.shape_cast %97 : vector<1x8x16xf32> to vector<8x16xf32>
    %cst_69 = arith.constant dense<0.000000e+00> : vector<8x256xf32>
    %99 = tpu.matmul %98, %96, %cst_69 {dimension_numbers = #tpu.dot_dimension_numbers<[1], [0], [0], [1], [0, 0, 1, 1], [], []>} : vector<8x16xf32>, vector<16x256xf32>, vector<8x256xf32> -> vector<8x256xf32>
    %100 = arith.addf %93, %99 : vector<8x256xf32>
    %c1_i32_70 = arith.constant 1 : i32
    %101 = tpu.dynamic_rotate %73 by %c1_i32_70 dim 1 : vector<16x256xf32>, i32 -> vector<16x256xf32>
    %102 = vector.broadcast %3 : vector<1x256xf32> to vector<16x256xf32>
    %103 = arith.mulf %101, %102 : vector<16x256xf32>
    %c3_71 = arith.constant 3 : index
    %c0_72 = arith.constant 0 : index
    %c0_73 = arith.constant 0 : index
    %104 = vector.load %arg5[%c3_71, %c0_72, %c0_73] : memref<9x8x16xf32, #tpu.memory_space<vmem>>, vector<1x8x16xf32>
    %105 = vector.shape_cast %104 : vector<1x8x16xf32> to vector<8x16xf32>
    %cst_74 = arith.constant dense<0.000000e+00> : vector<8x256xf32>
    %106 = tpu.matmul %105, %103, %cst_74 {dimension_numbers = #tpu.dot_dimension_numbers<[1], [0], [0], [1], [0, 0, 1, 1], [], []>} : vector<8x16xf32>, vector<16x256xf32>, vector<8x256xf32> -> vector<8x256xf32>
    %107 = arith.addf %100, %106 : vector<8x256xf32>
    %c255_i32_75 = arith.constant 255 : i32
    %108 = tpu.dynamic_rotate %73 by %c255_i32_75 dim 1 : vector<16x256xf32>, i32 -> vector<16x256xf32>
    %109 = vector.broadcast %4 : vector<1x256xf32> to vector<16x256xf32>
    %110 = arith.mulf %108, %109 : vector<16x256xf32>
    %c5_76 = arith.constant 5 : index
    %c0_77 = arith.constant 0 : index
    %c0_78 = arith.constant 0 : index
    %111 = vector.load %arg5[%c5_76, %c0_77, %c0_78] : memref<9x8x16xf32, #tpu.memory_space<vmem>>, vector<1x8x16xf32>
    %112 = vector.shape_cast %111 : vector<1x8x16xf32> to vector<8x16xf32>
    %cst_79 = arith.constant dense<0.000000e+00> : vector<8x256xf32>
    %113 = tpu.matmul %112, %110, %cst_79 {dimension_numbers = #tpu.dot_dimension_numbers<[1], [0], [0], [1], [0, 0, 1, 1], [], []>} : vector<8x16xf32>, vector<16x256xf32>, vector<8x256xf32> -> vector<8x256xf32>
    %114 = arith.addf %107, %113 : vector<8x256xf32>
    %c241_i32_80 = arith.constant 241 : i32
    %115 = tpu.dynamic_rotate %73 by %c241_i32_80 dim 1 : vector<16x256xf32>, i32 -> vector<16x256xf32>
    %116 = vector.broadcast %5 : vector<1x256xf32> to vector<16x256xf32>
    %117 = arith.mulf %115, %116 : vector<16x256xf32>
    %c6_81 = arith.constant 6 : index
    %c0_82 = arith.constant 0 : index
    %c0_83 = arith.constant 0 : index
    %118 = vector.load %arg5[%c6_81, %c0_82, %c0_83] : memref<9x8x16xf32, #tpu.memory_space<vmem>>, vector<1x8x16xf32>
    %119 = vector.shape_cast %118 : vector<1x8x16xf32> to vector<8x16xf32>
    %cst_84 = arith.constant dense<0.000000e+00> : vector<8x256xf32>
    %120 = tpu.matmul %119, %117, %cst_84 {dimension_numbers = #tpu.dot_dimension_numbers<[1], [0], [0], [1], [0, 0, 1, 1], [], []>} : vector<8x16xf32>, vector<16x256xf32>, vector<8x256xf32> -> vector<8x256xf32>
    %121 = arith.addf %114, %120 : vector<8x256xf32>
    %c240_i32_85 = arith.constant 240 : i32
    %122 = tpu.dynamic_rotate %73 by %c240_i32_85 dim 1 : vector<16x256xf32>, i32 -> vector<16x256xf32>
    %123 = vector.broadcast %6 : vector<1x256xf32> to vector<16x256xf32>
    %124 = arith.mulf %122, %123 : vector<16x256xf32>
    %c7_86 = arith.constant 7 : index
    %c0_87 = arith.constant 0 : index
    %c0_88 = arith.constant 0 : index
    %125 = vector.load %arg5[%c7_86, %c0_87, %c0_88] : memref<9x8x16xf32, #tpu.memory_space<vmem>>, vector<1x8x16xf32>
    %126 = vector.shape_cast %125 : vector<1x8x16xf32> to vector<8x16xf32>
    %cst_89 = arith.constant dense<0.000000e+00> : vector<8x256xf32>
    %127 = tpu.matmul %126, %124, %cst_89 {dimension_numbers = #tpu.dot_dimension_numbers<[1], [0], [0], [1], [0, 0, 1, 1], [], []>} : vector<8x16xf32>, vector<16x256xf32>, vector<8x256xf32> -> vector<8x256xf32>
    %128 = arith.addf %121, %127 : vector<8x256xf32>
    %c239_i32_90 = arith.constant 239 : i32
    %129 = tpu.dynamic_rotate %73 by %c239_i32_90 dim 1 : vector<16x256xf32>, i32 -> vector<16x256xf32>
    %130 = vector.broadcast %7 : vector<1x256xf32> to vector<16x256xf32>
    %131 = arith.mulf %129, %130 : vector<16x256xf32>
    %c8_91 = arith.constant 8 : index
    %c0_92 = arith.constant 0 : index
    %c0_93 = arith.constant 0 : index
    %132 = vector.load %arg5[%c8_91, %c0_92, %c0_93] : memref<9x8x16xf32, #tpu.memory_space<vmem>>, vector<1x8x16xf32>
    %133 = vector.shape_cast %132 : vector<1x8x16xf32> to vector<8x16xf32>
    %cst_94 = arith.constant dense<0.000000e+00> : vector<8x256xf32>
    %134 = tpu.matmul %133, %131, %cst_94 {dimension_numbers = #tpu.dot_dimension_numbers<[1], [0], [0], [1], [0, 0, 1, 1], [], []>} : vector<8x16xf32>, vector<16x256xf32>, vector<8x256xf32> -> vector<8x256xf32>
    %135 = arith.addf %128, %134 : vector<8x256xf32>
    %c0_95 = arith.constant 0 : index
    %c0_96 = arith.constant 0 : index
    %136 = vector.load %arg6[%c0_95, %c0_96] : memref<8x1xf32, #tpu.memory_space<vmem>>, vector<8x1xf32>
    %137 = vector.broadcast %136 : vector<8x1xf32> to vector<8x256xf32>
    %138 = arith.addf %135, %137 : vector<8x256xf32>
    %cst_97 = arith.constant 0.000000e+00 : f32
    %139 = vector.broadcast %cst_97 : f32 to vector<8x256xf32>
    %140 = arith.maximumf %138, %139 : vector<8x256xf32>
    %c4_98 = arith.constant 4 : index
    %c0_99 = arith.constant 0 : index
    %c0_100 = arith.constant 0 : index
    %141 = vector.load %arg7[%c4_98, %c0_99, %c0_100] : memref<9x6x8xf32, #tpu.memory_space<vmem>>, vector<1x6x8xf32>
    %142 = vector.shape_cast %141 : vector<1x6x8xf32> to vector<6x8xf32>
    %cst_101 = arith.constant dense<0.000000e+00> : vector<6x256xf32>
    %143 = tpu.matmul %142, %140, %cst_101 {dimension_numbers = #tpu.dot_dimension_numbers<[1], [0], [0], [1], [0, 0, 1, 1], [], []>} : vector<6x8xf32>, vector<8x256xf32>, vector<6x256xf32> -> vector<6x256xf32>
    %c17_i32_102 = arith.constant 17 : i32
    %144 = tpu.dynamic_rotate %140 by %c17_i32_102 dim 1 : vector<8x256xf32>, i32 -> vector<8x256xf32>
    %145 = vector.broadcast %0 : vector<1x256xf32> to vector<8x256xf32>
    %146 = arith.mulf %144, %145 : vector<8x256xf32>
    %c0_103 = arith.constant 0 : index
    %c0_104 = arith.constant 0 : index
    %c0_105 = arith.constant 0 : index
    %147 = vector.load %arg7[%c0_103, %c0_104, %c0_105] : memref<9x6x8xf32, #tpu.memory_space<vmem>>, vector<1x6x8xf32>
    %148 = vector.shape_cast %147 : vector<1x6x8xf32> to vector<6x8xf32>
    %cst_106 = arith.constant dense<0.000000e+00> : vector<6x256xf32>
    %149 = tpu.matmul %148, %146, %cst_106 {dimension_numbers = #tpu.dot_dimension_numbers<[1], [0], [0], [1], [0, 0, 1, 1], [], []>} : vector<6x8xf32>, vector<8x256xf32>, vector<6x256xf32> -> vector<6x256xf32>
    %150 = arith.addf %143, %149 : vector<6x256xf32>
    %c16_i32_107 = arith.constant 16 : i32
    %151 = tpu.dynamic_rotate %140 by %c16_i32_107 dim 1 : vector<8x256xf32>, i32 -> vector<8x256xf32>
    %152 = vector.broadcast %1 : vector<1x256xf32> to vector<8x256xf32>
    %153 = arith.mulf %151, %152 : vector<8x256xf32>
    %c1_108 = arith.constant 1 : index
    %c0_109 = arith.constant 0 : index
    %c0_110 = arith.constant 0 : index
    %154 = vector.load %arg7[%c1_108, %c0_109, %c0_110] : memref<9x6x8xf32, #tpu.memory_space<vmem>>, vector<1x6x8xf32>
    %155 = vector.shape_cast %154 : vector<1x6x8xf32> to vector<6x8xf32>
    %cst_111 = arith.constant dense<0.000000e+00> : vector<6x256xf32>
    %156 = tpu.matmul %155, %153, %cst_111 {dimension_numbers = #tpu.dot_dimension_numbers<[1], [0], [0], [1], [0, 0, 1, 1], [], []>} : vector<6x8xf32>, vector<8x256xf32>, vector<6x256xf32> -> vector<6x256xf32>
    %157 = arith.addf %150, %156 : vector<6x256xf32>
    %c15_i32_112 = arith.constant 15 : i32
    %158 = tpu.dynamic_rotate %140 by %c15_i32_112 dim 1 : vector<8x256xf32>, i32 -> vector<8x256xf32>
    %159 = vector.broadcast %2 : vector<1x256xf32> to vector<8x256xf32>
    %160 = arith.mulf %158, %159 : vector<8x256xf32>
    %c2_113 = arith.constant 2 : index
    %c0_114 = arith.constant 0 : index
    %c0_115 = arith.constant 0 : index
    %161 = vector.load %arg7[%c2_113, %c0_114, %c0_115] : memref<9x6x8xf32, #tpu.memory_space<vmem>>, vector<1x6x8xf32>
    %162 = vector.shape_cast %161 : vector<1x6x8xf32> to vector<6x8xf32>
    %cst_116 = arith.constant dense<0.000000e+00> : vector<6x256xf32>
    %163 = tpu.matmul %162, %160, %cst_116 {dimension_numbers = #tpu.dot_dimension_numbers<[1], [0], [0], [1], [0, 0, 1, 1], [], []>} : vector<6x8xf32>, vector<8x256xf32>, vector<6x256xf32> -> vector<6x256xf32>
    %164 = arith.addf %157, %163 : vector<6x256xf32>
    %c1_i32_117 = arith.constant 1 : i32
    %165 = tpu.dynamic_rotate %140 by %c1_i32_117 dim 1 : vector<8x256xf32>, i32 -> vector<8x256xf32>
    %166 = vector.broadcast %3 : vector<1x256xf32> to vector<8x256xf32>
    %167 = arith.mulf %165, %166 : vector<8x256xf32>
    %c3_118 = arith.constant 3 : index
    %c0_119 = arith.constant 0 : index
    %c0_120 = arith.constant 0 : index
    %168 = vector.load %arg7[%c3_118, %c0_119, %c0_120] : memref<9x6x8xf32, #tpu.memory_space<vmem>>, vector<1x6x8xf32>
    %169 = vector.shape_cast %168 : vector<1x6x8xf32> to vector<6x8xf32>
    %cst_121 = arith.constant dense<0.000000e+00> : vector<6x256xf32>
    %170 = tpu.matmul %169, %167, %cst_121 {dimension_numbers = #tpu.dot_dimension_numbers<[1], [0], [0], [1], [0, 0, 1, 1], [], []>} : vector<6x8xf32>, vector<8x256xf32>, vector<6x256xf32> -> vector<6x256xf32>
    %171 = arith.addf %164, %170 : vector<6x256xf32>
    %c255_i32_122 = arith.constant 255 : i32
    %172 = tpu.dynamic_rotate %140 by %c255_i32_122 dim 1 : vector<8x256xf32>, i32 -> vector<8x256xf32>
    %173 = vector.broadcast %4 : vector<1x256xf32> to vector<8x256xf32>
    %174 = arith.mulf %172, %173 : vector<8x256xf32>
    %c5_123 = arith.constant 5 : index
    %c0_124 = arith.constant 0 : index
    %c0_125 = arith.constant 0 : index
    %175 = vector.load %arg7[%c5_123, %c0_124, %c0_125] : memref<9x6x8xf32, #tpu.memory_space<vmem>>, vector<1x6x8xf32>
    %176 = vector.shape_cast %175 : vector<1x6x8xf32> to vector<6x8xf32>
    %cst_126 = arith.constant dense<0.000000e+00> : vector<6x256xf32>
    %177 = tpu.matmul %176, %174, %cst_126 {dimension_numbers = #tpu.dot_dimension_numbers<[1], [0], [0], [1], [0, 0, 1, 1], [], []>} : vector<6x8xf32>, vector<8x256xf32>, vector<6x256xf32> -> vector<6x256xf32>
    %178 = arith.addf %171, %177 : vector<6x256xf32>
    %c241_i32_127 = arith.constant 241 : i32
    %179 = tpu.dynamic_rotate %140 by %c241_i32_127 dim 1 : vector<8x256xf32>, i32 -> vector<8x256xf32>
    %180 = vector.broadcast %5 : vector<1x256xf32> to vector<8x256xf32>
    %181 = arith.mulf %179, %180 : vector<8x256xf32>
    %c6_128 = arith.constant 6 : index
    %c0_129 = arith.constant 0 : index
    %c0_130 = arith.constant 0 : index
    %182 = vector.load %arg7[%c6_128, %c0_129, %c0_130] : memref<9x6x8xf32, #tpu.memory_space<vmem>>, vector<1x6x8xf32>
    %183 = vector.shape_cast %182 : vector<1x6x8xf32> to vector<6x8xf32>
    %cst_131 = arith.constant dense<0.000000e+00> : vector<6x256xf32>
    %184 = tpu.matmul %183, %181, %cst_131 {dimension_numbers = #tpu.dot_dimension_numbers<[1], [0], [0], [1], [0, 0, 1, 1], [], []>} : vector<6x8xf32>, vector<8x256xf32>, vector<6x256xf32> -> vector<6x256xf32>
    %185 = arith.addf %178, %184 : vector<6x256xf32>
    %c240_i32_132 = arith.constant 240 : i32
    %186 = tpu.dynamic_rotate %140 by %c240_i32_132 dim 1 : vector<8x256xf32>, i32 -> vector<8x256xf32>
    %187 = vector.broadcast %6 : vector<1x256xf32> to vector<8x256xf32>
    %188 = arith.mulf %186, %187 : vector<8x256xf32>
    %c7_133 = arith.constant 7 : index
    %c0_134 = arith.constant 0 : index
    %c0_135 = arith.constant 0 : index
    %189 = vector.load %arg7[%c7_133, %c0_134, %c0_135] : memref<9x6x8xf32, #tpu.memory_space<vmem>>, vector<1x6x8xf32>
    %190 = vector.shape_cast %189 : vector<1x6x8xf32> to vector<6x8xf32>
    %cst_136 = arith.constant dense<0.000000e+00> : vector<6x256xf32>
    %191 = tpu.matmul %190, %188, %cst_136 {dimension_numbers = #tpu.dot_dimension_numbers<[1], [0], [0], [1], [0, 0, 1, 1], [], []>} : vector<6x8xf32>, vector<8x256xf32>, vector<6x256xf32> -> vector<6x256xf32>
    %192 = arith.addf %185, %191 : vector<6x256xf32>
    %c239_i32_137 = arith.constant 239 : i32
    %193 = tpu.dynamic_rotate %140 by %c239_i32_137 dim 1 : vector<8x256xf32>, i32 -> vector<8x256xf32>
    %194 = vector.broadcast %7 : vector<1x256xf32> to vector<8x256xf32>
    %195 = arith.mulf %193, %194 : vector<8x256xf32>
    %c8_138 = arith.constant 8 : index
    %c0_139 = arith.constant 0 : index
    %c0_140 = arith.constant 0 : index
    %196 = vector.load %arg7[%c8_138, %c0_139, %c0_140] : memref<9x6x8xf32, #tpu.memory_space<vmem>>, vector<1x6x8xf32>
    %197 = vector.shape_cast %196 : vector<1x6x8xf32> to vector<6x8xf32>
    %cst_141 = arith.constant dense<0.000000e+00> : vector<6x256xf32>
    %198 = tpu.matmul %197, %195, %cst_141 {dimension_numbers = #tpu.dot_dimension_numbers<[1], [0], [0], [1], [0, 0, 1, 1], [], []>} : vector<6x8xf32>, vector<8x256xf32>, vector<6x256xf32> -> vector<6x256xf32>
    %199 = arith.addf %192, %198 : vector<6x256xf32>
    %c0_142 = arith.constant 0 : index
    %c0_143 = arith.constant 0 : index
    %200 = vector.load %arg8[%c0_142, %c0_143] : memref<6x1xf32, #tpu.memory_space<vmem>>, vector<6x1xf32>
    %201 = vector.broadcast %200 : vector<6x1xf32> to vector<6x256xf32>
    %202 = arith.addf %199, %201 : vector<6x256xf32>
    %cst_144 = arith.constant 0.000000e+00 : f32
    %203 = vector.broadcast %cst_144 : f32 to vector<6x256xf32>
    %204 = arith.maximumf %202, %203 : vector<6x256xf32>
    %c4_145 = arith.constant 4 : index
    %c0_146 = arith.constant 0 : index
    %c0_147 = arith.constant 0 : index
    %205 = vector.load %arg9[%c4_145, %c0_146, %c0_147] : memref<9x6x6xf32, #tpu.memory_space<vmem>>, vector<1x6x6xf32>
    %206 = vector.shape_cast %205 : vector<1x6x6xf32> to vector<6x6xf32>
    %cst_148 = arith.constant dense<0.000000e+00> : vector<6x256xf32>
    %207 = tpu.matmul %206, %204, %cst_148 {dimension_numbers = #tpu.dot_dimension_numbers<[1], [0], [0], [1], [0, 0, 1, 1], [], []>} : vector<6x6xf32>, vector<6x256xf32>, vector<6x256xf32> -> vector<6x256xf32>
    %c17_i32_149 = arith.constant 17 : i32
    %208 = tpu.dynamic_rotate %204 by %c17_i32_149 dim 1 : vector<6x256xf32>, i32 -> vector<6x256xf32>
    %209 = vector.broadcast %0 : vector<1x256xf32> to vector<6x256xf32>
    %210 = arith.mulf %208, %209 : vector<6x256xf32>
    %c0_150 = arith.constant 0 : index
    %c0_151 = arith.constant 0 : index
    %c0_152 = arith.constant 0 : index
    %211 = vector.load %arg9[%c0_150, %c0_151, %c0_152] : memref<9x6x6xf32, #tpu.memory_space<vmem>>, vector<1x6x6xf32>
    %212 = vector.shape_cast %211 : vector<1x6x6xf32> to vector<6x6xf32>
    %cst_153 = arith.constant dense<0.000000e+00> : vector<6x256xf32>
    %213 = tpu.matmul %212, %210, %cst_153 {dimension_numbers = #tpu.dot_dimension_numbers<[1], [0], [0], [1], [0, 0, 1, 1], [], []>} : vector<6x6xf32>, vector<6x256xf32>, vector<6x256xf32> -> vector<6x256xf32>
    %214 = arith.addf %207, %213 : vector<6x256xf32>
    %c16_i32_154 = arith.constant 16 : i32
    %215 = tpu.dynamic_rotate %204 by %c16_i32_154 dim 1 : vector<6x256xf32>, i32 -> vector<6x256xf32>
    %216 = vector.broadcast %1 : vector<1x256xf32> to vector<6x256xf32>
    %217 = arith.mulf %215, %216 : vector<6x256xf32>
    %c1_155 = arith.constant 1 : index
    %c0_156 = arith.constant 0 : index
    %c0_157 = arith.constant 0 : index
    %218 = vector.load %arg9[%c1_155, %c0_156, %c0_157] : memref<9x6x6xf32, #tpu.memory_space<vmem>>, vector<1x6x6xf32>
    %219 = vector.shape_cast %218 : vector<1x6x6xf32> to vector<6x6xf32>
    %cst_158 = arith.constant dense<0.000000e+00> : vector<6x256xf32>
    %220 = tpu.matmul %219, %217, %cst_158 {dimension_numbers = #tpu.dot_dimension_numbers<[1], [0], [0], [1], [0, 0, 1, 1], [], []>} : vector<6x6xf32>, vector<6x256xf32>, vector<6x256xf32> -> vector<6x256xf32>
    %221 = arith.addf %214, %220 : vector<6x256xf32>
    %c15_i32_159 = arith.constant 15 : i32
    %222 = tpu.dynamic_rotate %204 by %c15_i32_159 dim 1 : vector<6x256xf32>, i32 -> vector<6x256xf32>
    %223 = vector.broadcast %2 : vector<1x256xf32> to vector<6x256xf32>
    %224 = arith.mulf %222, %223 : vector<6x256xf32>
    %c2_160 = arith.constant 2 : index
    %c0_161 = arith.constant 0 : index
    %c0_162 = arith.constant 0 : index
    %225 = vector.load %arg9[%c2_160, %c0_161, %c0_162] : memref<9x6x6xf32, #tpu.memory_space<vmem>>, vector<1x6x6xf32>
    %226 = vector.shape_cast %225 : vector<1x6x6xf32> to vector<6x6xf32>
    %cst_163 = arith.constant dense<0.000000e+00> : vector<6x256xf32>
    %227 = tpu.matmul %226, %224, %cst_163 {dimension_numbers = #tpu.dot_dimension_numbers<[1], [0], [0], [1], [0, 0, 1, 1], [], []>} : vector<6x6xf32>, vector<6x256xf32>, vector<6x256xf32> -> vector<6x256xf32>
    %228 = arith.addf %221, %227 : vector<6x256xf32>
    %c1_i32_164 = arith.constant 1 : i32
    %229 = tpu.dynamic_rotate %204 by %c1_i32_164 dim 1 : vector<6x256xf32>, i32 -> vector<6x256xf32>
    %230 = vector.broadcast %3 : vector<1x256xf32> to vector<6x256xf32>
    %231 = arith.mulf %229, %230 : vector<6x256xf32>
    %c3_165 = arith.constant 3 : index
    %c0_166 = arith.constant 0 : index
    %c0_167 = arith.constant 0 : index
    %232 = vector.load %arg9[%c3_165, %c0_166, %c0_167] : memref<9x6x6xf32, #tpu.memory_space<vmem>>, vector<1x6x6xf32>
    %233 = vector.shape_cast %232 : vector<1x6x6xf32> to vector<6x6xf32>
    %cst_168 = arith.constant dense<0.000000e+00> : vector<6x256xf32>
    %234 = tpu.matmul %233, %231, %cst_168 {dimension_numbers = #tpu.dot_dimension_numbers<[1], [0], [0], [1], [0, 0, 1, 1], [], []>} : vector<6x6xf32>, vector<6x256xf32>, vector<6x256xf32> -> vector<6x256xf32>
    %235 = arith.addf %228, %234 : vector<6x256xf32>
    %c255_i32_169 = arith.constant 255 : i32
    %236 = tpu.dynamic_rotate %204 by %c255_i32_169 dim 1 : vector<6x256xf32>, i32 -> vector<6x256xf32>
    %237 = vector.broadcast %4 : vector<1x256xf32> to vector<6x256xf32>
    %238 = arith.mulf %236, %237 : vector<6x256xf32>
    %c5_170 = arith.constant 5 : index
    %c0_171 = arith.constant 0 : index
    %c0_172 = arith.constant 0 : index
    %239 = vector.load %arg9[%c5_170, %c0_171, %c0_172] : memref<9x6x6xf32, #tpu.memory_space<vmem>>, vector<1x6x6xf32>
    %240 = vector.shape_cast %239 : vector<1x6x6xf32> to vector<6x6xf32>
    %cst_173 = arith.constant dense<0.000000e+00> : vector<6x256xf32>
    %241 = tpu.matmul %240, %238, %cst_173 {dimension_numbers = #tpu.dot_dimension_numbers<[1], [0], [0], [1], [0, 0, 1, 1], [], []>} : vector<6x6xf32>, vector<6x256xf32>, vector<6x256xf32> -> vector<6x256xf32>
    %242 = arith.addf %235, %241 : vector<6x256xf32>
    %c241_i32_174 = arith.constant 241 : i32
    %243 = tpu.dynamic_rotate %204 by %c241_i32_174 dim 1 : vector<6x256xf32>, i32 -> vector<6x256xf32>
    %244 = vector.broadcast %5 : vector<1x256xf32> to vector<6x256xf32>
    %245 = arith.mulf %243, %244 : vector<6x256xf32>
    %c6_175 = arith.constant 6 : index
    %c0_176 = arith.constant 0 : index
    %c0_177 = arith.constant 0 : index
    %246 = vector.load %arg9[%c6_175, %c0_176, %c0_177] : memref<9x6x6xf32, #tpu.memory_space<vmem>>, vector<1x6x6xf32>
    %247 = vector.shape_cast %246 : vector<1x6x6xf32> to vector<6x6xf32>
    %cst_178 = arith.constant dense<0.000000e+00> : vector<6x256xf32>
    %248 = tpu.matmul %247, %245, %cst_178 {dimension_numbers = #tpu.dot_dimension_numbers<[1], [0], [0], [1], [0, 0, 1, 1], [], []>} : vector<6x6xf32>, vector<6x256xf32>, vector<6x256xf32> -> vector<6x256xf32>
    %249 = arith.addf %242, %248 : vector<6x256xf32>
    %c240_i32_179 = arith.constant 240 : i32
    %250 = tpu.dynamic_rotate %204 by %c240_i32_179 dim 1 : vector<6x256xf32>, i32 -> vector<6x256xf32>
    %251 = vector.broadcast %6 : vector<1x256xf32> to vector<6x256xf32>
    %252 = arith.mulf %250, %251 : vector<6x256xf32>
    %c7_180 = arith.constant 7 : index
    %c0_181 = arith.constant 0 : index
    %c0_182 = arith.constant 0 : index
    %253 = vector.load %arg9[%c7_180, %c0_181, %c0_182] : memref<9x6x6xf32, #tpu.memory_space<vmem>>, vector<1x6x6xf32>
    %254 = vector.shape_cast %253 : vector<1x6x6xf32> to vector<6x6xf32>
    %cst_183 = arith.constant dense<0.000000e+00> : vector<6x256xf32>
    %255 = tpu.matmul %254, %252, %cst_183 {dimension_numbers = #tpu.dot_dimension_numbers<[1], [0], [0], [1], [0, 0, 1, 1], [], []>} : vector<6x6xf32>, vector<6x256xf32>, vector<6x256xf32> -> vector<6x256xf32>
    %256 = arith.addf %249, %255 : vector<6x256xf32>
    %c239_i32_184 = arith.constant 239 : i32
    %257 = tpu.dynamic_rotate %204 by %c239_i32_184 dim 1 : vector<6x256xf32>, i32 -> vector<6x256xf32>
    %258 = vector.broadcast %7 : vector<1x256xf32> to vector<6x256xf32>
    %259 = arith.mulf %257, %258 : vector<6x256xf32>
    %c8_185 = arith.constant 8 : index
    %c0_186 = arith.constant 0 : index
    %c0_187 = arith.constant 0 : index
    %260 = vector.load %arg9[%c8_185, %c0_186, %c0_187] : memref<9x6x6xf32, #tpu.memory_space<vmem>>, vector<1x6x6xf32>
    %261 = vector.shape_cast %260 : vector<1x6x6xf32> to vector<6x6xf32>
    %cst_188 = arith.constant dense<0.000000e+00> : vector<6x256xf32>
    %262 = tpu.matmul %261, %259, %cst_188 {dimension_numbers = #tpu.dot_dimension_numbers<[1], [0], [0], [1], [0, 0, 1, 1], [], []>} : vector<6x6xf32>, vector<6x256xf32>, vector<6x256xf32> -> vector<6x256xf32>
    %263 = arith.addf %256, %262 : vector<6x256xf32>
    %c0_189 = arith.constant 0 : index
    %c0_190 = arith.constant 0 : index
    %264 = vector.load %arg10[%c0_189, %c0_190] : memref<6x1xf32, #tpu.memory_space<vmem>>, vector<6x1xf32>
    %265 = vector.broadcast %264 : vector<6x1xf32> to vector<6x256xf32>
    %266 = arith.addf %263, %265 : vector<6x256xf32>
    %cst_191 = arith.constant 0.000000e+00 : f32
    %267 = vector.broadcast %cst_191 : f32 to vector<6x256xf32>
    %268 = arith.maximumf %266, %267 : vector<6x256xf32>
    %c4_192 = arith.constant 4 : index
    %c0_193 = arith.constant 0 : index
    %c0_194 = arith.constant 0 : index
    %269 = vector.load %arg11[%c4_192, %c0_193, %c0_194] : memref<9x8x6xf32, #tpu.memory_space<vmem>>, vector<1x8x6xf32>
    %270 = vector.shape_cast %269 : vector<1x8x6xf32> to vector<8x6xf32>
    %cst_195 = arith.constant dense<0.000000e+00> : vector<8x256xf32>
    %271 = tpu.matmul %270, %268, %cst_195 {dimension_numbers = #tpu.dot_dimension_numbers<[1], [0], [0], [1], [0, 0, 1, 1], [], []>} : vector<8x6xf32>, vector<6x256xf32>, vector<8x256xf32> -> vector<8x256xf32>
    %c17_i32_196 = arith.constant 17 : i32
    %272 = tpu.dynamic_rotate %268 by %c17_i32_196 dim 1 : vector<6x256xf32>, i32 -> vector<6x256xf32>
    %273 = vector.broadcast %0 : vector<1x256xf32> to vector<6x256xf32>
    %274 = arith.mulf %272, %273 : vector<6x256xf32>
    %c0_197 = arith.constant 0 : index
    %c0_198 = arith.constant 0 : index
    %c0_199 = arith.constant 0 : index
    %275 = vector.load %arg11[%c0_197, %c0_198, %c0_199] : memref<9x8x6xf32, #tpu.memory_space<vmem>>, vector<1x8x6xf32>
    %276 = vector.shape_cast %275 : vector<1x8x6xf32> to vector<8x6xf32>
    %cst_200 = arith.constant dense<0.000000e+00> : vector<8x256xf32>
    %277 = tpu.matmul %276, %274, %cst_200 {dimension_numbers = #tpu.dot_dimension_numbers<[1], [0], [0], [1], [0, 0, 1, 1], [], []>} : vector<8x6xf32>, vector<6x256xf32>, vector<8x256xf32> -> vector<8x256xf32>
    %278 = arith.addf %271, %277 : vector<8x256xf32>
    %c16_i32_201 = arith.constant 16 : i32
    %279 = tpu.dynamic_rotate %268 by %c16_i32_201 dim 1 : vector<6x256xf32>, i32 -> vector<6x256xf32>
    %280 = vector.broadcast %1 : vector<1x256xf32> to vector<6x256xf32>
    %281 = arith.mulf %279, %280 : vector<6x256xf32>
    %c1_202 = arith.constant 1 : index
    %c0_203 = arith.constant 0 : index
    %c0_204 = arith.constant 0 : index
    %282 = vector.load %arg11[%c1_202, %c0_203, %c0_204] : memref<9x8x6xf32, #tpu.memory_space<vmem>>, vector<1x8x6xf32>
    %283 = vector.shape_cast %282 : vector<1x8x6xf32> to vector<8x6xf32>
    %cst_205 = arith.constant dense<0.000000e+00> : vector<8x256xf32>
    %284 = tpu.matmul %283, %281, %cst_205 {dimension_numbers = #tpu.dot_dimension_numbers<[1], [0], [0], [1], [0, 0, 1, 1], [], []>} : vector<8x6xf32>, vector<6x256xf32>, vector<8x256xf32> -> vector<8x256xf32>
    %285 = arith.addf %278, %284 : vector<8x256xf32>
    %c15_i32_206 = arith.constant 15 : i32
    %286 = tpu.dynamic_rotate %268 by %c15_i32_206 dim 1 : vector<6x256xf32>, i32 -> vector<6x256xf32>
    %287 = vector.broadcast %2 : vector<1x256xf32> to vector<6x256xf32>
    %288 = arith.mulf %286, %287 : vector<6x256xf32>
    %c2_207 = arith.constant 2 : index
    %c0_208 = arith.constant 0 : index
    %c0_209 = arith.constant 0 : index
    %289 = vector.load %arg11[%c2_207, %c0_208, %c0_209] : memref<9x8x6xf32, #tpu.memory_space<vmem>>, vector<1x8x6xf32>
    %290 = vector.shape_cast %289 : vector<1x8x6xf32> to vector<8x6xf32>
    %cst_210 = arith.constant dense<0.000000e+00> : vector<8x256xf32>
    %291 = tpu.matmul %290, %288, %cst_210 {dimension_numbers = #tpu.dot_dimension_numbers<[1], [0], [0], [1], [0, 0, 1, 1], [], []>} : vector<8x6xf32>, vector<6x256xf32>, vector<8x256xf32> -> vector<8x256xf32>
    %292 = arith.addf %285, %291 : vector<8x256xf32>
    %c1_i32_211 = arith.constant 1 : i32
    %293 = tpu.dynamic_rotate %268 by %c1_i32_211 dim 1 : vector<6x256xf32>, i32 -> vector<6x256xf32>
    %294 = vector.broadcast %3 : vector<1x256xf32> to vector<6x256xf32>
    %295 = arith.mulf %293, %294 : vector<6x256xf32>
    %c3_212 = arith.constant 3 : index
    %c0_213 = arith.constant 0 : index
    %c0_214 = arith.constant 0 : index
    %296 = vector.load %arg11[%c3_212, %c0_213, %c0_214] : memref<9x8x6xf32, #tpu.memory_space<vmem>>, vector<1x8x6xf32>
    %297 = vector.shape_cast %296 : vector<1x8x6xf32> to vector<8x6xf32>
    %cst_215 = arith.constant dense<0.000000e+00> : vector<8x256xf32>
    %298 = tpu.matmul %297, %295, %cst_215 {dimension_numbers = #tpu.dot_dimension_numbers<[1], [0], [0], [1], [0, 0, 1, 1], [], []>} : vector<8x6xf32>, vector<6x256xf32>, vector<8x256xf32> -> vector<8x256xf32>
    %299 = arith.addf %292, %298 : vector<8x256xf32>
    %c255_i32_216 = arith.constant 255 : i32
    %300 = tpu.dynamic_rotate %268 by %c255_i32_216 dim 1 : vector<6x256xf32>, i32 -> vector<6x256xf32>
    %301 = vector.broadcast %4 : vector<1x256xf32> to vector<6x256xf32>
    %302 = arith.mulf %300, %301 : vector<6x256xf32>
    %c5_217 = arith.constant 5 : index
    %c0_218 = arith.constant 0 : index
    %c0_219 = arith.constant 0 : index
    %303 = vector.load %arg11[%c5_217, %c0_218, %c0_219] : memref<9x8x6xf32, #tpu.memory_space<vmem>>, vector<1x8x6xf32>
    %304 = vector.shape_cast %303 : vector<1x8x6xf32> to vector<8x6xf32>
    %cst_220 = arith.constant dense<0.000000e+00> : vector<8x256xf32>
    %305 = tpu.matmul %304, %302, %cst_220 {dimension_numbers = #tpu.dot_dimension_numbers<[1], [0], [0], [1], [0, 0, 1, 1], [], []>} : vector<8x6xf32>, vector<6x256xf32>, vector<8x256xf32> -> vector<8x256xf32>
    %306 = arith.addf %299, %305 : vector<8x256xf32>
    %c241_i32_221 = arith.constant 241 : i32
    %307 = tpu.dynamic_rotate %268 by %c241_i32_221 dim 1 : vector<6x256xf32>, i32 -> vector<6x256xf32>
    %308 = vector.broadcast %5 : vector<1x256xf32> to vector<6x256xf32>
    %309 = arith.mulf %307, %308 : vector<6x256xf32>
    %c6_222 = arith.constant 6 : index
    %c0_223 = arith.constant 0 : index
    %c0_224 = arith.constant 0 : index
    %310 = vector.load %arg11[%c6_222, %c0_223, %c0_224] : memref<9x8x6xf32, #tpu.memory_space<vmem>>, vector<1x8x6xf32>
    %311 = vector.shape_cast %310 : vector<1x8x6xf32> to vector<8x6xf32>
    %cst_225 = arith.constant dense<0.000000e+00> : vector<8x256xf32>
    %312 = tpu.matmul %311, %309, %cst_225 {dimension_numbers = #tpu.dot_dimension_numbers<[1], [0], [0], [1], [0, 0, 1, 1], [], []>} : vector<8x6xf32>, vector<6x256xf32>, vector<8x256xf32> -> vector<8x256xf32>
    %313 = arith.addf %306, %312 : vector<8x256xf32>
    %c240_i32_226 = arith.constant 240 : i32
    %314 = tpu.dynamic_rotate %268 by %c240_i32_226 dim 1 : vector<6x256xf32>, i32 -> vector<6x256xf32>
    %315 = vector.broadcast %6 : vector<1x256xf32> to vector<6x256xf32>
    %316 = arith.mulf %314, %315 : vector<6x256xf32>
    %c7_227 = arith.constant 7 : index
    %c0_228 = arith.constant 0 : index
    %c0_229 = arith.constant 0 : index
    %317 = vector.load %arg11[%c7_227, %c0_228, %c0_229] : memref<9x8x6xf32, #tpu.memory_space<vmem>>, vector<1x8x6xf32>
    %318 = vector.shape_cast %317 : vector<1x8x6xf32> to vector<8x6xf32>
    %cst_230 = arith.constant dense<0.000000e+00> : vector<8x256xf32>
    %319 = tpu.matmul %318, %316, %cst_230 {dimension_numbers = #tpu.dot_dimension_numbers<[1], [0], [0], [1], [0, 0, 1, 1], [], []>} : vector<8x6xf32>, vector<6x256xf32>, vector<8x256xf32> -> vector<8x256xf32>
    %320 = arith.addf %313, %319 : vector<8x256xf32>
    %c239_i32_231 = arith.constant 239 : i32
    %321 = tpu.dynamic_rotate %268 by %c239_i32_231 dim 1 : vector<6x256xf32>, i32 -> vector<6x256xf32>
    %322 = vector.broadcast %7 : vector<1x256xf32> to vector<6x256xf32>
    %323 = arith.mulf %321, %322 : vector<6x256xf32>
    %c8_232 = arith.constant 8 : index
    %c0_233 = arith.constant 0 : index
    %c0_234 = arith.constant 0 : index
    %324 = vector.load %arg11[%c8_232, %c0_233, %c0_234] : memref<9x8x6xf32, #tpu.memory_space<vmem>>, vector<1x8x6xf32>
    %325 = vector.shape_cast %324 : vector<1x8x6xf32> to vector<8x6xf32>
    %cst_235 = arith.constant dense<0.000000e+00> : vector<8x256xf32>
    %326 = tpu.matmul %325, %323, %cst_235 {dimension_numbers = #tpu.dot_dimension_numbers<[1], [0], [0], [1], [0, 0, 1, 1], [], []>} : vector<8x6xf32>, vector<6x256xf32>, vector<8x256xf32> -> vector<8x256xf32>
    %327 = arith.addf %320, %326 : vector<8x256xf32>
    %c0_236 = arith.constant 0 : index
    %c0_237 = arith.constant 0 : index
    %328 = vector.load %arg12[%c0_236, %c0_237] : memref<8x1xf32, #tpu.memory_space<vmem>>, vector<8x1xf32>
    %329 = vector.broadcast %328 : vector<8x1xf32> to vector<8x256xf32>
    %330 = arith.addf %327, %329 : vector<8x256xf32>
    %cst_238 = arith.constant 0.000000e+00 : f32
    %331 = vector.broadcast %cst_238 : f32 to vector<8x256xf32>
    %332 = arith.maximumf %330, %331 : vector<8x256xf32>
    %c0_239 = arith.constant 0 : index
    %c0_240 = arith.constant 0 : index
    %c0_241 = arith.constant 0 : index
    %333 = vector.load %arg14[%c0_239, %c0_240, %c0_241] : memref<1x8x256xf32, #tpu.memory_space<vmem>>, vector<1x8x256xf32>
    %334 = vector.shape_cast %333 : vector<1x8x256xf32> to vector<8x256xf32>
    %335 = vector.shape_cast %332 : vector<8x256xf32> to vector<1x8x256xf32>
    tpu.vector_store %arg14[%c0_239, %c0_240, %c0_241], %335 {strides = array<i32>} : memref<1x8x256xf32, #tpu.memory_space<vmem>>, vector<1x8x256xf32>,
    return
  }
  func.func @transform_0(%arg0: i32) -> (i32, i32) {
    %c0_i32 = arith.constant 0 : i32
    %c0_i32_0 = arith.constant 0 : i32
    %c0_i32_1 = arith.constant 0 : i32
    return %c0_i32, %c0_i32_0 : i32, i32
  }
  func.func @transform_1(%arg0: i32) -> (i32, i32, i32) {
    %c0_i32 = arith.constant 0 : i32
    %c0_i32_0 = arith.constant 0 : i32
    %c0_i32_1 = arith.constant 0 : i32
    return %arg0, %c0_i32, %c0_i32_0 : i32, i32, i32
  }
  func.func @transform_2(%arg0: i32) -> (i32, i32, i32) {
    %c0_i32 = arith.constant 0 : i32
    %c0_i32_0 = arith.constant 0 : i32
    %c0_i32_1 = arith.constant 0 : i32
    %c0_i32_2 = arith.constant 0 : i32
    return %c0_i32, %c0_i32_0, %c0_i32_1 : i32, i32, i32
  }
  func.func @transform_3(%arg0: i32) -> (i32, i32) {
    %c0_i32 = arith.constant 0 : i32
    %c0_i32_0 = arith.constant 0 : i32
    %c0_i32_1 = arith.constant 0 : i32
    return %c0_i32, %c0_i32_0 : i32, i32
  }
  func.func @transform_4(%arg0: i32) -> (i32, i32, i32) {
    %c0_i32 = arith.constant 0 : i32
    %c0_i32_0 = arith.constant 0 : i32
    %c0_i32_1 = arith.constant 0 : i32
    %c0_i32_2 = arith.constant 0 : i32
    return %c0_i32, %c0_i32_0, %c0_i32_1 : i32, i32, i32
  }
  func.func @transform_5(%arg0: i32) -> (i32, i32) {
    %c0_i32 = arith.constant 0 : i32
    %c0_i32_0 = arith.constant 0 : i32
    %c0_i32_1 = arith.constant 0 : i32
    return %c0_i32, %c0_i32_0 : i32, i32
  }
  func.func @transform_6(%arg0: i32) -> (i32, i32, i32) {
    %c0_i32 = arith.constant 0 : i32
    %c0_i32_0 = arith.constant 0 : i32
    %c0_i32_1 = arith.constant 0 : i32
    %c0_i32_2 = arith.constant 0 : i32
    return %c0_i32, %c0_i32_0, %c0_i32_1 : i32, i32, i32
  }
  func.func @transform_7(%arg0: i32) -> (i32, i32) {
    %c0_i32 = arith.constant 0 : i32
    %c0_i32_0 = arith.constant 0 : i32
    %c0_i32_1 = arith.constant 0 : i32
    return %c0_i32, %c0_i32_0 : i32, i32
  }
  func.func @transform_8(%arg0: i32) -> (i32, i32, i32) {
    %c0_i32 = arith.constant 0 : i32
    %c0_i32_0 = arith.constant 0 : i32
    %c0_i32_1 = arith.constant 0 : i32
    %c0_i32_2 = arith.constant 0 : i32
    return %c0_i32, %c0_i32_0, %c0_i32_1 : i32, i32, i32
  }
  func.func @transform_9(%arg0: i32) -> (i32, i32) {
    %c0_i32 = arith.constant 0 : i32
    %c0_i32_0 = arith.constant 0 : i32
    %c0_i32_1 = arith.constant 0 : i32
    return %c0_i32, %c0_i32_0 : i32, i32
  }
  func.func @transform_10(%arg0: i32) -> (i32, i32, i32) {
    %c0_i32 = arith.constant 0 : i32
    %c0_i32_0 = arith.constant 0 : i32
    %c0_i32_1 = arith.constant 0 : i32
    %c0_i32_2 = arith.constant 0 : i32
    return %c0_i32, %c0_i32_0, %c0_i32_1 : i32, i32, i32
  }
  func.func @transform_11(%arg0: i32) -> (i32, i32) {
    %c0_i32 = arith.constant 0 : i32
    %c0_i32_0 = arith.constant 0 : i32
    %c0_i32_1 = arith.constant 0 : i32
    return %c0_i32, %c0_i32_0 : i32, i32
  }
  func.func @transform_12(%arg0: i32) -> (i32, i32, i32) {
    %c0_i32 = arith.constant 0 : i32
    %c0_i32_0 = arith.constant 0 : i32
    %c0_i32_1 = arith.constant 0 : i32
    return %arg0, %c0_i32, %c0_i32_0 : i32, i32, i32
  }
  func.func @transform_13(%arg0: i32) -> (i32, i32, i32) {
    %c0_i32 = arith.constant 0 : i32
    %c0_i32_0 = arith.constant 0 : i32
    %c0_i32_1 = arith.constant 0 : i32
    return %arg0, %c0_i32, %c0_i32_0 : i32, i32, i32
  }
}

</mosaic_0001>

<llo_original>
// kernel: encoder_forward_pallas.1
$region0: #{encoder_forward_pallas.1}
  #allocation0 [shape = 'u32[]', space=smem, size = 0x4, offset = 0x4, fixed_abs, tag = 'smem constant byte address 0x4 - core index']
  #allocation1 [shape = 'u32[144,128]{1,0:T(1,128)}', space=vmem, size = 0x12000, scoped, tag = 'internal scratch']
  %s0 = inlined_call_operand.vmem [shape: f32[9,256], index: 0, kind: input, shape index: {}]
  %s1 = inlined_call_operand.vmem [shape: f32[2,7,256], index: 1, kind: input, shape index: {}]
  %s2 = inlined_call_operand.vmem [shape: f32[9,16,7], index: 2, kind: input, shape index: {}]
  %s3 = inlined_call_operand.vmem [shape: f32[16,1], index: 3, kind: input, shape index: {}]
  %s4 = inlined_call_operand.vmem [shape: f32[9,8,16], index: 4, kind: input, shape index: {}]
  %s5 = inlined_call_operand.vmem [shape: f32[8,1], index: 5, kind: input, shape index: {}]
  %s6 = inlined_call_operand.vmem [shape: f32[9,6,8], index: 6, kind: input, shape index: {}]
  %s7 = inlined_call_operand.vmem [shape: f32[6,1], index: 7, kind: input, shape index: {}]
  %s8 = inlined_call_operand.vmem [shape: f32[9,6,6], index: 8, kind: input, shape index: {}]
  %s9 = inlined_call_operand.vmem [shape: f32[6,1], index: 9, kind: input, shape index: {}]
  %s10 = inlined_call_operand.vmem [shape: f32[9,8,6], index: 10, kind: input, shape index: {}]
  %s11 = inlined_call_operand.vmem [shape: f32[8,1], index: 11, kind: input, shape index: {}]
  %s12 = inlined_call_operand.vmem [shape: f32[2,16,256], index: 12, kind: output, shape index: {0}]
  %s13 = inlined_call_operand.vmem [shape: f32[2,8,256], index: 13, kind: output, shape index: {1}]
  %14 = xla_tuple %s12, %s13
  %s15 = sld [smem:[#allocation0]]
  $region89: #{encoder_forward_pallas.1} parent=0
    _
  %s17 = ssub.s32 1, %s15
  %s18 = scalar_select 0, %s17, %s15
  loop: start=0, step=1, limit=4
  $region2: #{encoder_forward_pallas.1} parent=0 // loop_pre_header
    _
  $region3: #{encoder_forward_pallas.1} parent=0 // loop_header
    %s20 = sphi 0, %s24
    %p21 = scmp.ge.s32.totalorder %s20, 4
    %s28 = sphi 0, %s28
    %s30 = sphi 0, %s28
    %s31 = sphi 0, %s30
    %s45 = sphi 0, %s31
    %s51 = sphi 0, %s53
    %s54 = sphi 0, %s51
    %s55 = sphi 0, %s54
    %s71 = sphi 0, %s55
    %s75 = sphi 0, %s75
    %s77 = sphi 0, %s75
    %s78 = sphi 0, %s77
    %s92 = sphi 0, %s78
    %s96 = sphi 0, %s96
    %s98 = sphi 0, %s96
    %s99 = sphi 0, %s98
    %s113 = sphi 0, %s99
    %s117 = sphi 0, %s117
    %s119 = sphi 0, %s117
    %s120 = sphi 0, %s119
    %s134 = sphi 0, %s120
    %s138 = sphi 0, %s138
    %s140 = sphi 0, %s138
    %s141 = sphi 0, %s140
    %s155 = sphi 0, %s141
    %s159 = sphi 0, %s159
    %s161 = sphi 0, %s159
    %s162 = sphi 0, %s161
    %s176 = sphi 0, %s162
    %s180 = sphi 0, %s180
    %s182 = sphi 0, %s180
    %s183 = sphi 0, %s182
    %s197 = sphi 0, %s183
    %s201 = sphi 0, %s201
    %s203 = sphi 0, %s201
    %s204 = sphi 0, %s203
    %s218 = sphi 0, %s204
    %s222 = sphi 0, %s222
    %s224 = sphi 0, %s222
    %s225 = sphi 0, %s224
    %s239 = sphi 0, %s225
    %s243 = sphi 0, %s243
    %s245 = sphi 0, %s243
    %s246 = sphi 0, %s245
    %s260 = sphi 0, %s246
    %s264 = sphi 0, %s264
    %s266 = sphi 0, %s264
    %s267 = sphi 0, %s266
    %s281 = sphi 0, %s267
    %s287 = sphi 0, %s289
    %s290 = sphi 0, %s287
    %s291 = sphi 0, %s290
    %s307 = sphi 0, %s291
    %s313 = sphi 0, %s315
    %s316 = sphi 0, %s313
    %s317 = sphi 0, %s316
    %s333 = sphi 0, %s317
  $region4: #{encoder_forward_pallas.1} parent=0 // loop_header_branch
    %23 = sbr.rel (%p21) target = $region8
  $region5: #{encoder_forward_pallas.1} parent=0 // loop_body
    %s25 = ssub.s32 %s20, 1
    %s26 = ssub.s32 %s20, 2
    %s27 = sadd.s32 %s20, 1
    %s29 = sadd.s32 %s28, 1
    %p32 = scmp.eq.s32.totalorder %s20, 1
    %p33 = scmp.ne.s32.totalorder %s28, %s30
    %p34 = scmp.eq.s32.totalorder %s20, 0
    %p35 = por %p33, %p34
    %p36 = scmp.ne.s32.totalorder %s28, %s30
    %p37 = scmp.eq.s32.totalorder %s25, 1
    %p38 = por %p36, %p37
    %p39 = scmp.ne.s32.totalorder %s30, %s31
    %p40 = scmp.eq.s32.totalorder %s25, 0
    %p41 = por %p39, %p40
    %p42 = scmp.ne.s32.totalorder %s30, %s31
    %p43 = scmp.eq.s32.totalorder %s26, 1
    %p44 = por %p42, %p43
    %p46 = scmp.ne.s32.totalorder %s31, %s45
    %p47 = scmp.eq.s32.totalorder %s26, 0
    %p48 = por %p46, %p47
    %s49 = ssub.s32 %s20, %s27
    %p50 = scmp.eq.s32.totalorder %s49, 0
    %s52 = sadd.s32 %s51, 1
    %s53 = scalar_select %p50, %s51, %s52
    %p56 = pneg %p50
    %p57 = scmp.eq.s32.totalorder %s20, 1
    %p58 = por %p56, %p57
    %p59 = scmp.ne.s32.totalorder %s51, %s54
    %p60 = scmp.eq.s32.totalorder %s20, 0
    %p61 = por %p59, %p60
    %p62 = scmp.ne.s32.totalorder %s51, %s54
    %p63 = scmp.eq.s32.totalorder %s25, 1
    %p64 = por %p62, %p63
    %p65 = scmp.ne.s32.totalorder %s54, %s55
    %p66 = scmp.eq.s32.totalorder %s25, 0
    %p67 = por %p65, %p66
    %p68 = scmp.ne.s32.totalorder %s54, %s55
    %p69 = scmp.eq.s32.totalorder %s26, 1
    %p70 = por %p68, %p69
    %p72 = scmp.ne.s32.totalorder %s55, %s71
    %p73 = scmp.eq.s32.totalorder %s26, 0
    %p74 = por %p72, %p73
    %s76 = sadd.s32 %s75, 1
    %p79 = scmp.eq.s32.totalorder %s20, 1
    %p80 = scmp.ne.s32.totalorder %s75, %s77
    %p81 = scmp.eq.s32.totalorder %s20, 0
    %p82 = por %p80, %p81
    %p83 = scmp.ne.s32.totalorder %s75, %s77
    %p84 = scmp.eq.s32.totalorder %s25, 1
    %p85 = por %p83, %p84
    %p86 = scmp.ne.s32.totalorder %s77, %s78
    %p87 = scmp.eq.s32.totalorder %s25, 0
    %p88 = por %p86, %p87
    %p89 = scmp.ne.s32.totalorder %s77, %s78
    %p90 = scmp.eq.s32.totalorder %s26, 1
    %p91 = por %p89, %p90
    %p93 = scmp.ne.s32.totalorder %s78, %s92
    %p94 = scmp.eq.s32.totalorder %s26, 0
    %p95 = por %p93, %p94
    %s97 = sadd.s32 %s96, 1
    %p100 = scmp.eq.s32.totalorder %s20, 1
    %p101 = scmp.ne.s32.totalorder %s96, %s98
    %p102 = scmp.eq.s32.totalorder %s20, 0
    %p103 = por %p101, %p102
    %p104 = scmp.ne.s32.totalorder %s96, %s98
    %p105 = scmp.eq.s32.totalorder %s25, 1
    %p106 = por %p104, %p105
    %p107 = scmp.ne.s32.totalorder %s98, %s99
    %p108 = scmp.eq.s32.totalorder %s25, 0
    %p109 = por %p107, %p108
    %p110 = scmp.ne.s32.totalorder %s98, %s99
    %p111 = scmp.eq.s32.totalorder %s26, 1
    %p112 = por %p110, %p111
    %p114 = scmp.ne.s32.totalorder %s99, %s113
    %p115 = scmp.eq.s32.totalorder %s26, 0
    %p116 = por %p114, %p115
    %s118 = sadd.s32 %s117, 1
    %p121 = scmp.eq.s32.totalorder %s20, 1
    %p122 = scmp.ne.s32.totalorder %s117, %s119
    %p123 = scmp.eq.s32.totalorder %s20, 0
    %p124 = por %p122, %p123
    %p125 = scmp.ne.s32.totalorder %s117, %s119
    %p126 = scmp.eq.s32.totalorder %s25, 1
    %p127 = por %p125, %p126
    %p128 = scmp.ne.s32.totalorder %s119, %s120
    %p129 = scmp.eq.s32.totalorder %s25, 0
    %p130 = por %p128, %p129
    %p131 = scmp.ne.s32.totalorder %s119, %s120
    %p132 = scmp.eq.s32.totalorder %s26, 1
    %p133 = por %p131, %p132
    %p135 = scmp.ne.s32.totalorder %s120, %s134
    %p136 = scmp.eq.s32.totalorder %s26, 0
    %p137 = por %p135, %p136
    %s139 = sadd.s32 %s138, 1
    %p142 = scmp.eq.s32.totalorder %s20, 1
    %p143 = scmp.ne.s32.totalorder %s138, %s140
    %p144 = scmp.eq.s32.totalorder %s20, 0
    %p145 = por %p143, %p144
    %p146 = scmp.ne.s32.totalorder %s138, %s140
    %p147 = scmp.eq.s32.totalorder %s25, 1
    %p148 = por %p146, %p147
    %p149 = scmp.ne.s32.totalorder %s140, %s141
    %p150 = scmp.eq.s32.totalorder %s25, 0
    %p151 = por %p149, %p150
    %p152 = scmp.ne.s32.totalorder %s140, %s141
    %p153 = scmp.eq.s32.totalorder %s26, 1
    %p154 = por %p152, %p153
    %p156 = scmp.ne.s32.totalorder %s141, %s155
    %p157 = scmp.eq.s32.totalorder %s26, 0
    %p158 = por %p156, %p157
    %s160 = sadd.s32 %s159, 1
    %p163 = scmp.eq.s32.totalorder %s20, 1
    %p164 = scmp.ne.s32.totalorder %s159, %s161
    %p165 = scmp.eq.s32.totalorder %s20, 0
    %p166 = por %p164, %p165
    %p167 = scmp.ne.s32.totalorder %s159, %s161
    %p168 = scmp.eq.s32.totalorder %s25, 1
    %p169 = por %p167, %p168
    %p170 = scmp.ne.s32.totalorder %s161, %s162
    %p171 = scmp.eq.s32.totalorder %s25, 0
    %p172 = por %p170, %p171
    %p173 = scmp.ne.s32.totalorder %s161, %s162
    %p174 = scmp.eq.s32.totalorder %s26, 1
    %p175 = por %p173, %p174
    %p177 = scmp.ne.s32.totalorder %s162, %s176
    %p178 = scmp.eq.s32.totalorder %s26, 0
    %p179 = por %p177, %p178
    %s181 = sadd.s32 %s180, 1
    %p184 = scmp.eq.s32.totalorder %s20, 1
    %p185 = scmp.ne.s32.totalorder %s180, %s182
    %p186 = scmp.eq.s32.totalorder %s20, 0
    %p187 = por %p185, %p186
    %p188 = scmp.ne.s32.totalorder %s180, %s182
    %p189 = scmp.eq.s32.totalorder %s25, 1
    %p190 = por %p188, %p189
    %p191 = scmp.ne.s32.totalorder %s182, %s183
    %p192 = scmp.eq.s32.totalorder %s25, 0
    %p193 = por %p191, %p192
    %p194 = scmp.ne.s32.totalorder %s182, %s183
    %p195 = scmp.eq.s32.totalorder %s26, 1
    %p196 = por %p194, %p195
    %p198 = scmp.ne.s32.totalorder %s183, %s197
    %p199 = scmp.eq.s32.totalorder %s26, 0
    %p200 = por %p198, %p199
    %s202 = sadd.s32 %s201, 1
    %p205 = scmp.eq.s32.totalorder %s20, 1
    %p206 = scmp.ne.s32.totalorder %s201, %s203
    %p207 = scmp.eq.s32.totalorder %s20, 0
    %p208 = por %p206, %p207
    %p209 = scmp.ne.s32.totalorder %s201, %s203
    %p210 = scmp.eq.s32.totalorder %s25, 1
    %p211 = por %p209, %p210
    %p212 = scmp.ne.s32.totalorder %s203, %s204
    %p213 = scmp.eq.s32.totalorder %s25, 0
    %p214 = por %p212, %p213
    %p215 = scmp.ne.s32.totalorder %s203, %s204
    %p216 = scmp.eq.s32.totalorder %s26, 1
    %p217 = por %p215, %p216
    %p219 = scmp.ne.s32.totalorder %s204, %s218
    %p220 = scmp.eq.s32.totalorder %s26, 0
    %p221 = por %p219, %p220
    %s223 = sadd.s32 %s222, 1
    %p226 = scmp.eq.s32.totalorder %s20, 1
    %p227 = scmp.ne.s32.totalorder %s222, %s224
    %p228 = scmp.eq.s32.totalorder %s20, 0
    %p229 = por %p227, %p228
    %p230 = scmp.ne.s32.totalorder %s222, %s224
    %p231 = scmp.eq.s32.totalorder %s25, 1
    %p232 = por %p230, %p231
    %p233 = scmp.ne.s32.totalorder %s224, %s225
    %p234 = scmp.eq.s32.totalorder %s25, 0
    %p235 = por %p233, %p234
    %p236 = scmp.ne.s32.totalorder %s224, %s225
    %p237 = scmp.eq.s32.totalorder %s26, 1
    %p238 = por %p236, %p237
    %p240 = scmp.ne.s32.totalorder %s225, %s239
    %p241 = scmp.eq.s32.totalorder %s26, 0
    %p242 = por %p240, %p241
    %s244 = sadd.s32 %s243, 1
    %p247 = scmp.eq.s32.totalorder %s20, 1
    %p248 = scmp.ne.s32.totalorder %s243, %s245
    %p249 = scmp.eq.s32.totalorder %s20, 0
    %p250 = por %p248, %p249
    %p251 = scmp.ne.s32.totalorder %s243, %s245
    %p252 = scmp.eq.s32.totalorder %s25, 1
    %p253 = por %p251, %p252
    %p254 = scmp.ne.s32.totalorder %s245, %s246
    %p255 = scmp.eq.s32.totalorder %s25, 0
    %p256 = por %p254, %p255
    %p257 = scmp.ne.s32.totalorder %s245, %s246
    %p258 = scmp.eq.s32.totalorder %s26, 1
    %p259 = por %p257, %p258
    %p261 = scmp.ne.s32.totalorder %s246, %s260
    %p262 = scmp.eq.s32.totalorder %s26, 0
    %p263 = por %p261, %p262
    %s265 = sadd.s32 %s264, 1
    %p268 = scmp.eq.s32.totalorder %s20, 1
    %p269 = scmp.ne.s32.totalorder %s264, %s266
    %p270 = scmp.eq.s32.totalorder %s20, 0
    %p271 = por %p269, %p270
    %p272 = scmp.ne.s32.totalorder %s264, %s266
    %p273 = scmp.eq.s32.totalorder %s25, 1
    %p274 = por %p272, %p273
    %p275 = scmp.ne.s32.totalorder %s266, %s267
    %p276 = scmp.eq.s32.totalorder %s25, 0
    %p277 = por %p275, %p276
    %p278 = scmp.ne.s32.totalorder %s266, %s267
    %p279 = scmp.eq.s32.totalorder %s26, 1
    %p280 = por %p278, %p279
    %p282 = scmp.ne.s32.totalorder %s267, %s281
    %p283 = scmp.eq.s32.totalorder %s26, 0
    %p284 = por %p282, %p283
    %s285 = ssub.s32 %s20, %s27
    %p286 = scmp.eq.s32.totalorder %s285, 0
    %s288 = sadd.s32 %s287, 1
    %s289 = scalar_select %p286, %s287, %s288
    %p292 = pneg %p286
    %p293 = scmp.eq.s32.totalorder %s20, 1
    %p294 = por %p292, %p293
    %p295 = scmp.ne.s32.totalorder %s287, %s290
    %p296 = scmp.eq.s32.totalorder %s20, 0
    %p297 = por %p295, %p296
    %p298 = scmp.ne.s32.totalorder %s287, %s290
    %p299 = scmp.eq.s32.totalorder %s25, 1
    %p300 = por %p298, %p299
    %p301 = scmp.ne.s32.totalorder %s290, %s291
    %p302 = scmp.eq.s32.totalorder %s25, 0
    %p303 = por %p301, %p302
    %p304 = scmp.ne.s32.totalorder %s290, %s291
    %p305 = scmp.eq.s32.totalorder %s26, 1
    %p306 = por %p304, %p305
    %p308 = scmp.ne.s32.totalorder %s291, %s307
    %p309 = scmp.eq.s32.totalorder %s26, 0
    %p310 = por %p308, %p309
    %s311 = ssub.s32 %s20, %s27
    %p312 = scmp.eq.s32.totalorder %s311, 0
    %s314 = sadd.s32 %s313, 1
    %s315 = scalar_select %p312, %s313, %s314
    %p318 = pneg %p312
    %p319 = scmp.eq.s32.totalorder %s20, 1
    %p320 = por %p318, %p319
    %p321 = scmp.ne.s32.totalorder %s313, %s316
    %p322 = scmp.eq.s32.totalorder %s20, 0
    %p323 = por %p321, %p322
    %p324 = scmp.ne.s32.totalorder %s313, %s316
    %p325 = scmp.eq.s32.totalorder %s25, 1
    %p326 = por %p324, %p325
    %p327 = scmp.ne.s32.totalorder %s316, %s317
    %p328 = scmp.eq.s32.totalorder %s25, 0
    %p329 = por %p327, %p328
    %p330 = scmp.ne.s32.totalorder %s316, %s317
    %p331 = scmp.eq.s32.totalorder %s26, 1
    %p332 = por %p330, %p331
    %p334 = scmp.ne.s32.totalorder %s317, %s333
    %p335 = scmp.eq.s32.totalorder %s26, 0
    %p336 = por %p334, %p335
    %p337 = scmp.le.s32.totalorder 1, %s20
    %p338 = scmp.lt.s32.totalorder %s20, 3
    %p339 = pnand %p337, %p338
    %p340 = pneg %p339
    // Predicated region
    $region9: #{encoder_forward_pallas.1} parent=5 // pred_check
      _
    $region10: #{encoder_forward_pallas.1} parent=5 // pred_check_branch
      %342 = sbr.rel (%p339) target = $region12
    $region11: #{encoder_forward_pallas.1} parent=5 // pred_region
      %s343 = ssub.s32 %s20, 1
      // Predicated region
      $region13: #{encoder_forward_pallas.1} parent=11 // pred_check
        %p344 = pneg %p41
      $region14: #{encoder_forward_pallas.1} parent=11 // pred_check_branch
        %346 = sbr.rel (%p344) target = $region16
      $region15: #{encoder_forward_pallas.1} parent=11 // pred_region
        _
      $region16: #{encoder_forward_pallas.1} parent=11 // pred_fallthru
        _
      // Predicated region
      $region17: #{encoder_forward_pallas.1} parent=11 // pred_check
        %p347 = pneg %p88
      $region18: #{encoder_forward_pallas.1} parent=11 // pred_check_branch
        %349 = sbr.rel (%p347) target = $region20
      $region19: #{encoder_forward_pallas.1} parent=11 // pred_region
        _
      $region20: #{encoder_forward_pallas.1} parent=11 // pred_fallthru
        _
      // Predicated region
      $region21: #{encoder_forward_pallas.1} parent=11 // pred_check
        %p350 = pneg %p109
      $region22: #{encoder_forward_pallas.1} parent=11 // pred_check_branch
        %352 = sbr.rel (%p350) target = $region24
      $region23: #{encoder_forward_pallas.1} parent=11 // pred_region
        _
      $region24: #{encoder_forward_pallas.1} parent=11 // pred_fallthru
        _
      // Predicated region
      $region25: #{encoder_forward_pallas.1} parent=11 // pred_check
        %p353 = pneg %p130
      $region26: #{encoder_forward_pallas.1} parent=11 // pred_check_branch
        %355 = sbr.rel (%p353) target = $region28
      $region27: #{encoder_forward_pallas.1} parent=11 // pred_region
        _
      $region28: #{encoder_forward_pallas.1} parent=11 // pred_fallthru
        _
      // Predicated region
      $region29: #{encoder_forward_pallas.1} parent=11 // pred_check
        %p356 = pneg %p151
      $region30: #{encoder_forward_pallas.1} parent=11 // pred_check_branch
        %358 = sbr.rel (%p356) target = $region32
      $region31: #{encoder_forward_pallas.1} parent=11 // pred_region
        _
      $region32: #{encoder_forward_pallas.1} parent=11 // pred_fallthru
        _
      // Predicated region
      $region33: #{encoder_forward_pallas.1} parent=11 // pred_check
        %p359 = pneg %p172
      $region34: #{encoder_forward_pallas.1} parent=11 // pred_check_branch
        %361 = sbr.rel (%p359) target = $region36
      $region35: #{encoder_forward_pallas.1} parent=11 // pred_region
        _
      $region36: #{encoder_forward_pallas.1} parent=11 // pred_fallthru
        _
      // Predicated region
      $region37: #{encoder_forward_pallas.1} parent=11 // pred_check
        %p362 = pneg %p193
      $region38: #{encoder_forward_pallas.1} parent=11 // pred_check_branch
        %364 = sbr.rel (%p362) target = $region40
      $region39: #{encoder_forward_pallas.1} parent=11 // pred_region
        _
      $region40: #{encoder_forward_pallas.1} parent=11 // pred_fallthru
        _
      // Predicated region
      $region41: #{encoder_forward_pallas.1} parent=11 // pred_check
        %p365 = pneg %p214
      $region42: #{encoder_forward_pallas.1} parent=11 // pred_check_branch
        %367 = sbr.rel (%p365) target = $region44
      $region43: #{encoder_forward_pallas.1} parent=11 // pred_region
        _
      $region44: #{encoder_forward_pallas.1} parent=11 // pred_fallthru
        _
      // Predicated region
      $region45: #{encoder_forward_pallas.1} parent=11 // pred_check
        %p368 = pneg %p235
      $region46: #{encoder_forward_pallas.1} parent=11 // pred_check_branch
        %370 = sbr.rel (%p368) target = $region48
      $region47: #{encoder_forward_pallas.1} parent=11 // pred_region
        _
      $region48: #{encoder_forward_pallas.1} parent=11 // pred_fallthru
        _
      // Predicated region
      $region49: #{encoder_forward_pallas.1} parent=11 // pred_check
        %p371 = pneg %p256
      $region50: #{encoder_forward_pallas.1} parent=11 // pred_check_branch
        %373 = sbr.rel (%p371) target = $region52
      $region51: #{encoder_forward_pallas.1} parent=11 // pred_region
        _
      $region52: #{encoder_forward_pallas.1} parent=11 // pred_fallthru
        _
      // Predicated region
      $region53: #{encoder_forward_pallas.1} parent=11 // pred_check
        %p374 = pneg %p277
      $region54: #{encoder_forward_pallas.1} parent=11 // pred_check_branch
        %376 = sbr.rel (%p374) target = $region56
      $region55: #{encoder_forward_pallas.1} parent=11 // pred_region
        _
      $region56: #{encoder_forward_pallas.1} parent=11 // pred_fallthru
        _
    $region12: #{encoder_forward_pallas.1} parent=5 // pred_fallthru
      _
    %p377 = scmp.lt.s32.totalorder %s20, 2
    // Predicated region
    $region57: #{encoder_forward_pallas.1} parent=5 // pred_check
      %p378 = pneg %p377
    $region58: #{encoder_forward_pallas.1} parent=5 // pred_check_branch
      %380 = sbr.rel (%p378) target = $region60
    $region59: #{encoder_forward_pallas.1} parent=5 // pred_region
      // Predicated region
      $region61: #{encoder_forward_pallas.1} parent=59 // pred_check
        %p381 = pneg %p61
      $region62: #{encoder_forward_pallas.1} parent=59 // pred_check_branch
        %383 = sbr.rel (%p381) target = $region64
      $region63: #{encoder_forward_pallas.1} parent=59 // pred_region
        %p384 = scmp.lt.s32.totalorder %s20, 1
        %s385 = scalar_select %p384, %s20, 1
        %s386 = smul.addr %s385, 2
        %s387 = smul.addr %s386, 8
        %s388 = scalar_lea.vmem %s1, %s387
      $region64: #{encoder_forward_pallas.1} parent=59 // pred_fallthru
        _
    $region60: #{encoder_forward_pallas.1} parent=5 // pred_fallthru
      _
    %p389 = scmp.le.s32.totalorder 1, %s20
    %p390 = scmp.lt.s32.totalorder %s20, 3
    %p391 = pnand %p389, %p390
    %p392 = pneg %p391
    // Predicated region
    $region65: #{encoder_forward_pallas.1} parent=5 // pred_check
      _
    $region66: #{encoder_forward_pallas.1} parent=5 // pred_check_branch
      %394 = sbr.rel (%p391) target = $region68
    $region67: #{encoder_forward_pallas.1} parent=5 // pred_region
      %s395 = ssub.s32 %s20, 1
      %p396 = pneg %p41
      %p397 = pneg %p38
      %p398 = scmp.lt.s32.totalorder %s25, 1
      %s399 = scalar_select %p398, %s25, 1
      %s400 = smul.addr %s399, 2
      %s401 = smul.addr %s400, 8
      %s402 = scalar_lea.vmem %s1, %s401
      %p403 = pneg %p67
      %p404 = pneg %p64
      %p405 = pneg %p88
      %p406 = pneg %p85
      %p407 = pneg %p109
      %p408 = pneg %p106
      %p409 = pneg %p130
      %p410 = pneg %p127
      %p411 = pneg %p151
      %p412 = pneg %p148
      %p413 = pneg %p172
      %p414 = pneg %p169
      %p415 = pneg %p193
      %p416 = pneg %p190
      %p417 = pneg %p214
      %p418 = pneg %p211
      %p419 = pneg %p235
      %p420 = pneg %p232
      %p421 = pneg %p256
      %p422 = pneg %p253
      %p423 = pneg %p277
      %p424 = pneg %p274
      %p425 = pneg %p303
      %p426 = pneg %p300
      %p427 = scmp.lt.s32.totalorder %s25, 1
      %s428 = scalar_select %p427, %s25, 1
      %s429 = smul.addr %s428, 4
      %s430 = smul.addr %s429, 8
      %s431 = scalar_lea.vmem %s12, %s430
      %p432 = pneg %p329
      %p433 = pneg %p326
      %p434 = scmp.lt.s32.totalorder %s25, 1
      %s435 = scalar_select %p434, %s25, 1
      %s436 = smul.addr %s435, 2
      %s437 = smul.addr %s436, 8
      %s438 = scalar_lea.vmem %s13, %s437
      %p439 = scmp.lt.s32.totalorder %s25, 1
      %s440 = scalar_select %p439, %s25, 1
      %s441 = smul.addr %s440, 2
      %s442 = smul.addr %s441, 8
      %s443 = scalar_lea.vmem %s1, %s442
      %p444 = scmp.lt.s32.totalorder %s25, 1
      %s445 = scalar_select %p444, %s25, 1
      %s446 = smul.addr %s445, 4
      %s447 = smul.addr %s446, 8
      %s448 = scalar_lea.vmem %s12, %s447
      %p449 = scmp.lt.s32.totalorder %s25, 1
      %s450 = scalar_select %p449, %s25, 1
      %s451 = smul.addr %s450, 2
      %s452 = smul.addr %s451, 8
      %s453 = scalar_lea.vmem %s13, %s452
      %v454 = vld [vmem:[%s0] ss:$8 sm:$0x3]
      %s455 = scalar_lea.vmem %s0, 1
      %v456 = vld [vmem:[%s455] ss:$8 sm:$0x3]
      %s457 = scalar_lea.vmem %s0, 2
      %v458 = vld [vmem:[%s457] ss:$8 sm:$0x3]
      %s459 = scalar_lea.vmem %s0, 3
      %v460 = vld [vmem:[%s459] ss:$8 sm:$0x3]
      %s461 = scalar_lea.vmem %s0, 5
      %v462 = vld [vmem:[%s461] ss:$8 sm:$0x3]
      %s463 = scalar_lea.vmem %s0, 6
      %v464 = vld [vmem:[%s463] ss:$8 sm:$0x3]
      %s465 = scalar_lea.vmem %s0, 7
      %v466 = vld [vmem:[%s465] ss:$8 sm:$0x3]
      %s467 = scalar_lea.vmem %s0, 16
      %v468 = vld [vmem:[%s467] ss:$8 sm:$0x3]
      %v469 = vld [vmem:[%s443] sm:$0x7f]
      %v470 = vld [vmem:[%s443 + $0x8] sm:$0x7f]
      %s471 = scalar_lea.vmem %s2, 64
      %v472 = vld [vmem:[%s471] sm:$0xff]
      %v473 = vld [vmem:[%s471 + $0x8] sm:$0xff]
      %474 = vrot.lane.b32.xlu0 %v469, 17
      %v475 = vpop.permute.xlu0 %474
      %476 = vrot.lane.b32.xlu0 %v470, 17
      %v477 = vpop.permute.xlu0 %476
      %v478 = vlaneseq
      %v479 = vand.u32 %v478, 127
      %vm480 = vcmp.lt.s32.totalorder %v479, 17
      %v481 = vsel %vm480, %v475, %v477
      %v482 = vsel %vm480, %v477, %v475
      %v484 = vlaneseq
      %v485 = vshrl.u32 %v484, 7
      %v486 = vsub.s32 0, %v485
      %v487 = vrot.slane %v454, %v486
      %v488 = vlaneseq
      %v489 = vshrl.u32 %v488, 7
      %v490 = vsub.s32 1, %v489
      %v491 = vrot.slane %v454, %v490
      %v494 = vmul.f32 %v482, %v487
      %v495 = vmul.f32 %v481, %v491
      %v496 = vld [vmem:[%s2] sm:$0xff]
      %v497 = vld [vmem:[%s2 + $0x8] sm:$0xff]
      %vm498 = vcmask 56320
      %v500 = vsel %vm498, %v496, 0
      %v503 = vsel %vm498, %v497, 0
      %vm505 = vcmask 1046528
      %v507 = vsel %vm505, %v494, 0
      %v510 = vsel %vm505, %v495, 0
      %512 = vmatprep.subr.mxu0 %v510
      %513 = vmatpush1.msra.mxu0 %v507
      %514 = vmatprep.subr.mxu0 0.0
      %515 = vmatpush1.msra.mxu0 0.0
      %516 = vmatprep.subr.mxu0 0.0
      %517 = vmatpush1.msra.mxu0 0.0
      %518 = vmatprep.subr.mxu0 0.0
      %519 = vmatpush1.msra.mxu0 0.0
      %520 = vmatprep.subr.mxu0 0.0
      %521 = vmatpush1.msra.mxu0 0.0
      %522 = vmatprep.subr.mxu0 0.0
      %523 = vmatpush1.msra.mxu0 0.0
      %524 = vmatprep.subr.mxu0 0.0
      %525 = vmatpush1.msra.mxu0 0.0
      %526 = vmatprep.subr.mxu0 0.0
      %527 = vmatpush1.msra.mxu0 0.0
      %528 = vmatprep.subr.mxu0 0.0
      %529 = vmatpush1.msra.mxu0 0.0
      %530 = vmatprep.subr.mxu0 0.0
      %531 = vmatpush1.msra.mxu0 0.0
      %532 = vmatprep.subr.mxu0 0.0
      %533 = vmatpush1.msra.mxu0 0.0
      %534 = vmatprep.subr.mxu0 0.0
      %535 = vmatpush1.msra.mxu0 0.0
      %536 = vmatprep.subr.mxu0 0.0
      %537 = vmatpush1.msra.mxu0 0.0
      %538 = vmatprep.subr.mxu0 0.0
      %539 = vmatpush1.msra.mxu0 0.0
      %540 = vmatprep.subr.mxu0 0.0
      %541 = vmatpush1.msra.mxu0 0.0
      %542 = vmatprep.subr.mxu0 0.0
      %543 = vmatpush1.msra.mxu0 0.0
      %544 = vmatprep.subr.mxu0 0.0
      %545 = vmatpush1.msra.mxu0 0.0
      %546 = vmatprep.subr.mxu0 0.0
      %547 = vmatpush1.msra.mxu0 0.0
      %548 = vmatprep.subr.mxu0 0.0
      %549 = vmatpush1.msra.mxu0 0.0
      %550 = vmatprep.subr.mxu0 0.0
      %551 = vmatpush1.msra.mxu0 0.0
      %552 = vmatprep.subr.mxu0 0.0
      %553 = vmatpush1.msra.mxu0 0.0
      %554 = vmatprep.subr.mxu0 0.0
      %555 = vmatpush1.msra.mxu0 0.0
      %556 = vmatprep.subr.mxu0 0.0
      %557 = vmatpush1.msra.mxu0 0.0
      %558 = vmatprep.subr.mxu0 0.0
      %559 = vmatpush1.msra.mxu0 0.0
      %560 = vmatprep.subr.mxu0 0.0
      %561 = vmatpush1.msra.mxu0 0.0
      %562 = vmatprep.subr.mxu0 0.0
      %563 = vmatpush1.msra.mxu0 0.0
      %564 = vmatprep.subr.mxu0 0.0
      %565 = vmatpush1.msra.mxu0 0.0
      %566 = vmatprep.subr.mxu0 0.0
      %567 = vmatpush1.msra.mxu0 0.0
      %568 = vmatprep.subr.mxu0 0.0
      %569 = vmatpush1.msra.mxu0 0.0
      %570 = vmatprep.subr.mxu0 0.0
      %571 = vmatpush1.msra.mxu0 0.0
      %572 = vmatprep.subr.mxu0 0.0
      %573 = vmatpush1.msra.mxu0 0.0
      %574 = vmatprep.subr.mxu0 0.0
      %575 = vmatpush1.msra.mxu0 0.0
      %576 = vmatprep.mubr.f32.mxu0 0.0
      %577 = vmatmul.mubr.f32.gmra.mrb[0].mxu0 %v500
      %v578 = vpop.f32.mrb[0].mxu0
      %v579 = vadd.f32 0.0, %v578
      %v580 = vpop.f32.mrb[0].mxu0
      %v581 = vadd.f32 0.0, %v580
      %582 = vmatprep.mubr.f32.mxu0 0.0
      %583 = vmatmul.mubr.f32.gmra.mrb[0].mxu0 %v503
      %v584 = vpop.f32.mrb[0].mxu0
      %v585 = vadd.f32 0.0, %v584
      %v586 = vpop.f32.mrb[0].mxu0
      %v587 = vadd.f32 0.0, %v586
      %588 = vdwg.mxu0
      %v590 = vsel %vm498, %v472, 0
      %v593 = vsel %vm498, %v473, 0
      %v596 = vsel %vm505, %v469, 0
      %v599 = vsel %vm505, %v470, 0
      %601 = vmatprep.subr.mxu0 %v599
      %602 = vmatpush1.msra.mxu0 %v596
      %603 = vmatprep.subr.mxu0 0.0
      %604 = vmatpush1.msra.mxu0 0.0
      %605 = vmatprep.subr.mxu0 0.0
      %606 = vmatpush1.msra.mxu0 0.0
      %607 = vmatprep.subr.mxu0 0.0
      %608 = vmatpush1.msra.mxu0 0.0
      %609 = vmatprep.subr.mxu0 0.0
      %610 = vmatpush1.msra.mxu0 0.0
      %611 = vmatprep.subr.mxu0 0.0
      %612 = vmatpush1.msra.mxu0 0.0
      %613 = vmatprep.subr.mxu0 0.0
      %614 = vmatpush1.msra.mxu0 0.0
      %615 = vmatprep.subr.mxu0 0.0
      %616 = vmatpush1.msra.mxu0 0.0
      %617 = vmatprep.subr.mxu0 0.0
      %618 = vmatpush1.msra.mxu0 0.0
      %619 = vmatprep.subr.mxu0 0.0
      %620 = vmatpush1.msra.mxu0 0.0
      %621 = vmatprep.subr.mxu0 0.0
      %622 = vmatpush1.msra.mxu0 0.0
      %623 = vmatprep.subr.mxu0 0.0
      %624 = vmatpush1.msra.mxu0 0.0
      %625 = vmatprep.subr.mxu0 0.0
      %626 = vmatpush1.msra.mxu0 0.0
      %627 = vmatprep.subr.mxu0 0.0
      %628 = vmatpush1.msra.mxu0 0.0
      %629 = vmatprep.subr.mxu0 0.0
      %630 = vmatpush1.msra.mxu0 0.0
      %631 = vmatprep.subr.mxu0 0.0
      %632 = vmatpush1.msra.mxu0 0.0
      %633 = vmatprep.subr.mxu0 0.0
      %634 = vmatpush1.msra.mxu0 0.0
      %635 = vmatprep.subr.mxu0 0.0
      %636 = vmatpush1.msra.mxu0 0.0
      %637 = vmatprep.subr.mxu0 0.0
      %638 = vmatpush1.msra.mxu0 0.0
      %639 = vmatprep.subr.mxu0 0.0
      %640 = vmatpush1.msra.mxu0 0.0
      %641 = vmatprep.subr.mxu0 0.0
      %642 = vmatpush1.msra.mxu0 0.0
      %643 = vmatprep.subr.mxu0 0.0
      %644 = vmatpush1.msra.mxu0 0.0
      %645 = vmatprep.subr.mxu0 0.0
      %646 = vmatpush1.msra.mxu0 0.0
      %647 = vmatprep.subr.mxu0 0.0
      %648 = vmatpush1.msra.mxu0 0.0
      %649 = vmatprep.subr.mxu0 0.0
      %650 = vmatpush1.msra.mxu0 0.0
      %651 = vmatprep.subr.mxu0 0.0
      %652 = vmatpush1.msra.mxu0 0.0
      %653 = vmatprep.subr.mxu0 0.0
      %654 = vmatpush1.msra.mxu0 0.0
      %655 = vmatprep.subr.mxu0 0.0
      %656 = vmatpush1.msra.mxu0 0.0
      %657 = vmatprep.subr.mxu0 0.0
      %658 = vmatpush1.msra.mxu0 0.0
      %659 = vmatprep.subr.mxu0 0.0
      %660 = vmatpush1.msra.mxu0 0.0
      %661 = vmatprep.subr.mxu0 0.0
      %662 = vmatpush1.msra.mxu0 0.0
      %663 = vmatprep.subr.mxu0 0.0
      %664 = vmatpush1.msra.mxu0 0.0
      %665 = vmatprep.mubr.f32.mxu0 0.0
      %666 = vmatmul.mubr.f32.gmra.mrb[0].mxu0 %v590
      %v667 = vpop.f32.mrb[0].mxu0
      %v668 = vadd.f32 %v579, %v667
      %v669 = vpop.f32.mrb[0].mxu0
      %v670 = vadd.f32 %v581, %v669
      %671 = vmatprep.mubr.f32.mxu0 0.0
      %672 = vmatmul.mubr.f32.gmra.mrb[0].mxu0 %v593
      %v673 = vpop.f32.mrb[0].mxu0
      %v674 = vadd.f32 %v585, %v673
      %v675 = vpop.f32.mrb[0].mxu0
      %v676 = vadd.f32 %v587, %v675
      %677 = vdwg.mxu0
      %678 = vrot.lane.b32.xlu0 %v469, 16
      %v679 = vpop.permute.xlu0 %678
      %680 = vrot.lane.b32.xlu0 %v470, 16
      %v681 = vpop.permute.xlu0 %680
      %vm682 = vcmp.lt.s32.totalorder %v479, 16
      %v683 = vsel %vm682, %v679, %v681
      %v684 = vsel %vm682, %v681, %v679
      %v686 = vlaneseq
      %v687 = vshrl.u32 %v686, 7
      %v688 = vsub.s32 0, %v687
      %v689 = vrot.slane %v456, %v688
      %v690 = vlaneseq
      %v691 = vshrl.u32 %v690, 7
      %v692 = vsub.s32 1, %v691
      %v693 = vrot.slane %v456, %v692
      %v696 = vmul.f32 %v684, %v689
      %v697 = vmul.f32 %v683, %v693
      %s698 = scalar_lea.vmem %s2, 16
      %v699 = vld [vmem:[%s698] sm:$0xff]
      %v700 = vld [vmem:[%s698 + $0x8] sm:$0xff]
      %v702 = vsel %vm498, %v699, 0
      %v705 = vsel %vm498, %v700, 0
      %v708 = vsel %vm505, %v696, 0
      %v711 = vsel %vm505, %v697, 0
      %713 = vmatprep.subr.mxu0 %v711
      %714 = vmatpush1.msra.mxu0 %v708
      %715 = vmatprep.subr.mxu0 0.0
      %716 = vmatpush1.msra.mxu0 0.0
      %717 = vmatprep.subr.mxu0 0.0
      %718 = vmatpush1.msra.mxu0 0.0
      %719 = vmatprep.subr.mxu0 0.0
      %720 = vmatpush1.msra.mxu0 0.0
      %721 = vmatprep.subr.mxu0 0.0
      %722 = vmatpush1.msra.mxu0 0.0
      %723 = vmatprep.subr.mxu0 0.0
      %724 = vmatpush1.msra.mxu0 0.0
      %725 = vmatprep.subr.mxu0 0.0
      %726 = vmatpush1.msra.mxu0 0.0
      %727 = vmatprep.subr.mxu0 0.0
      %728 = vmatpush1.msra.mxu0 0.0
      %729 = vmatprep.subr.mxu0 0.0
      %730 = vmatpush1.msra.mxu0 0.0
      %731 = vmatprep.subr.mxu0 0.0
      %732 = vmatpush1.msra.mxu0 0.0
      %733 = vmatprep.subr.mxu0 0.0
      %734 = vmatpush1.msra.mxu0 0.0
      %735 = vmatprep.subr.mxu0 0.0
      %736 = vmatpush1.msra.mxu0 0.0
      %737 = vmatprep.subr.mxu0 0.0
      %738 = vmatpush1.msra.mxu0 0.0
      %739 = vmatprep.subr.mxu0 0.0
      %740 = vmatpush1.msra.mxu0 0.0
      %741 = vmatprep.subr.mxu0 0.0
      %742 = vmatpush1.msra.mxu0 0.0
      %743 = vmatprep.subr.mxu0 0.0
      %744 = vmatpush1.msra.mxu0 0.0
      %745 = vmatprep.subr.mxu0 0.0
      %746 = vmatpush1.msra.mxu0 0.0
      %747 = vmatprep.subr.mxu0 0.0
      %748 = vmatpush1.msra.mxu0 0.0
      %749 = vmatprep.subr.mxu0 0.0
      %750 = vmatpush1.msra.mxu0 0.0
      %751 = vmatprep.subr.mxu0 0.0
      %752 = vmatpush1.msra.mxu0 0.0
      %753 = vmatprep.subr.mxu0 0.0
      %754 = vmatpush1.msra.mxu0 0.0
      %755 = vmatprep.subr.mxu0 0.0
      %756 = vmatpush1.msra.mxu0 0.0
      %757 = vmatprep.subr.mxu0 0.0
      %758 = vmatpush1.msra.mxu0 0.0
      %759 = vmatprep.subr.mxu0 0.0
      %760 = vmatpush1.msra.mxu0 0.0
      %761 = vmatprep.subr.mxu0 0.0
      %762 = vmatpush1.msra.mxu0 0.0
      %763 = vmatprep.subr.mxu0 0.0
      %764 = vmatpush1.msra.mxu0 0.0
      %765 = vmatprep.subr.mxu0 0.0
      %766 = vmatpush1.msra.mxu0 0.0
      %767 = vmatprep.subr.mxu0 0.0
      %768 = vmatpush1.msra.mxu0 0.0
      %769 = vmatprep.subr.mxu0 0.0
      %770 = vmatpush1.msra.mxu0 0.0
      %771 = vmatprep.subr.mxu0 0.0
      %772 = vmatpush1.msra.mxu0 0.0
      %773 = vmatprep.subr.mxu0 0.0
      %774 = vmatpush1.msra.mxu0 0.0
      %775 = vmatprep.subr.mxu0 0.0
      %776 = vmatpush1.msra.mxu0 0.0
      %777 = vmatprep.mubr.f32.mxu0 0.0
      %778 = vmatmul.mubr.f32.gmra.mrb[0].mxu0 %v702
      %v779 = vpop.f32.mrb[0].mxu0
      %v780 = vadd.f32 0.0, %v779
      %v781 = vpop.f32.mrb[0].mxu0
      %v782 = vadd.f32 0.0, %v781
      %783 = vmatprep.mubr.f32.mxu0 0.0
      %784 = vmatmul.mubr.f32.gmra.mrb[0].mxu0 %v705
      %v785 = vpop.f32.mrb[0].mxu0
      %v786 = vadd.f32 0.0, %v785
      %v787 = vpop.f32.mrb[0].mxu0
      %v788 = vadd.f32 0.0, %v787
      %789 = vdwg.mxu0
      %v790 = vadd.f32 %v668, %v780
      %v791 = vadd.f32 %v670, %v782
      %v792 = vadd.f32 %v674, %v786
      %v793 = vadd.f32 %v676, %v788
      %794 = vrot.lane.b32.xlu0 %v469, 15
      %v795 = vpop.permute.xlu0 %794
      %796 = vrot.lane.b32.xlu0 %v470, 15
      %v797 = vpop.permute.xlu0 %796
      %vm798 = vcmp.lt.s32.totalorder %v479, 15
      %v799 = vsel %vm798, %v795, %v797
      %v800 = vsel %vm798, %v797, %v795
      %v802 = vlaneseq
      %v803 = vshrl.u32 %v802, 7
      %v804 = vsub.s32 0, %v803
      %v805 = vrot.slane %v458, %v804
      %v806 = vlaneseq
      %v807 = vshrl.u32 %v806, 7
      %v808 = vsub.s32 1, %v807
      %v809 = vrot.slane %v458, %v808
      %v812 = vmul.f32 %v800, %v805
      %v813 = vmul.f32 %v799, %v809
      %s814 = scalar_lea.vmem %s2, 32
      %v815 = vld [vmem:[%s814] sm:$0xff]
      %v816 = vld [vmem:[%s814 + $0x8] sm:$0xff]
      %v818 = vsel %vm498, %v815, 0
      %v821 = vsel %vm498, %v816, 0
      %v824 = vsel %vm505, %v812, 0
      %v827 = vsel %vm505, %v813, 0
      %829 = vmatprep.subr.mxu0 %v827
      %830 = vmatpush1.msra.mxu0 %v824
      %831 = vmatprep.subr.mxu0 0.0
      %832 = vmatpush1.msra.mxu0 0.0
      %833 = vmatprep.subr.mxu0 0.0
      %834 = vmatpush1.msra.mxu0 0.0
      %835 = vmatprep.subr.mxu0 0.0
      %836 = vmatpush1.msra.mxu0 0.0
      %837 = vmatprep.subr.mxu0 0.0
      %838 = vmatpush1.msra.mxu0 0.0
      %839 = vmatprep.subr.mxu0 0.0
      %840 = vmatpush1.msra.mxu0 0.0
      %841 = vmatprep.subr.mxu0 0.0
      %842 = vmatpush1.msra.mxu0 0.0
      %843 = vmatprep.subr.mxu0 0.0
      %844 = vmatpush1.msra.mxu0 0.0
      %845 = vmatprep.subr.mxu0 0.0
      %846 = vmatpush1.msra.mxu0 0.0
      %847 = vmatprep.subr.mxu0 0.0
      %848 = vmatpush1.msra.mxu0 0.0
      %849 = vmatprep.subr.mxu0 0.0
      %850 = vmatpush1.msra.mxu0 0.0
      %851 = vmatprep.subr.mxu0 0.0
      %852 = vmatpush1.msra.mxu0 0.0
      %853 = vmatprep.subr.mxu0 0.0
      %854 = vmatpush1.msra.mxu0 0.0
      %855 = vmatprep.subr.mxu0 0.0
      %856 = vmatpush1.msra.mxu0 0.0
      %857 = vmatprep.subr.mxu0 0.0
      %858 = vmatpush1.msra.mxu0 0.0
      %859 = vmatprep.subr.mxu0 0.0
      %860 = vmatpush1.msra.mxu0 0.0
      %861 = vmatprep.subr.mxu0 0.0
      %862 = vmatpush1.msra.mxu0 0.0
      %863 = vmatprep.subr.mxu0 0.0
      %864 = vmatpush1.msra.mxu0 0.0
      %865 = vmatprep.subr.mxu0 0.0
      %866 = vmatpush1.msra.mxu0 0.0
      %867 = vmatprep.subr.mxu0 0.0
      %868 = vmatpush1.msra.mxu0 0.0
      %869 = vmatprep.subr.mxu0 0.0
      %870 = vmatpush1.msra.mxu0 0.0
      %871 = vmatprep.subr.mxu0 0.0
      %872 = vmatpush1.msra.mxu0 0.0
      %873 = vmatprep.subr.mxu0 0.0
      %874 = vmatpush1.msra.mxu0 0.0
      %875 = vmatprep.subr.mxu0 0.0
      %876 = vmatpush1.msra.mxu0 0.0
      %877 = vmatprep.subr.mxu0 0.0
      %878 = vmatpush1.msra.mxu0 0.0
      %879 = vmatprep.subr.mxu0 0.0
      %880 = vmatpush1.msra.mxu0 0.0
      %881 = vmatprep.subr.mxu0 0.0
      %882 = vmatpush1.msra.mxu0 0.0
      %883 = vmatprep.subr.mxu0 0.0
      %884 = vmatpush1.msra.mxu0 0.0
      %885 = vmatprep.subr.mxu0 0.0
      %886 = vmatpush1.msra.mxu0 0.0
      %887 = vmatprep.subr.mxu0 0.0
      %888 = vmatpush1.msra.mxu0 0.0
      %889 = vmatprep.subr.mxu0 0.0
      %890 = vmatpush1.msra.mxu0 0.0
      %891 = vmatprep.subr.mxu0 0.0
      %892 = vmatpush1.msra.mxu0 0.0
      %893 = vmatprep.mubr.f32.mxu0 0.0
      %894 = vmatmul.mubr.f32.gmra.mrb[0].mxu0 %v818
      %v895 = vpop.f32.mrb[0].mxu0
      %v896 = vadd.f32 0.0, %v895
      %v897 = vpop.f32.mrb[0].mxu0
      %v898 = vadd.f32 0.0, %v897
      %899 = vmatprep.mubr.f32.mxu0 0.0
      %900 = vmatmul.mubr.f32.gmra.mrb[0].mxu0 %v821
      %v901 = vpop.f32.mrb[0].mxu0
      %v902 = vadd.f32 0.0, %v901
      %v903 = vpop.f32.mrb[0].mxu0
      %v904 = vadd.f32 0.0, %v903
      %905 = vdwg.mxu0
      %v906 = vadd.f32 %v790, %v896
      %v907 = vadd.f32 %v791, %v898
      %v908 = vadd.f32 %v792, %v902
      %v909 = vadd.f32 %v793, %v904
      %910 = vrot.lane.b32.xlu0 %v469, 1
      %v911 = vpop.permute.xlu0 %910
      %912 = vrot.lane.b32.xlu0 %v470, 1
      %v913 = vpop.permute.xlu0 %912
      %vm914 = vcmp.lt.s32.totalorder %v479, 1
      %v915 = vsel %vm914, %v911, %v913
      %v916 = vsel %vm914, %v913, %v911
      %v918 = vlaneseq
      %v919 = vshrl.u32 %v918, 7
      %v920 = vsub.s32 0, %v919
      %v921 = vrot.slane %v460, %v920
      %v922 = vlaneseq
      %v923 = vshrl.u32 %v922, 7
      %v924 = vsub.s32 1, %v923
      %v925 = vrot.slane %v460, %v924
      %v928 = vmul.f32 %v916, %v921
      %v929 = vmul.f32 %v915, %v925
      %s930 = scalar_lea.vmem %s2, 48
      %v931 = vld [vmem:[%s930] sm:$0xff]
      %v932 = vld [vmem:[%s930 + $0x8] sm:$0xff]
      %v934 = vsel %vm498, %v931, 0
      %v937 = vsel %vm498, %v932, 0
      %v940 = vsel %vm505, %v928, 0
      %v943 = vsel %vm505, %v929, 0
      %945 = vmatprep.subr.mxu0 %v943
      %946 = vmatpush1.msra.mxu0 %v940
      %947 = vmatprep.subr.mxu0 0.0
      %948 = vmatpush1.msra.mxu0 0.0
      %949 = vmatprep.subr.mxu0 0.0
      %950 = vmatpush1.msra.mxu0 0.0
      %951 = vmatprep.subr.mxu0 0.0
      %952 = vmatpush1.msra.mxu0 0.0
      %953 = vmatprep.subr.mxu0 0.0
      %954 = vmatpush1.msra.mxu0 0.0
      %955 = vmatprep.subr.mxu0 0.0
      %956 = vmatpush1.msra.mxu0 0.0
      %957 = vmatprep.subr.mxu0 0.0
      %958 = vmatpush1.msra.mxu0 0.0
      %959 = vmatprep.subr.mxu0 0.0
      %960 = vmatpush1.msra.mxu0 0.0
      %961 = vmatprep.subr.mxu0 0.0
      %962 = vmatpush1.msra.mxu0 0.0
      %963 = vmatprep.subr.mxu0 0.0
      %964 = vmatpush1.msra.mxu0 0.0
      %965 = vmatprep.subr.mxu0 0.0
      %966 = vmatpush1.msra.mxu0 0.0
      %967 = vmatprep.subr.mxu0 0.0
      %968 = vmatpush1.msra.mxu0 0.0
      %969 = vmatprep.subr.mxu0 0.0
      %970 = vmatpush1.msra.mxu0 0.0
      %971 = vmatprep.subr.mxu0 0.0
      %972 = vmatpush1.msra.mxu0 0.0
      %973 = vmatprep.subr.mxu0 0.0
      %974 = vmatpush1.msra.mxu0 0.0
      %975 = vmatprep.subr.mxu0 0.0
      %976 = vmatpush1.msra.mxu0 0.0
      %977 = vmatprep.subr.mxu0 0.0
      %978 = vmatpush1.msra.mxu0 0.0
      %979 = vmatprep.subr.mxu0 0.0
      %980 = vmatpush1.msra.mxu0 0.0
      %981 = vmatprep.subr.mxu0 0.0
      %982 = vmatpush1.msra.mxu0 0.0
      %983 = vmatprep.subr.mxu0 0.0
      %984 = vmatpush1.msra.mxu0 0.0
      %985 = vmatprep.subr.mxu0 0.0
      %986 = vmatpush1.msra.mxu0 0.0
      %987 = vmatprep.subr.mxu0 0.0
      %988 = vmatpush1.msra.mxu0 0.0
      %989 = vmatprep.subr.mxu0 0.0
      %990 = vmatpush1.msra.mxu0 0.0
      %991 = vmatprep.subr.mxu0 0.0
      %992 = vmatpush1.msra.mxu0 0.0
      %993 = vmatprep.subr.mxu0 0.0
      %994 = vmatpush1.msra.mxu0 0.0
      %995 = vmatprep.subr.mxu0 0.0
      %996 = vmatpush1.msra.mxu0 0.0
      %997 = vmatprep.subr.mxu0 0.0
      %998 = vmatpush1.msra.mxu0 0.0
      %999 = vmatprep.subr.mxu0 0.0
      %1000 = vmatpush1.msra.mxu0 0.0
      %1001 = vmatprep.subr.mxu0 0.0
      %1002 = vmatpush1.msra.mxu0 0.0
      %1003 = vmatprep.subr.mxu0 0.0
      %1004 = vmatpush1.msra.mxu0 0.0
      %1005 = vmatprep.subr.mxu0 0.0
      %1006 = vmatpush1.msra.mxu0 0.0
      %1007 = vmatprep.subr.mxu0 0.0
      %1008 = vmatpush1.msra.mxu0 0.0
      %1009 = vmatprep.mubr.f32.mxu0 0.0
      %1010 = vmatmul.mubr.f32.gmra.mrb[0].mxu0 %v934
      %v1011 = vpop.f32.mrb[0].mxu0
      %v1012 = vadd.f32 0.0, %v1011
      %v1013 = vpop.f32.mrb[0].mxu0
      %v1014 = vadd.f32 0.0, %v1013
      %1015 = vmatprep.mubr.f32.mxu0 0.0
      %1016 = vmatmul.mubr.f32.gmra.mrb[0].mxu0 %v937
      %v1017 = vpop.f32.mrb[0].mxu0
      %v1018 = vadd.f32 0.0, %v1017
      %v1019 = vpop.f32.mrb[0].mxu0
      %v1020 = vadd.f32 0.0, %v1019
      %1021 = vdwg.mxu0
      %v1022 = vadd.f32 %v906, %v1012
      %v1023 = vadd.f32 %v907, %v1014
      %v1024 = vadd.f32 %v908, %v1018
      %v1025 = vadd.f32 %v909, %v1020
      %1026 = vrot.lane.b32.xlu0 %v469, 127
      %v1027 = vpop.permute.xlu0 %1026
      %1028 = vrot.lane.b32.xlu0 %v470, 127
      %v1029 = vpop.permute.xlu0 %1028
      %vm1030 = vcmp.lt.s32.totalorder %v479, 127
      %v1031 = vsel %vm1030, %v1027, %v1029
      %v1032 = vsel %vm1030, %v1029, %v1027
      %v1034 = vlaneseq
      %v1035 = vshrl.u32 %v1034, 7
      %v1036 = vsub.s32 0, %v1035
      %v1037 = vrot.slane %v462, %v1036
      %v1038 = vlaneseq
      %v1039 = vshrl.u32 %v1038, 7
      %v1040 = vsub.s32 1, %v1039
      %v1041 = vrot.slane %v462, %v1040
      %v1044 = vmul.f32 %v1031, %v1037
      %v1045 = vmul.f32 %v1032, %v1041
      %s1046 = scalar_lea.vmem %s2, 80
      %v1047 = vld [vmem:[%s1046] sm:$0xff]
      %v1048 = vld [vmem:[%s1046 + $0x8] sm:$0xff]
      %v1050 = vsel %vm498, %v1047, 0
      %v1053 = vsel %vm498, %v1048, 0
      %v1056 = vsel %vm505, %v1044, 0
      %v1059 = vsel %vm505, %v1045, 0
      %1061 = vmatprep.subr.mxu0 %v1059
      %1062 = vmatpush1.msra.mxu0 %v1056
      %1063 = vmatprep.subr.mxu0 0.0
      %1064 = vmatpush1.msra.mxu0 0.0
      %1065 = vmatprep.subr.mxu0 0.0
      %1066 = vmatpush1.msra.mxu0 0.0
      %1067 = vmatprep.subr.mxu0 0.0
      %1068 = vmatpush1.msra.mxu0 0.0
      %1069 = vmatprep.subr.mxu0 0.0
      %1070 = vmatpush1.msra.mxu0 0.0
      %1071 = vmatprep.subr.mxu0 0.0
      %1072 = vmatpush1.msra.mxu0 0.0
      %1073 = vmatprep.subr.mxu0 0.0
      %1074 = vmatpush1.msra.mxu0 0.0
      %1075 = vmatprep.subr.mxu0 0.0
      %1076 = vmatpush1.msra.mxu0 0.0
      %1077 = vmatprep.subr.mxu0 0.0
      %1078 = vmatpush1.msra.mxu0 0.0
      %1079 = vmatprep.subr.mxu0 0.0
      %1080 = vmatpush1.msra.mxu0 0.0
      %1081 = vmatprep.subr.mxu0 0.0
      %1082 = vmatpush1.msra.mxu0 0.0
      %1083 = vmatprep.subr.mxu0 0.0
      %1084 = vmatpush1.msra.mxu0 0.0
      %1085 = vmatprep.subr.mxu0 0.0
      %1086 = vmatpush1.msra.mxu0 0.0
      %1087 = vmatprep.subr.mxu0 0.0
      %1088 = vmatpush1.msra.mxu0 0.0
      %1089 = vmatprep.subr.mxu0 0.0
      %1090 = vmatpush1.msra.mxu0 0.0
      %1091 = vmatprep.subr.mxu0 0.0
      %1092 = vmatpush1.msra.mxu0 0.0
      %1093 = vmatprep.subr.mxu0 0.0
      %1094 = vmatpush1.msra.mxu0 0.0
      %1095 = vmatprep.subr.mxu0 0.0
      %1096 = vmatpush1.msra.mxu0 0.0
      %1097 = vmatprep.subr.mxu0 0.0
      %1098 = vmatpush1.msra.mxu0 0.0
      %1099 = vmatprep.subr.mxu0 0.0
      %1100 = vmatpush1.msra.mxu0 0.0
      %1101 = vmatprep.subr.mxu0 0.0
      %1102 = vmatpush1.msra.mxu0 0.0
      %1103 = vmatprep.subr.mxu0 0.0
      %1104 = vmatpush1.msra.mxu0 0.0
      %1105 = vmatprep.subr.mxu0 0.0
      %1106 = vmatpush1.msra.mxu0 0.0
      %1107 = vmatprep.subr.mxu0 0.0
      %1108 = vmatpush1.msra.mxu0 0.0
      %1109 = vmatprep.subr.mxu0 0.0
      %1110 = vmatpush1.msra.mxu0 0.0
      %1111 = vmatprep.subr.mxu0 0.0
      %1112 = vmatpush1.msra.mxu0 0.0
      %1113 = vmatprep.subr.mxu0 0.0
      %1114 = vmatpush1.msra.mxu0 0.0
      %1115 = vmatprep.subr.mxu0 0.0
      %1116 = vmatpush1.msra.mxu0 0.0
      %1117 = vmatprep.subr.mxu0 0.0
      %1118 = vmatpush1.msra.mxu0 0.0
      %1119 = vmatprep.subr.mxu0 0.0
      %1120 = vmatpush1.msra.mxu0 0.0
      %1121 = vmatprep.subr.mxu0 0.0
      %1122 = vmatpush1.msra.mxu0 0.0
      %1123 = vmatprep.subr.mxu0 0.0
      %1124 = vmatpush1.msra.mxu0 0.0
      %1125 = vmatprep.mubr.f32.mxu0 0.0
      %1126 = vmatmul.mubr.f32.gmra.mrb[0].mxu0 %v1050
      %v1127 = vpop.f32.mrb[0].mxu0
      %v1128 = vadd.f32 0.0, %v1127
      %v1129 = vpop.f32.mrb[0].mxu0
      %v1130 = vadd.f32 0.0, %v1129
      %1131 = vmatprep.mubr.f32.mxu0 0.0
      %1132 = vmatmul.mubr.f32.gmra.mrb[0].mxu0 %v1053
      %v1133 = vpop.f32.mrb[0].mxu0
      %v1134 = vadd.f32 0.0, %v1133
      %v1135 = vpop.f32.mrb[0].mxu0
      %v1136 = vadd.f32 0.0, %v1135
      %1137 = vdwg.mxu0
      %v1138 = vadd.f32 %v1022, %v1128
      %v1139 = vadd.f32 %v1023, %v1130
      %v1140 = vadd.f32 %v1024, %v1134
      %v1141 = vadd.f32 %v1025, %v1136
      %1142 = vrot.lane.b32.xlu0 %v469, 113
      %v1143 = vpop.permute.xlu0 %1142
      %1144 = vrot.lane.b32.xlu0 %v470, 113
      %v1145 = vpop.permute.xlu0 %1144
      %vm1146 = vcmp.lt.s32.totalorder %v479, 113
      %v1147 = vsel %vm1146, %v1143, %v1145
      %v1148 = vsel %vm1146, %v1145, %v1143
      %v1150 = vlaneseq
      %v1151 = vshrl.u32 %v1150, 7
      %v1152 = vsub.s32 0, %v1151
      %v1153 = vrot.slane %v464, %v1152
      %v1154 = vlaneseq
      %v1155 = vshrl.u32 %v1154, 7
      %v1156 = vsub.s32 1, %v1155
      %v1157 = vrot.slane %v464, %v1156
      %v1160 = vmul.f32 %v1147, %v1153
      %v1161 = vmul.f32 %v1148, %v1157
      %s1162 = scalar_lea.vmem %s2, 96
      %v1163 = vld [vmem:[%s1162] sm:$0xff]
      %v1164 = vld [vmem:[%s1162 + $0x8] sm:$0xff]
      %v1166 = vsel %vm498, %v1163, 0
      %v1169 = vsel %vm498, %v1164, 0
      %v1172 = vsel %vm505, %v1160, 0
      %v1175 = vsel %vm505, %v1161, 0
      %1177 = vmatprep.subr.mxu0 %v1175
      %1178 = vmatpush1.msra.mxu0 %v1172
      %1179 = vmatprep.subr.mxu0 0.0
      %1180 = vmatpush1.msra.mxu0 0.0
      %1181 = vmatprep.subr.mxu0 0.0
      %1182 = vmatpush1.msra.mxu0 0.0
      %1183 = vmatprep.subr.mxu0 0.0
      %1184 = vmatpush1.msra.mxu0 0.0
      %1185 = vmatprep.subr.mxu0 0.0
      %1186 = vmatpush1.msra.mxu0 0.0
      %1187 = vmatprep.subr.mxu0 0.0
      %1188 = vmatpush1.msra.mxu0 0.0
      %1189 = vmatprep.subr.mxu0 0.0
      %1190 = vmatpush1.msra.mxu0 0.0
      %1191 = vmatprep.subr.mxu0 0.0
      %1192 = vmatpush1.msra.mxu0 0.0
      %1193 = vmatprep.subr.mxu0 0.0
      %1194 = vmatpush1.msra.mxu0 0.0
      %1195 = vmatprep.subr.mxu0 0.0
      %1196 = vmatpush1.msra.mxu0 0.0
      %1197 = vmatprep.subr.mxu0 0.0
      %1198 = vmatpush1.msra.mxu0 0.0
      %1199 = vmatprep.subr.mxu0 0.0
      %1200 = vmatpush1.msra.mxu0 0.0
      %1201 = vmatprep.subr.mxu0 0.0
      %1202 = vmatpush1.msra.mxu0 0.0
      %1203 = vmatprep.subr.mxu0 0.0
      %1204 = vmatpush1.msra.mxu0 0.0
      %1205 = vmatprep.subr.mxu0 0.0
      %1206 = vmatpush1.msra.mxu0 0.0
      %1207 = vmatprep.subr.mxu0 0.0
      %1208 = vmatpush1.msra.mxu0 0.0
      %1209 = vmatprep.subr.mxu0 0.0
      %1210 = vmatpush1.msra.mxu0 0.0
      %1211 = vmatprep.subr.mxu0 0.0
      %1212 = vmatpush1.msra.mxu0 0.0
      %1213 = vmatprep.subr.mxu0 0.0
      %1214 = vmatpush1.msra.mxu0 0.0
      %1215 = vmatprep.subr.mxu0 0.0
      %1216 = vmatpush1.msra.mxu0 0.0
      %1217 = vmatprep.subr.mxu0 0.0
      %1218 = vmatpush1.msra.mxu0 0.0
      %1219 = vmatprep.subr.mxu0 0.0
      %1220 = vmatpush1.msra.mxu0 0.0
      %1221 = vmatprep.subr.mxu0 0.0
      %1222 = vmatpush1.msra.mxu0 0.0
      %1223 = vmatprep.subr.mxu0 0.0
      %1224 = vmatpush1.msra.mxu0 0.0
      %1225 = vmatprep.subr.mxu0 0.0
      %1226 = vmatpush1.msra.mxu0 0.0
      %1227 = vmatprep.subr.mxu0 0.0
      %1228 = vmatpush1.msra.mxu0 0.0
      %1229 = vmatprep.subr.mxu0 0.0
      %1230 = vmatpush1.msra.mxu0 0.0
      %1231 = vmatprep.subr.mxu0 0.0
      %1232 = vmatpush1.msra.mxu0 0.0
      %1233 = vmatprep.subr.mxu0 0.0
      %1234 = vmatpush1.msra.mxu0 0.0
      %1235 = vmatprep.subr.mxu0 0.0
      %1236 = vmatpush1.msra.mxu0 0.0
      %1237 = vmatprep.subr.mxu0 0.0
      %1238 = vmatpush1.msra.mxu0 0.0
      %1239 = vmatprep.subr.mxu0 0.0
      %1240 = vmatpush1.msra.mxu0 0.0
      %1241 = vmatprep.mubr.f32.mxu0 0.0
      %1242 = vmatmul.mubr.f32.gmra.mrb[0].mxu0 %v1166
      %v1243 = vpop.f32.mrb[0].mxu0
      %v1244 = vadd.f32 0.0, %v1243
      %v1245 = vpop.f32.mrb[0].mxu0
      %v1246 = vadd.f32 0.0, %v1245
      %1247 = vmatprep.mubr.f32.mxu0 0.0
      %1248 = vmatmul.mubr.f32.gmra.mrb[0].mxu0 %v1169
      %v1249 = vpop.f32.mrb[0].mxu0
      %v1250 = vadd.f32 0.0, %v1249
      %v1251 = vpop.f32.mrb[0].mxu0
      %v1252 = vadd.f32 0.0, %v1251
      %1253 = vdwg.mxu0
      %v1254 = vadd.f32 %v1138, %v1244
      %v1255 = vadd.f32 %v1139, %v1246
      %v1256 = vadd.f32 %v1140, %v1250
      %v1257 = vadd.f32 %v1141, %v1252
      %1258 = vrot.lane.b32.xlu0 %v469, 112
      %v1259 = vpop.permute.xlu0 %1258
      %1260 = vrot.lane.b32.xlu0 %v470, 112
      %v1261 = vpop.permute.xlu0 %1260
      %vm1262 = vcmp.lt.s32.totalorder %v479, 112
      %v1263 = vsel %vm1262, %v1259, %v1261
      %v1264 = vsel %vm1262, %v1261, %v1259
      %v1266 = vlaneseq
      %v1267 = vshrl.u32 %v1266, 7
      %v1268 = vsub.s32 0, %v1267
      %v1269 = vrot.slane %v466, %v1268
      %v1270 = vlaneseq
      %v1271 = vshrl.u32 %v1270, 7
      %v1272 = vsub.s32 1, %v1271
      %v1273 = vrot.slane %v466, %v1272
      %v1276 = vmul.f32 %v1263, %v1269
      %v1277 = vmul.f32 %v1264, %v1273
      %s1278 = scalar_lea.vmem %s2, 112
      %v1279 = vld [vmem:[%s1278] sm:$0xff]
      %v1280 = vld [vmem:[%s1278 + $0x8] sm:$0xff]
      %v1282 = vsel %vm498, %v1279, 0
      %v1285 = vsel %vm498, %v1280, 0
      %v1288 = vsel %vm505, %v1276, 0
      %v1291 = vsel %vm505, %v1277, 0
      %1293 = vmatprep.subr.mxu0 %v1291
      %1294 = vmatpush1.msra.mxu0 %v1288
      %1295 = vmatprep.subr.mxu0 0.0
      %1296 = vmatpush1.msra.mxu0 0.0
      %1297 = vmatprep.subr.mxu0 0.0
      %1298 = vmatpush1.msra.mxu0 0.0
      %1299 = vmatprep.subr.mxu0 0.0
      %1300 = vmatpush1.msra.mxu0 0.0
      %1301 = vmatprep.subr.mxu0 0.0
      %1302 = vmatpush1.msra.mxu0 0.0
      %1303 = vmatprep.subr.mxu0 0.0
      %1304 = vmatpush1.msra.mxu0 0.0
      %1305 = vmatprep.subr.mxu0 0.0
      %1306 = vmatpush1.msra.mxu0 0.0
      %1307 = vmatprep.subr.mxu0 0.0
      %1308 = vmatpush1.msra.mxu0 0.0
      %1309 = vmatprep.subr.mxu0 0.0
      %1310 = vmatpush1.msra.mxu0 0.0
      %1311 = vmatprep.subr.mxu0 0.0
      %1312 = vmatpush1.msra.mxu0 0.0
      %1313 = vmatprep.subr.mxu0 0.0
      %1314 = vmatpush1.msra.mxu0 0.0
      %1315 = vmatprep.subr.mxu0 0.0
      %1316 = vmatpush1.msra.mxu0 0.0
      %1317 = vmatprep.subr.mxu0 0.0
      %1318 = vmatpush1.msra.mxu0 0.0
      %1319 = vmatprep.subr.mxu0 0.0
      %1320 = vmatpush1.msra.mxu0 0.0
      %1321 = vmatprep.subr.mxu0 0.0
      %1322 = vmatpush1.msra.mxu0 0.0
      %1323 = vmatprep.subr.mxu0 0.0
      %1324 = vmatpush1.msra.mxu0 0.0
      %1325 = vmatprep.subr.mxu0 0.0
      %1326 = vmatpush1.msra.mxu0 0.0
      %1327 = vmatprep.subr.mxu0 0.0
      %1328 = vmatpush1.msra.mxu0 0.0
      %1329 = vmatprep.subr.mxu0 0.0
      %1330 = vmatpush1.msra.mxu0 0.0
      %1331 = vmatprep.subr.mxu0 0.0
      %1332 = vmatpush1.msra.mxu0 0.0
      %1333 = vmatprep.subr.mxu0 0.0
      %1334 = vmatpush1.msra.mxu0 0.0
      %1335 = vmatprep.subr.mxu0 0.0
      %1336 = vmatpush1.msra.mxu0 0.0
      %1337 = vmatprep.subr.mxu0 0.0
      %1338 = vmatpush1.msra.mxu0 0.0
      %1339 = vmatprep.subr.mxu0 0.0
      %1340 = vmatpush1.msra.mxu0 0.0
      %1341 = vmatprep.subr.mxu0 0.0
      %1342 = vmatpush1.msra.mxu0 0.0
      %1343 = vmatprep.subr.mxu0 0.0
      %1344 = vmatpush1.msra.mxu0 0.0
      %1345 = vmatprep.subr.mxu0 0.0
      %1346 = vmatpush1.msra.mxu0 0.0
      %1347 = vmatprep.subr.mxu0 0.0
      %1348 = vmatpush1.msra.mxu0 0.0
      %1349 = vmatprep.subr.mxu0 0.0
      %1350 = vmatpush1.msra.mxu0 0.0
      %1351 = vmatprep.subr.mxu0 0.0
      %1352 = vmatpush1.msra.mxu0 0.0
      %1353 = vmatprep.subr.mxu0 0.0
      %1354 = vmatpush1.msra.mxu0 0.0
      %1355 = vmatprep.subr.mxu0 0.0
      %1356 = vmatpush1.msra.mxu0 0.0
      %1357 = vmatprep.mubr.f32.mxu0 0.0
      %1358 = vmatmul.mubr.f32.gmra.mrb[0].mxu0 %v1282
      %v1359 = vpop.f32.mrb[0].mxu0
      %v1360 = vadd.f32 0.0, %v1359
      %v1361 = vpop.f32.mrb[0].mxu0
      %v1362 = vadd.f32 0.0, %v1361
      %1363 = vmatprep.mubr.f32.mxu0 0.0
      %1364 = vmatmul.mubr.f32.gmra.mrb[0].mxu0 %v1285
      %v1365 = vpop.f32.mrb[0].mxu0
      %v1366 = vadd.f32 0.0, %v1365
      %v1367 = vpop.f32.mrb[0].mxu0
      %v1368 = vadd.f32 0.0, %v1367
      %1369 = vdwg.mxu0
      %v1370 = vadd.f32 %v1254, %v1360
      %v1371 = vadd.f32 %v1255, %v1362
      %v1372 = vadd.f32 %v1256, %v1366
      %v1373 = vadd.f32 %v1257, %v1368
      %1374 = vrot.lane.b32.xlu0 %v469, 111
      %v1375 = vpop.permute.xlu0 %1374
      %1376 = vrot.lane.b32.xlu0 %v470, 111
      %v1377 = vpop.permute.xlu0 %1376
      %vm1378 = vcmp.lt.s32.totalorder %v479, 111
      %v1379 = vsel %vm1378, %v1375, %v1377
      %v1380 = vsel %vm1378, %v1377, %v1375
      %v1382 = vlaneseq
      %v1383 = vshrl.u32 %v1382, 7
      %v1384 = vsub.s32 0, %v1383
      %v1385 = vrot.slane %v468, %v1384
      %v1386 = vlaneseq
      %v1387 = vshrl.u32 %v1386, 7
      %v1388 = vsub.s32 1, %v1387
      %v1389 = vrot.slane %v468, %v1388
      %v1392 = vmul.f32 %v1379, %v1385
      %v1393 = vmul.f32 %v1380, %v1389
      %s1394 = scalar_lea.vmem %s2, 128
      %v1395 = vld [vmem:[%s1394] sm:$0xff]
      %v1396 = vld [vmem:[%s1394 + $0x8] sm:$0xff]
      %v1398 = vsel %vm498, %v1395, 0
      %v1401 = vsel %vm498, %v1396, 0
      %v1404 = vsel %vm505, %v1392, 0
      %v1407 = vsel %vm505, %v1393, 0
      %1409 = vmatprep.subr.mxu0 %v1407
      %1410 = vmatpush1.msra.mxu0 %v1404
      %1411 = vmatprep.subr.mxu0 0.0
      %1412 = vmatpush1.msra.mxu0 0.0
      %1413 = vmatprep.subr.mxu0 0.0
      %1414 = vmatpush1.msra.mxu0 0.0
      %1415 = vmatprep.subr.mxu0 0.0
      %1416 = vmatpush1.msra.mxu0 0.0
      %1417 = vmatprep.subr.mxu0 0.0
      %1418 = vmatpush1.msra.mxu0 0.0
      %1419 = vmatprep.subr.mxu0 0.0
      %1420 = vmatpush1.msra.mxu0 0.0
      %1421 = vmatprep.subr.mxu0 0.0
      %1422 = vmatpush1.msra.mxu0 0.0
      %1423 = vmatprep.subr.mxu0 0.0
      %1424 = vmatpush1.msra.mxu0 0.0
      %1425 = vmatprep.subr.mxu0 0.0
      %1426 = vmatpush1.msra.mxu0 0.0
      %1427 = vmatprep.subr.mxu0 0.0
      %1428 = vmatpush1.msra.mxu0 0.0
      %1429 = vmatprep.subr.mxu0 0.0
      %1430 = vmatpush1.msra.mxu0 0.0
      %1431 = vmatprep.subr.mxu0 0.0
      %1432 = vmatpush1.msra.mxu0 0.0
      %1433 = vmatprep.subr.mxu0 0.0
      %1434 = vmatpush1.msra.mxu0 0.0
      %1435 = vmatprep.subr.mxu0 0.0
      %1436 = vmatpush1.msra.mxu0 0.0
      %1437 = vmatprep.subr.mxu0 0.0
      %1438 = vmatpush1.msra.mxu0 0.0
      %1439 = vmatprep.subr.mxu0 0.0
      %1440 = vmatpush1.msra.mxu0 0.0
      %1441 = vmatprep.subr.mxu0 0.0
      %1442 = vmatpush1.msra.mxu0 0.0
      %1443 = vmatprep.subr.mxu0 0.0
      %1444 = vmatpush1.msra.mxu0 0.0
      %1445 = vmatprep.subr.mxu0 0.0
      %1446 = vmatpush1.msra.mxu0 0.0
      %1447 = vmatprep.subr.mxu0 0.0
      %1448 = vmatpush1.msra.mxu0 0.0
      %1449 = vmatprep.subr.mxu0 0.0
      %1450 = vmatpush1.msra.mxu0 0.0
      %1451 = vmatprep.subr.mxu0 0.0
      %1452 = vmatpush1.msra.mxu0 0.0
      %1453 = vmatprep.subr.mxu0 0.0
      %1454 = vmatpush1.msra.mxu0 0.0
      %1455 = vmatprep.subr.mxu0 0.0
      %1456 = vmatpush1.msra.mxu0 0.0
      %1457 = vmatprep.subr.mxu0 0.0
      %1458 = vmatpush1.msra.mxu0 0.0
      %1459 = vmatprep.subr.mxu0 0.0
      %1460 = vmatpush1.msra.mxu0 0.0
      %1461 = vmatprep.subr.mxu0 0.0
      %1462 = vmatpush1.msra.mxu0 0.0
      %1463 = vmatprep.subr.mxu0 0.0
      %1464 = vmatpush1.msra.mxu0 0.0
      %1465 = vmatprep.subr.mxu0 0.0
      %1466 = vmatpush1.msra.mxu0 0.0
      %1467 = vmatprep.subr.mxu0 0.0
      %1468 = vmatpush1.msra.mxu0 0.0
      %1469 = vmatprep.subr.mxu0 0.0
      %1470 = vmatpush1.msra.mxu0 0.0
      %1471 = vmatprep.subr.mxu0 0.0
      %1472 = vmatpush1.msra.mxu0 0.0
      %1473 = vmatprep.mubr.f32.mxu0 0.0
      %1474 = vmatmul.mubr.f32.gmra.mrb[0].mxu0 %v1398
      %v1475 = vpop.f32.mrb[0].mxu0
      %v1476 = vadd.f32 0.0, %v1475
      %v1477 = vpop.f32.mrb[0].mxu0
      %v1478 = vadd.f32 0.0, %v1477
      %1479 = vmatprep.mubr.f32.mxu0 0.0
      %1480 = vmatmul.mubr.f32.gmra.mrb[0].mxu0 %v1401
      %v1481 = vpop.f32.mrb[0].mxu0
      %v1482 = vadd.f32 0.0, %v1481
      %v1483 = vpop.f32.mrb[0].mxu0
      %v1484 = vadd.f32 0.0, %v1483
      %1485 = vdwg.mxu0
      %v1486 = vadd.f32 %v1370, %v1476
      %v1487 = vadd.f32 %v1371, %v1478
      %v1488 = vadd.f32 %v1372, %v1482
      %v1489 = vadd.f32 %v1373, %v1484
      %v1490 = vld [vmem:[%s3] sm:$0xff]
      %v1491 = vld [vmem:[%s3 + $0x8] sm:$0xff]
      %1493 = vset.pattern.permute.xlu0 0
      %1494 = vperm.xlu0 %1493, %v1490
      %v1495 = vpop.permute.xlu0 %1494
      %1498 = vset.pattern.permute.xlu0 0
      %1499 = vperm.xlu0 %1498, %v1491
      %v1500 = vpop.permute.xlu0 %1499
      %v1502 = vadd.f32 %v1486, %v1495
      %v1503 = vadd.f32 %v1487, %v1495
      %v1504 = vadd.f32 %v1488, %v1500
      %v1505 = vadd.f32 %v1489, %v1500
      %v1506 = vmax.f32 %v1502, 0.0
      %v1507 = vmax.f32 %v1503, 0.0
      %v1508 = vmax.f32 %v1504, 0.0
      %v1509 = vmax.f32 %v1505, 0.0
      %1510 = vst [vmem:[%s448] sm:$0xff] %v1506
      %1511 = vst [vmem:[%s448 + $0x8] sm:$0xff] %v1507
      %1512 = vst [vmem:[%s448 + $0x10] sm:$0xff] %v1508
      %1513 = vst [vmem:[%s448 + $0x18] sm:$0xff] %v1509
      %s1514 = scalar_lea.vmem %s4, 32
      %v1515 = vld [vmem:[%s1514] sm:$0xff]
      %1516 = vrot.lane.b32.xlu0 %v1506, 17
      %v1517 = vpop.permute.xlu0 %1516
      %1518 = vrot.lane.b32.xlu0 %v1508, 17
      %v1519 = vpop.permute.xlu0 %1518
      %1520 = vrot.lane.b32.xlu0 %v1507, 17
      %v1521 = vpop.permute.xlu0 %1520
      %1522 = vrot.lane.b32.xlu0 %v1509, 17
      %v1523 = vpop.permute.xlu0 %1522
      %v1524 = vsel %vm480, %v1517, %v1521
      %v1525 = vsel %vm480, %v1519, %v1523
      %v1526 = vsel %vm480, %v1521, %v1517
      %v1527 = vsel %vm480, %v1523, %v1519
      %v1528 = vmul.f32 %v1526, %v487
      %v1529 = vmul.f32 %v1524, %v491
      %v1530 = vmul.f32 %v1527, %v487
      %v1531 = vmul.f32 %v1525, %v491
      %v1532 = vld [vmem:[%s4] sm:$0xff]
      %vm1533 = vcmask 130048
      %v1535 = vsel %vm1533, %v1532, 0
      %1537 = vmatprep.subr.mxu0 %v1529
      %1538 = vmatpush1.msra.mxu0 %v1528
      %1539 = vmatprep.subr.mxu0 %v1531
      %1540 = vmatpush1.msra.mxu0 %v1530
      %1541 = vmatprep.subr.mxu0 0.0
      %1542 = vmatpush1.msra.mxu0 0.0
      %1543 = vmatprep.subr.mxu0 0.0
      %1544 = vmatpush1.msra.mxu0 0.0
      %1545 = vmatprep.subr.mxu0 0.0
      %1546 = vmatpush1.msra.mxu0 0.0
      %1547 = vmatprep.subr.mxu0 0.0
      %1548 = vmatpush1.msra.mxu0 0.0
      %1549 = vmatprep.subr.mxu0 0.0
      %1550 = vmatpush1.msra.mxu0 0.0
      %1551 = vmatprep.subr.mxu0 0.0
      %1552 = vmatpush1.msra.mxu0 0.0
      %1553 = vmatprep.subr.mxu0 0.0
      %1554 = vmatpush1.msra.mxu0 0.0
      %1555 = vmatprep.subr.mxu0 0.0
      %1556 = vmatpush1.msra.mxu0 0.0
      %1557 = vmatprep.subr.mxu0 0.0
      %1558 = vmatpush1.msra.mxu0 0.0
      %1559 = vmatprep.subr.mxu0 0.0
      %1560 = vmatpush1.msra.mxu0 0.0
      %1561 = vmatprep.subr.mxu0 0.0
      %1562 = vmatpush1.msra.mxu0 0.0
      %1563 = vmatprep.subr.mxu0 0.0
      %1564 = vmatpush1.msra.mxu0 0.0
      %1565 = vmatprep.subr.mxu0 0.0
      %1566 = vmatpush1.msra.mxu0 0.0
      %1567 = vmatprep.subr.mxu0 0.0
      %1568 = vmatpush1.msra.mxu0 0.0
      %1569 = vmatprep.subr.mxu0 0.0
      %1570 = vmatpush1.msra.mxu0 0.0
      %1571 = vmatprep.subr.mxu0 0.0
      %1572 = vmatpush1.msra.mxu0 0.0
      %1573 = vmatprep.subr.mxu0 0.0
      %1574 = vmatpush1.msra.mxu0 0.0
      %1575 = vmatprep.subr.mxu0 0.0
      %1576 = vmatpush1.msra.mxu0 0.0
      %1577 = vmatprep.subr.mxu0 0.0
      %1578 = vmatpush1.msra.mxu0 0.0
      %1579 = vmatprep.subr.mxu0 0.0
      %1580 = vmatpush1.msra.mxu0 0.0
      %1581 = vmatprep.subr.mxu0 0.0
      %1582 = vmatpush1.msra.mxu0 0.0
      %1583 = vmatprep.subr.mxu0 0.0
      %1584 = vmatpush1.msra.mxu0 0.0
      %1585 = vmatprep.subr.mxu0 0.0
      %1586 = vmatpush1.msra.mxu0 0.0
      %1587 = vmatprep.subr.mxu0 0.0
      %1588 = vmatpush1.msra.mxu0 0.0
      %1589 = vmatprep.subr.mxu0 0.0
      %1590 = vmatpush1.msra.mxu0 0.0
      %1591 = vmatprep.subr.mxu0 0.0
      %1592 = vmatpush1.msra.mxu0 0.0
      %1593 = vmatprep.subr.mxu0 0.0
      %1594 = vmatpush1.msra.mxu0 0.0
      %1595 = vmatprep.subr.mxu0 0.0
      %1596 = vmatpush1.msra.mxu0 0.0
      %1597 = vmatprep.subr.mxu0 0.0
      %1598 = vmatpush1.msra.mxu0 0.0
      %1599 = vmatprep.subr.mxu0 0.0
      %1600 = vmatpush1.msra.mxu0 0.0
      %1601 = vmatprep.mubr.f32.mxu0 0.0
      %1602 = vmatmul.mubr.f32.gmra.mrb[0].mxu0 %v1535
      %v1603 = vpop.f32.mrb[0].mxu0
      %v1604 = vadd.f32 0.0, %v1603
      %v1605 = vpop.f32.mrb[0].mxu0
      %v1606 = vadd.f32 0.0, %v1605
      %1607 = vdwg.mxu0
      %v1609 = vsel %vm1533, %v1515, 0
      %1611 = vmatprep.subr.mxu0 %v1507
      %1612 = vmatpush1.msra.mxu0 %v1506
      %1613 = vmatprep.subr.mxu0 %v1509
      %1614 = vmatpush1.msra.mxu0 %v1508
      %1615 = vmatprep.subr.mxu0 0.0
      %1616 = vmatpush1.msra.mxu0 0.0
      %1617 = vmatprep.subr.mxu0 0.0
      %1618 = vmatpush1.msra.mxu0 0.0
      %1619 = vmatprep.subr.mxu0 0.0
      %1620 = vmatpush1.msra.mxu0 0.0
      %1621 = vmatprep.subr.mxu0 0.0
      %1622 = vmatpush1.msra.mxu0 0.0
      %1623 = vmatprep.subr.mxu0 0.0
      %1624 = vmatpush1.msra.mxu0 0.0
      %1625 = vmatprep.subr.mxu0 0.0
      %1626 = vmatpush1.msra.mxu0 0.0
      %1627 = vmatprep.subr.mxu0 0.0
      %1628 = vmatpush1.msra.mxu0 0.0
      %1629 = vmatprep.subr.mxu0 0.0
      %1630 = vmatpush1.msra.mxu0 0.0
      %1631 = vmatprep.subr.mxu0 0.0
      %1632 = vmatpush1.msra.mxu0 0.0
      %1633 = vmatprep.subr.mxu0 0.0
      %1634 = vmatpush1.msra.mxu0 0.0
      %1635 = vmatprep.subr.mxu0 0.0
      %1636 = vmatpush1.msra.mxu0 0.0
      %1637 = vmatprep.subr.mxu0 0.0
      %1638 = vmatpush1.msra.mxu0 0.0
      %1639 = vmatprep.subr.mxu0 0.0
      %1640 = vmatpush1.msra.mxu0 0.0
      %1641 = vmatprep.subr.mxu0 0.0
      %1642 = vmatpush1.msra.mxu0 0.0
      %1643 = vmatprep.subr.mxu0 0.0
      %1644 = vmatpush1.msra.mxu0 0.0
      %1645 = vmatprep.subr.mxu0 0.0
      %1646 = vmatpush1.msra.mxu0 0.0
      %1647 = vmatprep.subr.mxu0 0.0
      %1648 = vmatpush1.msra.mxu0 0.0
      %1649 = vmatprep.subr.mxu0 0.0
      %1650 = vmatpush1.msra.mxu0 0.0
      %1651 = vmatprep.subr.mxu0 0.0
      %1652 = vmatpush1.msra.mxu0 0.0
      %1653 = vmatprep.subr.mxu0 0.0
      %1654 = vmatpush1.msra.mxu0 0.0
      %1655 = vmatprep.subr.mxu0 0.0
      %1656 = vmatpush1.msra.mxu0 0.0
      %1657 = vmatprep.subr.mxu0 0.0
      %1658 = vmatpush1.msra.mxu0 0.0
      %1659 = vmatprep.subr.mxu0 0.0
      %1660 = vmatpush1.msra.mxu0 0.0
      %1661 = vmatprep.subr.mxu0 0.0
      %1662 = vmatpush1.msra.mxu0 0.0
      %1663 = vmatprep.subr.mxu0 0.0
      %1664 = vmatpush1.msra.mxu0 0.0
      %1665 = vmatprep.subr.mxu0 0.0
      %1666 = vmatpush1.msra.mxu0 0.0
      %1667 = vmatprep.subr.mxu0 0.0
      %1668 = vmatpush1.msra.mxu0 0.0
      %1669 = vmatprep.subr.mxu0 0.0
      %1670 = vmatpush1.msra.mxu0 0.0
      %1671 = vmatprep.subr.mxu0 0.0
      %1672 = vmatpush1.msra.mxu0 0.0
      %1673 = vmatprep.subr.mxu0 0.0
      %1674 = vmatpush1.msra.mxu0 0.0
      %1675 = vmatprep.mubr.f32.mxu0 0.0
      %1676 = vmatmul.mubr.f32.gmra.mrb[0].mxu0 %v1609
      %v1677 = vpop.f32.mrb[0].mxu0
      %v1678 = vadd.f32 %v1604, %v1677
      %v1679 = vpop.f32.mrb[0].mxu0
      %v1680 = vadd.f32 %v1606, %v1679
      %1681 = vdwg.mxu0
      %1682 = vrot.lane.b32.xlu0 %v1506, 16
      %v1683 = vpop.permute.xlu0 %1682
      %1684 = vrot.lane.b32.xlu0 %v1508, 16
      %v1685 = vpop.permute.xlu0 %1684
      %1686 = vrot.lane.b32.xlu0 %v1507, 16
      %v1687 = vpop.permute.xlu0 %1686
      %1688 = vrot.lane.b32.xlu0 %v1509, 16
      %v1689 = vpop.permute.xlu0 %1688
      %v1690 = vsel %vm682, %v1683, %v1687
      %v1691 = vsel %vm682, %v1685, %v1689
      %v1692 = vsel %vm682, %v1687, %v1683
      %v1693 = vsel %vm682, %v1689, %v1685
      %v1694 = vmul.f32 %v1692, %v689
      %v1695 = vmul.f32 %v1690, %v693
      %v1696 = vmul.f32 %v1693, %v689
      %v1697 = vmul.f32 %v1691, %v693
      %s1698 = scalar_lea.vmem %s4, 8
      %v1699 = vld [vmem:[%s1698] sm:$0xff]
      %v1701 = vsel %vm1533, %v1699, 0
      %1703 = vmatprep.subr.mxu0 %v1695
      %1704 = vmatpush1.msra.mxu0 %v1694
      %1705 = vmatprep.subr.mxu0 %v1697
      %1706 = vmatpush1.msra.mxu0 %v1696
      %1707 = vmatprep.subr.mxu0 0.0
      %1708 = vmatpush1.msra.mxu0 0.0
      %1709 = vmatprep.subr.mxu0 0.0
      %1710 = vmatpush1.msra.mxu0 0.0
      %1711 = vmatprep.subr.mxu0 0.0
      %1712 = vmatpush1.msra.mxu0 0.0
      %1713 = vmatprep.subr.mxu0 0.0
      %1714 = vmatpush1.msra.mxu0 0.0
      %1715 = vmatprep.subr.mxu0 0.0
      %1716 = vmatpush1.msra.mxu0 0.0
      %1717 = vmatprep.subr.mxu0 0.0
      %1718 = vmatpush1.msra.mxu0 0.0
      %1719 = vmatprep.subr.mxu0 0.0
      %1720 = vmatpush1.msra.mxu0 0.0
      %1721 = vmatprep.subr.mxu0 0.0
      %1722 = vmatpush1.msra.mxu0 0.0
      %1723 = vmatprep.subr.mxu0 0.0
      %1724 = vmatpush1.msra.mxu0 0.0
      %1725 = vmatprep.subr.mxu0 0.0
      %1726 = vmatpush1.msra.mxu0 0.0
      %1727 = vmatprep.subr.mxu0 0.0
      %1728 = vmatpush1.msra.mxu0 0.0
      %1729 = vmatprep.subr.mxu0 0.0
      %1730 = vmatpush1.msra.mxu0 0.0
      %1731 = vmatprep.subr.mxu0 0.0
      %1732 = vmatpush1.msra.mxu0 0.0
      %1733 = vmatprep.subr.mxu0 0.0
      %1734 = vmatpush1.msra.mxu0 0.0
      %1735 = vmatprep.subr.mxu0 0.0
      %1736 = vmatpush1.msra.mxu0 0.0
      %1737 = vmatprep.subr.mxu0 0.0
      %1738 = vmatpush1.msra.mxu0 0.0
      %1739 = vmatprep.subr.mxu0 0.0
      %1740 = vmatpush1.msra.mxu0 0.0
      %1741 = vmatprep.subr.mxu0 0.0
      %1742 = vmatpush1.msra.mxu0 0.0
      %1743 = vmatprep.subr.mxu0 0.0
      %1744 = vmatpush1.msra.mxu0 0.0
      %1745 = vmatprep.subr.mxu0 0.0
      %1746 = vmatpush1.msra.mxu0 0.0
      %1747 = vmatprep.subr.mxu0 0.0
      %1748 = vmatpush1.msra.mxu0 0.0
      %1749 = vmatprep.subr.mxu0 0.0
      %1750 = vmatpush1.msra.mxu0 0.0
      %1751 = vmatprep.subr.mxu0 0.0
      %1752 = vmatpush1.msra.mxu0 0.0
      %1753 = vmatprep.subr.mxu0 0.0
      %1754 = vmatpush1.msra.mxu0 0.0
      %1755 = vmatprep.subr.mxu0 0.0
      %1756 = vmatpush1.msra.mxu0 0.0
      %1757 = vmatprep.subr.mxu0 0.0
      %1758 = vmatpush1.msra.mxu0 0.0
      %1759 = vmatprep.subr.mxu0 0.0
      %1760 = vmatpush1.msra.mxu0 0.0
      %1761 = vmatprep.subr.mxu0 0.0
      %1762 = vmatpush1.msra.mxu0 0.0
      %1763 = vmatprep.subr.mxu0 0.0
      %1764 = vmatpush1.msra.mxu0 0.0
      %1765 = vmatprep.subr.mxu0 0.0
      %1766 = vmatpush1.msra.mxu0 0.0
      %1767 = vmatprep.mubr.f32.mxu0 0.0
      %1768 = vmatmul.mubr.f32.gmra.mrb[0].mxu0 %v1701
      %v1769 = vpop.f32.mrb[0].mxu0
      %v1770 = vadd.f32 0.0, %v1769
      %v1771 = vpop.f32.mrb[0].mxu0
      %v1772 = vadd.f32 0.0, %v1771
      %1773 = vdwg.mxu0
      %v1774 = vadd.f32 %v1678, %v1770
      %v1775 = vadd.f32 %v1680, %v1772
      %1776 = vrot.lane.b32.xlu0 %v1506, 15
      %v1777 = vpop.permute.xlu0 %1776
      %1778 = vrot.lane.b32.xlu0 %v1508, 15
      %v1779 = vpop.permute.xlu0 %1778
      %1780 = vrot.lane.b32.xlu0 %v1507, 15
      %v1781 = vpop.permute.xlu0 %1780
      %1782 = vrot.lane.b32.xlu0 %v1509, 15
      %v1783 = vpop.permute.xlu0 %1782
      %v1784 = vsel %vm798, %v1777, %v1781
      %v1785 = vsel %vm798, %v1779, %v1783
      %v1786 = vsel %vm798, %v1781, %v1777
      %v1787 = vsel %vm798, %v1783, %v1779
      %v1788 = vmul.f32 %v1786, %v805
      %v1789 = vmul.f32 %v1784, %v809
      %v1790 = vmul.f32 %v1787, %v805
      %v1791 = vmul.f32 %v1785, %v809
      %s1792 = scalar_lea.vmem %s4, 16
      %v1793 = vld [vmem:[%s1792] sm:$0xff]
      %v1795 = vsel %vm1533, %v1793, 0
      %1797 = vmatprep.subr.mxu0 %v1789
      %1798 = vmatpush1.msra.mxu0 %v1788
      %1799 = vmatprep.subr.mxu0 %v1791
      %1800 = vmatpush1.msra.mxu0 %v1790
      %1801 = vmatprep.subr.mxu0 0.0
      %1802 = vmatpush1.msra.mxu0 0.0
      %1803 = vmatprep.subr.mxu0 0.0
      %1804 = vmatpush1.msra.mxu0 0.0
      %1805 = vmatprep.subr.mxu0 0.0
      %1806 = vmatpush1.msra.mxu0 0.0
      %1807 = vmatprep.subr.mxu0 0.0
      %1808 = vmatpush1.msra.mxu0 0.0
      %1809 = vmatprep.subr.mxu0 0.0
      %1810 = vmatpush1.msra.mxu0 0.0
      %1811 = vmatprep.subr.mxu0 0.0
      %1812 = vmatpush1.msra.mxu0 0.0
      %1813 = vmatprep.subr.mxu0 0.0
      %1814 = vmatpush1.msra.mxu0 0.0
      %1815 = vmatprep.subr.mxu0 0.0
      %1816 = vmatpush1.msra.mxu0 0.0
      %1817 = vmatprep.subr.mxu0 0.0
      %1818 = vmatpush1.msra.mxu0 0.0
      %1819 = vmatprep.subr.mxu0 0.0
      %1820 = vmatpush1.msra.mxu0 0.0
      %1821 = vmatprep.subr.mxu0 0.0
      %1822 = vmatpush1.msra.mxu0 0.0
      %1823 = vmatprep.subr.mxu0 0.0
      %1824 = vmatpush1.msra.mxu0 0.0
      %1825 = vmatprep.subr.mxu0 0.0
      %1826 = vmatpush1.msra.mxu0 0.0
      %1827 = vmatprep.subr.mxu0 0.0
      %1828 = vmatpush1.msra.mxu0 0.0
      %1829 = vmatprep.subr.mxu0 0.0
      %1830 = vmatpush1.msra.mxu0 0.0
      %1831 = vmatprep.subr.mxu0 0.0
      %1832 = vmatpush1.msra.mxu0 0.0
      %1833 = vmatprep.subr.mxu0 0.0
      %1834 = vmatpush1.msra.mxu0 0.0
      %1835 = vmatprep.subr.mxu0 0.0
      %1836 = vmatpush1.msra.mxu0 0.0
      %1837 = vmatprep.subr.mxu0 0.0
      %1838 = vmatpush1.msra.mxu0 0.0
      %1839 = vmatprep.subr.mxu0 0.0
      %1840 = vmatpush1.msra.mxu0 0.0
      %1841 = vmatprep.subr.mxu0 0.0
      %1842 = vmatpush1.msra.mxu0 0.0
      %1843 = vmatprep.subr.mxu0 0.0
      %1844 = vmatpush1.msra.mxu0 0.0
      %1845 = vmatprep.subr.mxu0 0.0
      %1846 = vmatpush1.msra.mxu0 0.0
      %1847 = vmatprep.subr.mxu0 0.0
      %1848 = vmatpush1.msra.mxu0 0.0
      %1849 = vmatprep.subr.mxu0 0.0
      %1850 = vmatpush1.msra.mxu0 0.0
      %1851 = vmatprep.subr.mxu0 0.0
      %1852 = vmatpush1.msra.mxu0 0.0
      %1853 = vmatprep.subr.mxu0 0.0
      %1854 = vmatpush1.msra.mxu0 0.0
      %1855 = vmatprep.subr.mxu0 0.0
      %1856 = vmatpush1.msra.mxu0 0.0
      %1857 = vmatprep.subr.mxu0 0.0
      %1858 = vmatpush1.msra.mxu0 0.0
      %1859 = vmatprep.subr.mxu0 0.0
      %1860 = vmatpush1.msra.mxu0 0.0
      %1861 = vmatprep.mubr.f32.mxu0 0.0
      %1862 = vmatmul.mubr.f32.gmra.mrb[0].mxu0 %v1795
      %v1863 = vpop.f32.mrb[0].mxu0
      %v1864 = vadd.f32 0.0, %v1863
      %v1865 = vpop.f32.mrb[0].mxu0
      %v1866 = vadd.f32 0.0, %v1865
      %1867 = vdwg.mxu0
      %v1868 = vadd.f32 %v1774, %v1864
      %v1869 = vadd.f32 %v1775, %v1866
      %1870 = vrot.lane.b32.xlu0 %v1506, 1
      %v1871 = vpop.permute.xlu0 %1870
      %1872 = vrot.lane.b32.xlu0 %v1508, 1
      %v1873 = vpop.permute.xlu0 %1872
      %1874 = vrot.lane.b32.xlu0 %v1507, 1
      %v1875 = vpop.permute.xlu0 %1874
      %1876 = vrot.lane.b32.xlu0 %v1509, 1
      %v1877 = vpop.permute.xlu0 %1876
      %v1878 = vsel %vm914, %v1871, %v1875
      %v1879 = vsel %vm914, %v1873, %v1877
      %v1880 = vsel %vm914, %v1875, %v1871
      %v1881 = vsel %vm914, %v1877, %v1873
      %v1882 = vmul.f32 %v1880, %v921
      %v1883 = vmul.f32 %v1878, %v925
      %v1884 = vmul.f32 %v1881, %v921
      %v1885 = vmul.f32 %v1879, %v925
      %s1886 = scalar_lea.vmem %s4, 24
      %v1887 = vld [vmem:[%s1886] sm:$0xff]
      %v1889 = vsel %vm1533, %v1887, 0
      %1891 = vmatprep.subr.mxu0 %v1883
      %1892 = vmatpush1.msra.mxu0 %v1882
      %1893 = vmatprep.subr.mxu0 %v1885
      %1894 = vmatpush1.msra.mxu0 %v1884
      %1895 = vmatprep.subr.mxu0 0.0
      %1896 = vmatpush1.msra.mxu0 0.0
      %1897 = vmatprep.subr.mxu0 0.0
      %1898 = vmatpush1.msra.mxu0 0.0
      %1899 = vmatprep.subr.mxu0 0.0
      %1900 = vmatpush1.msra.mxu0 0.0
      %1901 = vmatprep.subr.mxu0 0.0
      %1902 = vmatpush1.msra.mxu0 0.0
      %1903 = vmatprep.subr.mxu0 0.0
      %1904 = vmatpush1.msra.mxu0 0.0
      %1905 = vmatprep.subr.mxu0 0.0
      %1906 = vmatpush1.msra.mxu0 0.0
      %1907 = vmatprep.subr.mxu0 0.0
      %1908 = vmatpush1.msra.mxu0 0.0
      %1909 = vmatprep.subr.mxu0 0.0
      %1910 = vmatpush1.msra.mxu0 0.0
      %1911 = vmatprep.subr.mxu0 0.0
      %1912 = vmatpush1.msra.mxu0 0.0
      %1913 = vmatprep.subr.mxu0 0.0
      %1914 = vmatpush1.msra.mxu0 0.0
      %1915 = vmatprep.subr.mxu0 0.0
      %1916 = vmatpush1.msra.mxu0 0.0
      %1917 = vmatprep.subr.mxu0 0.0
      %1918 = vmatpush1.msra.mxu0 0.0
      %1919 = vmatprep.subr.mxu0 0.0
      %1920 = vmatpush1.msra.mxu0 0.0
      %1921 = vmatprep.subr.mxu0 0.0
      %1922 = vmatpush1.msra.mxu0 0.0
      %1923 = vmatprep.subr.mxu0 0.0
      %1924 = vmatpush1.msra.mxu0 0.0
      %1925 = vmatprep.subr.mxu0 0.0
      %1926 = vmatpush1.msra.mxu0 0.0
      %1927 = vmatprep.subr.mxu0 0.0
      %1928 = vmatpush1.msra.mxu0 0.0
      %1929 = vmatprep.subr.mxu0 0.0
      %1930 = vmatpush1.msra.mxu0 0.0
      %1931 = vmatprep.subr.mxu0 0.0
      %1932 = vmatpush1.msra.mxu0 0.0
      %1933 = vmatprep.subr.mxu0 0.0
      %1934 = vmatpush1.msra.mxu0 0.0
      %1935 = vmatprep.subr.mxu0 0.0
      %1936 = vmatpush1.msra.mxu0 0.0
      %1937 = vmatprep.subr.mxu0 0.0
      %1938 = vmatpush1.msra.mxu0 0.0
      %1939 = vmatprep.subr.mxu0 0.0
      %1940 = vmatpush1.msra.mxu0 0.0
      %1941 = vmatprep.subr.mxu0 0.0
      %1942 = vmatpush1.msra.mxu0 0.0
      %1943 = vmatprep.subr.mxu0 0.0
      %1944 = vmatpush1.msra.mxu0 0.0
      %1945 = vmatprep.subr.mxu0 0.0
      %1946 = vmatpush1.msra.mxu0 0.0
      %1947 = vmatprep.subr.mxu0 0.0
      %1948 = vmatpush1.msra.mxu0 0.0
      %1949 = vmatprep.subr.mxu0 0.0
      %1950 = vmatpush1.msra.mxu0 0.0
      %1951 = vmatprep.subr.mxu0 0.0
      %1952 = vmatpush1.msra.mxu0 0.0
      %1953 = vmatprep.subr.mxu0 0.0
      %1954 = vmatpush1.msra.mxu0 0.0
      %1955 = vmatprep.mubr.f32.mxu0 0.0
      %1956 = vmatmul.mubr.f32.gmra.mrb[0].mxu0 %v1889
      %v1957 = vpop.f32.mrb[0].mxu0
      %v1958 = vadd.f32 0.0, %v1957
      %v1959 = vpop.f32.mrb[0].mxu0
      %v1960 = vadd.f32 0.0, %v1959
      %1961 = vdwg.mxu0
      %v1962 = vadd.f32 %v1868, %v1958
      %v1963 = vadd.f32 %v1869, %v1960
      %1964 = vrot.lane.b32.xlu0 %v1506, 127
      %v1965 = vpop.permute.xlu0 %1964
      %1966 = vrot.lane.b32.xlu0 %v1508, 127
      %v1967 = vpop.permute.xlu0 %1966
      %1968 = vrot.lane.b32.xlu0 %v1507, 127
      %v1969 = vpop.permute.xlu0 %1968
      %1970 = vrot.lane.b32.xlu0 %v1509, 127
      %v1971 = vpop.permute.xlu0 %1970
      %v1972 = vsel %vm1030, %v1965, %v1969
      %v1973 = vsel %vm1030, %v1967, %v1971
      %v1974 = vsel %vm1030, %v1969, %v1965
      %v1975 = vsel %vm1030, %v1971, %v1967
      %v1976 = vmul.f32 %v1972, %v1037
      %v1977 = vmul.f32 %v1974, %v1041
      %v1978 = vmul.f32 %v1973, %v1037
      %v1979 = vmul.f32 %v1975, %v1041
      %s1980 = scalar_lea.vmem %s4, 40
      %v1981 = vld [vmem:[%s1980] sm:$0xff]
      %v1983 = vsel %vm1533, %v1981, 0
      %1985 = vmatprep.subr.mxu0 %v1977
      %1986 = vmatpush1.msra.mxu0 %v1976
      %1987 = vmatprep.subr.mxu0 %v1979
      %1988 = vmatpush1.msra.mxu0 %v1978
      %1989 = vmatprep.subr.mxu0 0.0
      %1990 = vmatpush1.msra.mxu0 0.0
      %1991 = vmatprep.subr.mxu0 0.0
      %1992 = vmatpush1.msra.mxu0 0.0
      %1993 = vmatprep.subr.mxu0 0.0
      %1994 = vmatpush1.msra.mxu0 0.0
      %1995 = vmatprep.subr.mxu0 0.0
      %1996 = vmatpush1.msra.mxu0 0.0
      %1997 = vmatprep.subr.mxu0 0.0
      %1998 = vmatpush1.msra.mxu0 0.0
      %1999 = vmatprep.subr.mxu0 0.0
      %2000 = vmatpush1.msra.mxu0 0.0
      %2001 = vmatprep.subr.mxu0 0.0
      %2002 = vmatpush1.msra.mxu0 0.0
      %2003 = vmatprep.subr.mxu0 0.0
      %2004 = vmatpush1.msra.mxu0 0.0
      %2005 = vmatprep.subr.mxu0 0.0
      %2006 = vmatpush1.msra.mxu0 0.0
      %2007 = vmatprep.subr.mxu0 0.0
      %2008 = vmatpush1.msra.mxu0 0.0
      %2009 = vmatprep.subr.mxu0 0.0
      %2010 = vmatpush1.msra.mxu0 0.0
      %2011 = vmatprep.subr.mxu0 0.0
      %2012 = vmatpush1.msra.mxu0 0.0
      %2013 = vmatprep.subr.mxu0 0.0
      %2014 = vmatpush1.msra.mxu0 0.0
      %2015 = vmatprep.subr.mxu0 0.0
      %2016 = vmatpush1.msra.mxu0 0.0
      %2017 = vmatprep.subr.mxu0 0.0
      %2018 = vmatpush1.msra.mxu0 0.0
      %2019 = vmatprep.subr.mxu0 0.0
      %2020 = vmatpush1.msra.mxu0 0.0
      %2021 = vmatprep.subr.mxu0 0.0
      %2022 = vmatpush1.msra.mxu0 0.0
      %2023 = vmatprep.subr.mxu0 0.0
      %2024 = vmatpush1.msra.mxu0 0.0
      %2025 = vmatprep.subr.mxu0 0.0
      %2026 = vmatpush1.msra.mxu0 0.0
      %2027 = vmatprep.subr.mxu0 0.0
      %2028 = vmatpush1.msra.mxu0 0.0
      %2029 = vmatprep.subr.mxu0 0.0
      %2030 = vmatpush1.msra.mxu0 0.0
      %2031 = vmatprep.subr.mxu0 0.0
      %2032 = vmatpush1.msra.mxu0 0.0
      %2033 = vmatprep.subr.mxu0 0.0
      %2034 = vmatpush1.msra.mxu0 0.0
      %2035 = vmatprep.subr.mxu0 0.0
      %2036 = vmatpush1.msra.mxu0 0.0
      %2037 = vmatprep.subr.mxu0 0.0
      %2038 = vmatpush1.msra.mxu0 0.0
      %2039 = vmatprep.subr.mxu0 0.0
      %2040 = vmatpush1.msra.mxu0 0.0
      %2041 = vmatprep.subr.mxu0 0.0
      %2042 = vmatpush1.msra.mxu0 0.0
      %2043 = vmatprep.subr.mxu0 0.0
      %2044 = vmatpush1.msra.mxu0 0.0
      %2045 = vmatprep.subr.mxu0 0.0
      %2046 = vmatpush1.msra.mxu0 0.0
      %2047 = vmatprep.subr.mxu0 0.0
      %2048 = vmatpush1.msra.mxu0 0.0
      %2049 = vmatprep.mubr.f32.mxu0 0.0
      %2050 = vmatmul.mubr.f32.gmra.mrb[0].mxu0 %v1983
      %v2051 = vpop.f32.mrb[0].mxu0
      %v2052 = vadd.f32 0.0, %v2051
      %v2053 = vpop.f32.mrb[0].mxu0
      %v2054 = vadd.f32 0.0, %v2053
      %2055 = vdwg.mxu0
      %v2056 = vadd.f32 %v1962, %v2052
      %v2057 = vadd.f32 %v1963, %v2054
      %2058 = vrot.lane.b32.xlu0 %v1506, 113
      %v2059 = vpop.permute.xlu0 %2058
      %2060 = vrot.lane.b32.xlu0 %v1508, 113
      %v2061 = vpop.permute.xlu0 %2060
      %2062 = vrot.lane.b32.xlu0 %v1507, 113
      %v2063 = vpop.permute.xlu0 %2062
      %2064 = vrot.lane.b32.xlu0 %v1509, 113
      %v2065 = vpop.permute.xlu0 %2064
      %v2066 = vsel %vm1146, %v2059, %v2063
      %v2067 = vsel %vm1146, %v2061, %v2065
      %v2068 = vsel %vm1146, %v2063, %v2059
      %v2069 = vsel %vm1146, %v2065, %v2061
      %v2070 = vmul.f32 %v2066, %v1153
      %v2071 = vmul.f32 %v2068, %v1157
      %v2072 = vmul.f32 %v2067, %v1153
      %v2073 = vmul.f32 %v2069, %v1157
      %s2074 = scalar_lea.vmem %s4, 48
      %v2075 = vld [vmem:[%s2074] sm:$0xff]
      %v2077 = vsel %vm1533, %v2075, 0
      %2079 = vmatprep.subr.mxu0 %v2071
      %2080 = vmatpush1.msra.mxu0 %v2070
      %2081 = vmatprep.subr.mxu0 %v2073
      %2082 = vmatpush1.msra.mxu0 %v2072
      %2083 = vmatprep.subr.mxu0 0.0
      %2084 = vmatpush1.msra.mxu0 0.0
      %2085 = vmatprep.subr.mxu0 0.0
      %2086 = vmatpush1.msra.mxu0 0.0
      %2087 = vmatprep.subr.mxu0 0.0
      %2088 = vmatpush1.msra.mxu0 0.0
      %2089 = vmatprep.subr.mxu0 0.0
      %2090 = vmatpush1.msra.mxu0 0.0
      %2091 = vmatprep.subr.mxu0 0.0
      %2092 = vmatpush1.msra.mxu0 0.0
      %2093 = vmatprep.subr.mxu0 0.0
      %2094 = vmatpush1.msra.mxu0 0.0
      %2095 = vmatprep.subr.mxu0 0.0
      %2096 = vmatpush1.msra.mxu0 0.0
      %2097 = vmatprep.subr.mxu0 0.0
      %2098 = vmatpush1.msra.mxu0 0.0
      %2099 = vmatprep.subr.mxu0 0.0
      %2100 = vmatpush1.msra.mxu0 0.0
      %2101 = vmatprep.subr.mxu0 0.0
      %2102 = vmatpush1.msra.mxu0 0.0
      %2103 = vmatprep.subr.mxu0 0.0
      %2104 = vmatpush1.msra.mxu0 0.0
      %2105 = vmatprep.subr.mxu0 0.0
      %2106 = vmatpush1.msra.mxu0 0.0
      %2107 = vmatprep.subr.mxu0 0.0
      %2108 = vmatpush1.msra.mxu0 0.0
      %2109 = vmatprep.subr.mxu0 0.0
      %2110 = vmatpush1.msra.mxu0 0.0
      %2111 = vmatprep.subr.mxu0 0.0
      %2112 = vmatpush1.msra.mxu0 0.0
      %2113 = vmatprep.subr.mxu0 0.0
      %2114 = vmatpush1.msra.mxu0 0.0
      %2115 = vmatprep.subr.mxu0 0.0
      %2116 = vmatpush1.msra.mxu0 0.0
      %2117 = vmatprep.subr.mxu0 0.0
      %2118 = vmatpush1.msra.mxu0 0.0
      %2119 = vmatprep.subr.mxu0 0.0
      %2120 = vmatpush1.msra.mxu0 0.0
      %2121 = vmatprep.subr.mxu0 0.0
      %2122 = vmatpush1.msra.mxu0 0.0
      %2123 = vmatprep.subr.mxu0 0.0
      %2124 = vmatpush1.msra.mxu0 0.0
      %2125 = vmatprep.subr.mxu0 0.0
      %2126 = vmatpush1.msra.mxu0 0.0
      %2127 = vmatprep.subr.mxu0 0.0
      %2128 = vmatpush1.msra.mxu0 0.0
      %2129 = vmatprep.subr.mxu0 0.0
      %2130 = vmatpush1.msra.mxu0 0.0
      %2131 = vmatprep.subr.mxu0 0.0
      %2132 = vmatpush1.msra.mxu0 0.0
      %2133 = vmatprep.subr.mxu0 0.0
      %2134 = vmatpush1.msra.mxu0 0.0
      %2135 = vmatprep.subr.mxu0 0.0
      %2136 = vmatpush1.msra.mxu0 0.0
      %2137 = vmatprep.subr.mxu0 0.0
      %2138 = vmatpush1.msra.mxu0 0.0
      %2139 = vmatprep.subr.mxu0 0.0
      %2140 = vmatpush1.msra.mxu0 0.0
      %2141 = vmatprep.subr.mxu0 0.0
      %2142 = vmatpush1.msra.mxu0 0.0
      %2143 = vmatprep.mubr.f32.mxu0 0.0
      %2144 = vmatmul.mubr.f32.gmra.mrb[0].mxu0 %v2077
      %v2145 = vpop.f32.mrb[0].mxu0
      %v2146 = vadd.f32 0.0, %v2145
      %v2147 = vpop.f32.mrb[0].mxu0
      %v2148 = vadd.f32 0.0, %v2147
      %2149 = vdwg.mxu0
      %v2150 = vadd.f32 %v2056, %v2146
      %v2151 = vadd.f32 %v2057, %v2148
      %2152 = vrot.lane.b32.xlu0 %v1506, 112
      %v2153 = vpop.permute.xlu0 %2152
      %2154 = vrot.lane.b32.xlu0 %v1508, 112
      %v2155 = vpop.permute.xlu0 %2154
      %2156 = vrot.lane.b32.xlu0 %v1507, 112
      %v2157 = vpop.permute.xlu0 %2156
      %2158 = vrot.lane.b32.xlu0 %v1509, 112
      %v2159 = vpop.permute.xlu0 %2158
      %v2160 = vsel %vm1262, %v2153, %v2157
      %v2161 = vsel %vm1262, %v2155, %v2159
      %v2162 = vsel %vm1262, %v2157, %v2153
      %v2163 = vsel %vm1262, %v2159, %v2155
      %v2164 = vmul.f32 %v2160, %v1269
      %v2165 = vmul.f32 %v2162, %v1273
      %v2166 = vmul.f32 %v2161, %v1269
      %v2167 = vmul.f32 %v2163, %v1273
      %s2168 = scalar_lea.vmem %s4, 56
      %v2169 = vld [vmem:[%s2168] sm:$0xff]
      %v2171 = vsel %vm1533, %v2169, 0
      %2173 = vmatprep.subr.mxu0 %v2165
      %2174 = vmatpush1.msra.mxu0 %v2164
      %2175 = vmatprep.subr.mxu0 %v2167
      %2176 = vmatpush1.msra.mxu0 %v2166
      %2177 = vmatprep.subr.mxu0 0.0
      %2178 = vmatpush1.msra.mxu0 0.0
      %2179 = vmatprep.subr.mxu0 0.0
      %2180 = vmatpush1.msra.mxu0 0.0
      %2181 = vmatprep.subr.mxu0 0.0
      %2182 = vmatpush1.msra.mxu0 0.0
      %2183 = vmatprep.subr.mxu0 0.0
      %2184 = vmatpush1.msra.mxu0 0.0
      %2185 = vmatprep.subr.mxu0 0.0
      %2186 = vmatpush1.msra.mxu0 0.0
      %2187 = vmatprep.subr.mxu0 0.0
      %2188 = vmatpush1.msra.mxu0 0.0
      %2189 = vmatprep.subr.mxu0 0.0
      %2190 = vmatpush1.msra.mxu0 0.0
      %2191 = vmatprep.subr.mxu0 0.0
      %2192 = vmatpush1.msra.mxu0 0.0
      %2193 = vmatprep.subr.mxu0 0.0
      %2194 = vmatpush1.msra.mxu0 0.0
      %2195 = vmatprep.subr.mxu0 0.0
      %2196 = vmatpush1.msra.mxu0 0.0
      %2197 = vmatprep.subr.mxu0 0.0
      %2198 = vmatpush1.msra.mxu0 0.0
      %2199 = vmatprep.subr.mxu0 0.0
      %2200 = vmatpush1.msra.mxu0 0.0
      %2201 = vmatprep.subr.mxu0 0.0
      %2202 = vmatpush1.msra.mxu0 0.0
      %2203 = vmatprep.subr.mxu0 0.0
      %2204 = vmatpush1.msra.mxu0 0.0
      %2205 = vmatprep.subr.mxu0 0.0
      %2206 = vmatpush1.msra.mxu0 0.0
      %2207 = vmatprep.subr.mxu0 0.0
      %2208 = vmatpush1.msra.mxu0 0.0
      %2209 = vmatprep.subr.mxu0 0.0
      %2210 = vmatpush1.msra.mxu0 0.0
      %2211 = vmatprep.subr.mxu0 0.0
      %2212 = vmatpush1.msra.mxu0 0.0
      %2213 = vmatprep.subr.mxu0 0.0
      %2214 = vmatpush1.msra.mxu0 0.0
      %2215 = vmatprep.subr.mxu0 0.0
      %2216 = vmatpush1.msra.mxu0 0.0
      %2217 = vmatprep.subr.mxu0 0.0
      %2218 = vmatpush1.msra.mxu0 0.0
      %2219 = vmatprep.subr.mxu0 0.0
      %2220 = vmatpush1.msra.mxu0 0.0
      %2221 = vmatprep.subr.mxu0 0.0
      %2222 = vmatpush1.msra.mxu0 0.0
      %2223 = vmatprep.subr.mxu0 0.0
      %2224 = vmatpush1.msra.mxu0 0.0
      %2225 = vmatprep.subr.mxu0 0.0
      %2226 = vmatpush1.msra.mxu0 0.0
      %2227 = vmatprep.subr.mxu0 0.0
      %2228 = vmatpush1.msra.mxu0 0.0
      %2229 = vmatprep.subr.mxu0 0.0
      %2230 = vmatpush1.msra.mxu0 0.0
      %2231 = vmatprep.subr.mxu0 0.0
      %2232 = vmatpush1.msra.mxu0 0.0
      %2233 = vmatprep.subr.mxu0 0.0
      %2234 = vmatpush1.msra.mxu0 0.0
      %2235 = vmatprep.subr.mxu0 0.0
      %2236 = vmatpush1.msra.mxu0 0.0
      %2237 = vmatprep.mubr.f32.mxu0 0.0
      %2238 = vmatmul.mubr.f32.gmra.mrb[0].mxu0 %v2171
      %v2239 = vpop.f32.mrb[0].mxu0
      %v2240 = vadd.f32 0.0, %v2239
      %v2241 = vpop.f32.mrb[0].mxu0
      %v2242 = vadd.f32 0.0, %v2241
      %2243 = vdwg.mxu0
      %v2244 = vadd.f32 %v2150, %v2240
      %v2245 = vadd.f32 %v2151, %v2242
      %2246 = vrot.lane.b32.xlu0 %v1506, 111
      %v2247 = vpop.permute.xlu0 %2246
      %2248 = vrot.lane.b32.xlu0 %v1508, 111
      %v2249 = vpop.permute.xlu0 %2248
      %2250 = vrot.lane.b32.xlu0 %v1507, 111
      %v2251 = vpop.permute.xlu0 %2250
      %2252 = vrot.lane.b32.xlu0 %v1509, 111
      %v2253 = vpop.permute.xlu0 %2252
      %v2254 = vsel %vm1378, %v2247, %v2251
      %v2255 = vsel %vm1378, %v2249, %v2253
      %v2256 = vsel %vm1378, %v2251, %v2247
      %v2257 = vsel %vm1378, %v2253, %v2249
      %v2258 = vmul.f32 %v2254, %v1385
      %v2259 = vmul.f32 %v2256, %v1389
      %v2260 = vmul.f32 %v2255, %v1385
      %v2261 = vmul.f32 %v2257, %v1389
      %s2262 = scalar_lea.vmem %s4, 64
      %v2263 = vld [vmem:[%s2262] sm:$0xff]
      %v2265 = vsel %vm1533, %v2263, 0
      %2267 = vmatprep.subr.mxu0 %v2259
      %2268 = vmatpush1.msra.mxu0 %v2258
      %2269 = vmatprep.subr.mxu0 %v2261
      %2270 = vmatpush1.msra.mxu0 %v2260
      %2271 = vmatprep.subr.mxu0 0.0
      %2272 = vmatpush1.msra.mxu0 0.0
      %2273 = vmatprep.subr.mxu0 0.0
      %2274 = vmatpush1.msra.mxu0 0.0
      %2275 = vmatprep.subr.mxu0 0.0
      %2276 = vmatpush1.msra.mxu0 0.0
      %2277 = vmatprep.subr.mxu0 0.0
      %2278 = vmatpush1.msra.mxu0 0.0
      %2279 = vmatprep.subr.mxu0 0.0
      %2280 = vmatpush1.msra.mxu0 0.0
      %2281 = vmatprep.subr.mxu0 0.0
      %2282 = vmatpush1.msra.mxu0 0.0
      %2283 = vmatprep.subr.mxu0 0.0
      %2284 = vmatpush1.msra.mxu0 0.0
      %2285 = vmatprep.subr.mxu0 0.0
      %2286 = vmatpush1.msra.mxu0 0.0
      %2287 = vmatprep.subr.mxu0 0.0
      %2288 = vmatpush1.msra.mxu0 0.0
      %2289 = vmatprep.subr.mxu0 0.0
      %2290 = vmatpush1.msra.mxu0 0.0
      %2291 = vmatprep.subr.mxu0 0.0
      %2292 = vmatpush1.msra.mxu0 0.0
      %2293 = vmatprep.subr.mxu0 0.0
      %2294 = vmatpush1.msra.mxu0 0.0
      %2295 = vmatprep.subr.mxu0 0.0
      %2296 = vmatpush1.msra.mxu0 0.0
      %2297 = vmatprep.subr.mxu0 0.0
      %2298 = vmatpush1.msra.mxu0 0.0
      %2299 = vmatprep.subr.mxu0 0.0
      %2300 = vmatpush1.msra.mxu0 0.0
      %2301 = vmatprep.subr.mxu0 0.0
      %2302 = vmatpush1.msra.mxu0 0.0
      %2303 = vmatprep.subr.mxu0 0.0
      %2304 = vmatpush1.msra.mxu0 0.0
      %2305 = vmatprep.subr.mxu0 0.0
      %2306 = vmatpush1.msra.mxu0 0.0
      %2307 = vmatprep.subr.mxu0 0.0
      %2308 = vmatpush1.msra.mxu0 0.0
      %2309 = vmatprep.subr.mxu0 0.0
      %2310 = vmatpush1.msra.mxu0 0.0
      %2311 = vmatprep.subr.mxu0 0.0
      %2312 = vmatpush1.msra.mxu0 0.0
      %2313 = vmatprep.subr.mxu0 0.0
      %2314 = vmatpush1.msra.mxu0 0.0
      %2315 = vmatprep.subr.mxu0 0.0
      %2316 = vmatpush1.msra.mxu0 0.0
      %2317 = vmatprep.subr.mxu0 0.0
      %2318 = vmatpush1.msra.mxu0 0.0
      %2319 = vmatprep.subr.mxu0 0.0
      %2320 = vmatpush1.msra.mxu0 0.0
      %2321 = vmatprep.subr.mxu0 0.0
      %2322 = vmatpush1.msra.mxu0 0.0
      %2323 = vmatprep.subr.mxu0 0.0
      %2324 = vmatpush1.msra.mxu0 0.0
      %2325 = vmatprep.subr.mxu0 0.0
      %2326 = vmatpush1.msra.mxu0 0.0
      %2327 = vmatprep.subr.mxu0 0.0
      %2328 = vmatpush1.msra.mxu0 0.0
      %2329 = vmatprep.subr.mxu0 0.0
      %2330 = vmatpush1.msra.mxu0 0.0
      %2331 = vmatprep.mubr.f32.mxu0 0.0
      %2332 = vmatmul.mubr.f32.gmra.mrb[0].mxu0 %v2265
      %v2333 = vpop.f32.mrb[0].mxu0
      %v2334 = vadd.f32 0.0, %v2333
      %v2335 = vpop.f32.mrb[0].mxu0
      %v2336 = vadd.f32 0.0, %v2335
      %2337 = vdwg.mxu0
      %v2338 = vadd.f32 %v2244, %v2334
      %v2339 = vadd.f32 %v2245, %v2336
      %v2340 = vld [vmem:[%s5] sm:$0xff]
      %2342 = vset.pattern.permute.xlu0 0
      %2343 = vperm.xlu0 %2342, %v2340
      %v2344 = vpop.permute.xlu0 %2343
      %v2346 = vadd.f32 %v2338, %v2344
      %v2347 = vadd.f32 %v2339, %v2344
      %v2348 = vmax.f32 %v2346, 0.0
      %v2349 = vmax.f32 %v2347, 0.0
      %s2350 = scalar_lea.vmem %s6, 32
      %v2351 = vld [vmem:[%s2350] sm:$0x3f]
      %2352 = vrot.lane.b32.xlu0 %v2348, 17
      %v2353 = vpop.permute.xlu0 %2352
      %2354 = vrot.lane.b32.xlu0 %v2349, 17
      %v2355 = vpop.permute.xlu0 %2354
      %v2356 = vsel %vm480, %v2353, %v2355
      %v2357 = vsel %vm480, %v2355, %v2353
      %v2358 = vmul.f32 %v2357, %v487
      %v2359 = vmul.f32 %v2356, %v491
      %v2360 = vld [vmem:[%s6] sm:$0x3f]
      %vm2361 = vcmask 64512
      %v2363 = vsel %vm2361, %v2360, 0
      %2365 = vmatprep.subr.mxu0 %v2359
      %2366 = vmatpush1.msra.mxu0 %v2358
      %2367 = vmatprep.subr.mxu0 0.0
      %2368 = vmatpush1.msra.mxu0 0.0
      %2369 = vmatprep.subr.mxu0 0.0
      %2370 = vmatpush1.msra.mxu0 0.0
      %2371 = vmatprep.subr.mxu0 0.0
      %2372 = vmatpush1.msra.mxu0 0.0
      %2373 = vmatprep.subr.mxu0 0.0
      %2374 = vmatpush1.msra.mxu0 0.0
      %2375 = vmatprep.subr.mxu0 0.0
      %2376 = vmatpush1.msra.mxu0 0.0
      %2377 = vmatprep.subr.mxu0 0.0
      %2378 = vmatpush1.msra.mxu0 0.0
      %2379 = vmatprep.subr.mxu0 0.0
      %2380 = vmatpush1.msra.mxu0 0.0
      %2381 = vmatprep.subr.mxu0 0.0
      %2382 = vmatpush1.msra.mxu0 0.0
      %2383 = vmatprep.subr.mxu0 0.0
      %2384 = vmatpush1.msra.mxu0 0.0
      %2385 = vmatprep.subr.mxu0 0.0
      %2386 = vmatpush1.msra.mxu0 0.0
      %2387 = vmatprep.subr.mxu0 0.0
      %2388 = vmatpush1.msra.mxu0 0.0
      %2389 = vmatprep.subr.mxu0 0.0
      %2390 = vmatpush1.msra.mxu0 0.0
      %2391 = vmatprep.subr.mxu0 0.0
      %2392 = vmatpush1.msra.mxu0 0.0
      %2393 = vmatprep.subr.mxu0 0.0
      %2394 = vmatpush1.msra.mxu0 0.0
      %2395 = vmatprep.subr.mxu0 0.0
      %2396 = vmatpush1.msra.mxu0 0.0
      %2397 = vmatprep.subr.mxu0 0.0
      %2398 = vmatpush1.msra.mxu0 0.0
      %2399 = vmatprep.subr.mxu0 0.0
      %2400 = vmatpush1.msra.mxu0 0.0
      %2401 = vmatprep.subr.mxu0 0.0
      %2402 = vmatpush1.msra.mxu0 0.0
      %2403 = vmatprep.subr.mxu0 0.0
      %2404 = vmatpush1.msra.mxu0 0.0
      %2405 = vmatprep.subr.mxu0 0.0
      %2406 = vmatpush1.msra.mxu0 0.0
      %2407 = vmatprep.subr.mxu0 0.0
      %2408 = vmatpush1.msra.mxu0 0.0
      %2409 = vmatprep.subr.mxu0 0.0
      %2410 = vmatpush1.msra.mxu0 0.0
      %2411 = vmatprep.subr.mxu0 0.0
      %2412 = vmatpush1.msra.mxu0 0.0
      %2413 = vmatprep.subr.mxu0 0.0
      %2414 = vmatpush1.msra.mxu0 0.0
      %2415 = vmatprep.subr.mxu0 0.0
      %2416 = vmatpush1.msra.mxu0 0.0
      %2417 = vmatprep.subr.mxu0 0.0
      %2418 = vmatpush1.msra.mxu0 0.0
      %2419 = vmatprep.subr.mxu0 0.0
      %2420 = vmatpush1.msra.mxu0 0.0
      %2421 = vmatprep.subr.mxu0 0.0
      %2422 = vmatpush1.msra.mxu0 0.0
      %2423 = vmatprep.subr.mxu0 0.0
      %2424 = vmatpush1.msra.mxu0 0.0
      %2425 = vmatprep.subr.mxu0 0.0
      %2426 = vmatpush1.msra.mxu0 0.0
      %2427 = vmatprep.subr.mxu0 0.0
      %2428 = vmatpush1.msra.mxu0 0.0
      %2429 = vmatprep.mubr.f32.mxu0 0.0
      %2430 = vmatmul.mubr.f32.gmra.mrb[0].mxu0 %v2363
      %v2431 = vpop.f32.mrb[0].mxu0
      %v2432 = vadd.f32 0.0, %v2431
      %v2433 = vpop.f32.mrb[0].mxu0
      %v2434 = vadd.f32 0.0, %v2433
      %2435 = vdwg.mxu0
      %v2437 = vsel %vm2361, %v2351, 0
      %2439 = vmatprep.subr.mxu0 %v2349
      %2440 = vmatpush1.msra.mxu0 %v2348
      %2441 = vmatprep.subr.mxu0 0.0
      %2442 = vmatpush1.msra.mxu0 0.0
      %2443 = vmatprep.subr.mxu0 0.0
      %2444 = vmatpush1.msra.mxu0 0.0
      %2445 = vmatprep.subr.mxu0 0.0
      %2446 = vmatpush1.msra.mxu0 0.0
      %2447 = vmatprep.subr.mxu0 0.0
      %2448 = vmatpush1.msra.mxu0 0.0
      %2449 = vmatprep.subr.mxu0 0.0
      %2450 = vmatpush1.msra.mxu0 0.0
      %2451 = vmatprep.subr.mxu0 0.0
      %2452 = vmatpush1.msra.mxu0 0.0
      %2453 = vmatprep.subr.mxu0 0.0
      %2454 = vmatpush1.msra.mxu0 0.0
      %2455 = vmatprep.subr.mxu0 0.0
      %2456 = vmatpush1.msra.mxu0 0.0
      %2457 = vmatprep.subr.mxu0 0.0
      %2458 = vmatpush1.msra.mxu0 0.0
      %2459 = vmatprep.subr.mxu0 0.0
      %2460 = vmatpush1.msra.mxu0 0.0
      %2461 = vmatprep.subr.mxu0 0.0
      %2462 = vmatpush1.msra.mxu0 0.0
      %2463 = vmatprep.subr.mxu0 0.0
      %2464 = vmatpush1.msra.mxu0 0.0
      %2465 = vmatprep.subr.mxu0 0.0
      %2466 = vmatpush1.msra.mxu0 0.0
      %2467 = vmatprep.subr.mxu0 0.0
      %2468 = vmatpush1.msra.mxu0 0.0
      %2469 = vmatprep.subr.mxu0 0.0
      %2470 = vmatpush1.msra.mxu0 0.0
      %2471 = vmatprep.subr.mxu0 0.0
      %2472 = vmatpush1.msra.mxu0 0.0
      %2473 = vmatprep.subr.mxu0 0.0
      %2474 = vmatpush1.msra.mxu0 0.0
      %2475 = vmatprep.subr.mxu0 0.0
      %2476 = vmatpush1.msra.mxu0 0.0
      %2477 = vmatprep.subr.mxu0 0.0
      %2478 = vmatpush1.msra.mxu0 0.0
      %2479 = vmatprep.subr.mxu0 0.0
      %2480 = vmatpush1.msra.mxu0 0.0
      %2481 = vmatprep.subr.mxu0 0.0
      %2482 = vmatpush1.msra.mxu0 0.0
      %2483 = vmatprep.subr.mxu0 0.0
      %2484 = vmatpush1.msra.mxu0 0.0
      %2485 = vmatprep.subr.mxu0 0.0
      %2486 = vmatpush1.msra.mxu0 0.0
      %2487 = vmatprep.subr.mxu0 0.0
      %2488 = vmatpush1.msra.mxu0 0.0
      %2489 = vmatprep.subr.mxu0 0.0
      %2490 = vmatpush1.msra.mxu0 0.0
      %2491 = vmatprep.subr.mxu0 0.0
      %2492 = vmatpush1.msra.mxu0 0.0
      %2493 = vmatprep.subr.mxu0 0.0
      %2494 = vmatpush1.msra.mxu0 0.0
      %2495 = vmatprep.subr.mxu0 0.0
      %2496 = vmatpush1.msra.mxu0 0.0
      %2497 = vmatprep.subr.mxu0 0.0
      %2498 = vmatpush1.msra.mxu0 0.0
      %2499 = vmatprep.subr.mxu0 0.0
      %2500 = vmatpush1.msra.mxu0 0.0
      %2501 = vmatprep.subr.mxu0 0.0
      %2502 = vmatpush1.msra.mxu0 0.0
      %2503 = vmatprep.mubr.f32.mxu0 0.0
      %2504 = vmatmul.mubr.f32.gmra.mrb[0].mxu0 %v2437
      %v2505 = vpop.f32.mrb[0].mxu0
      %v2506 = vadd.f32 %v2432, %v2505
      %v2507 = vpop.f32.mrb[0].mxu0
      %v2508 = vadd.f32 %v2434, %v2507
      %2509 = vdwg.mxu0
      %2510 = vrot.lane.b32.xlu0 %v2348, 16
      %v2511 = vpop.permute.xlu0 %2510
      %2512 = vrot.lane.b32.xlu0 %v2349, 16
      %v2513 = vpop.permute.xlu0 %2512
      %v2514 = vsel %vm682, %v2511, %v2513
      %v2515 = vsel %vm682, %v2513, %v2511
      %v2516 = vmul.f32 %v2515, %v689
      %v2517 = vmul.f32 %v2514, %v693
      %s2518 = scalar_lea.vmem %s6, 8
      %v2519 = vld [vmem:[%s2518] sm:$0x3f]
      %v2521 = vsel %vm2361, %v2519, 0
      %2523 = vmatprep.subr.mxu0 %v2517
      %2524 = vmatpush1.msra.mxu0 %v2516
      %2525 = vmatprep.subr.mxu0 0.0
      %2526 = vmatpush1.msra.mxu0 0.0
      %2527 = vmatprep.subr.mxu0 0.0
      %2528 = vmatpush1.msra.mxu0 0.0
      %2529 = vmatprep.subr.mxu0 0.0
      %2530 = vmatpush1.msra.mxu0 0.0
      %2531 = vmatprep.subr.mxu0 0.0
      %2532 = vmatpush1.msra.mxu0 0.0
      %2533 = vmatprep.subr.mxu0 0.0
      %2534 = vmatpush1.msra.mxu0 0.0
      %2535 = vmatprep.subr.mxu0 0.0
      %2536 = vmatpush1.msra.mxu0 0.0
      %2537 = vmatprep.subr.mxu0 0.0
      %2538 = vmatpush1.msra.mxu0 0.0
      %2539 = vmatprep.subr.mxu0 0.0
      %2540 = vmatpush1.msra.mxu0 0.0
      %2541 = vmatprep.subr.mxu0 0.0
      %2542 = vmatpush1.msra.mxu0 0.0
      %2543 = vmatprep.subr.mxu0 0.0
      %2544 = vmatpush1.msra.mxu0 0.0
      %2545 = vmatprep.subr.mxu0 0.0
      %2546 = vmatpush1.msra.mxu0 0.0
      %2547 = vmatprep.subr.mxu0 0.0
      %2548 = vmatpush1.msra.mxu0 0.0
      %2549 = vmatprep.subr.mxu0 0.0
      %2550 = vmatpush1.msra.mxu0 0.0
      %2551 = vmatprep.subr.mxu0 0.0
      %2552 = vmatpush1.msra.mxu0 0.0
      %2553 = vmatprep.subr.mxu0 0.0
      %2554 = vmatpush1.msra.mxu0 0.0
      %2555 = vmatprep.subr.mxu0 0.0
      %2556 = vmatpush1.msra.mxu0 0.0
      %2557 = vmatprep.subr.mxu0 0.0
      %2558 = vmatpush1.msra.mxu0 0.0
      %2559 = vmatprep.subr.mxu0 0.0
      %2560 = vmatpush1.msra.mxu0 0.0
      %2561 = vmatprep.subr.mxu0 0.0
      %2562 = vmatpush1.msra.mxu0 0.0
      %2563 = vmatprep.subr.mxu0 0.0
      %2564 = vmatpush1.msra.mxu0 0.0
      %2565 = vmatprep.subr.mxu0 0.0
      %2566 = vmatpush1.msra.mxu0 0.0
      %2567 = vmatprep.subr.mxu0 0.0
      %2568 = vmatpush1.msra.mxu0 0.0
      %2569 = vmatprep.subr.mxu0 0.0
      %2570 = vmatpush1.msra.mxu0 0.0
      %2571 = vmatprep.subr.mxu0 0.0
      %2572 = vmatpush1.msra.mxu0 0.0
      %2573 = vmatprep.subr.mxu0 0.0
      %2574 = vmatpush1.msra.mxu0 0.0
      %2575 = vmatprep.subr.mxu0 0.0
      %2576 = vmatpush1.msra.mxu0 0.0
      %2577 = vmatprep.subr.mxu0 0.0
      %2578 = vmatpush1.msra.mxu0 0.0
      %2579 = vmatprep.subr.mxu0 0.0
      %2580 = vmatpush1.msra.mxu0 0.0
      %2581 = vmatprep.subr.mxu0 0.0
      %2582 = vmatpush1.msra.mxu0 0.0
      %2583 = vmatprep.subr.mxu0 0.0
      %2584 = vmatpush1.msra.mxu0 0.0
      %2585 = vmatprep.subr.mxu0 0.0
      %2586 = vmatpush1.msra.mxu0 0.0
      %2587 = vmatprep.mubr.f32.mxu0 0.0
      %2588 = vmatmul.mubr.f32.gmra.mrb[0].mxu0 %v2521
      %v2589 = vpop.f32.mrb[0].mxu0
      %v2590 = vadd.f32 0.0, %v2589
      %v2591 = vpop.f32.mrb[0].mxu0
      %v2592 = vadd.f32 0.0, %v2591
      %2593 = vdwg.mxu0
      %v2594 = vadd.f32 %v2506, %v2590
      %v2595 = vadd.f32 %v2508, %v2592
      %2596 = vrot.lane.b32.xlu0 %v2348, 15
      %v2597 = vpop.permute.xlu0 %2596
      %2598 = vrot.lane.b32.xlu0 %v2349, 15
      %v2599 = vpop.permute.xlu0 %2598
      %v2600 = vsel %vm798, %v2597, %v2599
      %v2601 = vsel %vm798, %v2599, %v2597
      %v2602 = vmul.f32 %v2601, %v805
      %v2603 = vmul.f32 %v2600, %v809
      %s2604 = scalar_lea.vmem %s6, 16
      %v2605 = vld [vmem:[%s2604] sm:$0x3f]
      %v2607 = vsel %vm2361, %v2605, 0
      %2609 = vmatprep.subr.mxu0 %v2603
      %2610 = vmatpush1.msra.mxu0 %v2602
      %2611 = vmatprep.subr.mxu0 0.0
      %2612 = vmatpush1.msra.mxu0 0.0
      %2613 = vmatprep.subr.mxu0 0.0
      %2614 = vmatpush1.msra.mxu0 0.0
      %2615 = vmatprep.subr.mxu0 0.0
      %2616 = vmatpush1.msra.mxu0 0.0
      %2617 = vmatprep.subr.mxu0 0.0
      %2618 = vmatpush1.msra.mxu0 0.0
      %2619 = vmatprep.subr.mxu0 0.0
      %2620 = vmatpush1.msra.mxu0 0.0
      %2621 = vmatprep.subr.mxu0 0.0
      %2622 = vmatpush1.msra.mxu0 0.0
      %2623 = vmatprep.subr.mxu0 0.0
      %2624 = vmatpush1.msra.mxu0 0.0
      %2625 = vmatprep.subr.mxu0 0.0
      %2626 = vmatpush1.msra.mxu0 0.0
      %2627 = vmatprep.subr.mxu0 0.0
      %2628 = vmatpush1.msra.mxu0 0.0
      %2629 = vmatprep.subr.mxu0 0.0
      %2630 = vmatpush1.msra.mxu0 0.0
      %2631 = vmatprep.subr.mxu0 0.0
      %2632 = vmatpush1.msra.mxu0 0.0
      %2633 = vmatprep.subr.mxu0 0.0
      %2634 = vmatpush1.msra.mxu0 0.0
      %2635 = vmatprep.subr.mxu0 0.0
      %2636 = vmatpush1.msra.mxu0 0.0
      %2637 = vmatprep.subr.mxu0 0.0
      %2638 = vmatpush1.msra.mxu0 0.0
      %2639 = vmatprep.subr.mxu0 0.0
      %2640 = vmatpush1.msra.mxu0 0.0
      %2641 = vmatprep.subr.mxu0 0.0
      %2642 = vmatpush1.msra.mxu0 0.0
      %2643 = vmatprep.subr.mxu0 0.0
      %2644 = vmatpush1.msra.mxu0 0.0
      %2645 = vmatprep.subr.mxu0 0.0
      %2646 = vmatpush1.msra.mxu0 0.0
      %2647 = vmatprep.subr.mxu0 0.0
      %2648 = vmatpush1.msra.mxu0 0.0
      %2649 = vmatprep.subr.mxu0 0.0
      %2650 = vmatpush1.msra.mxu0 0.0
      %2651 = vmatprep.subr.mxu0 0.0
      %2652 = vmatpush1.msra.mxu0 0.0
      %2653 = vmatprep.subr.mxu0 0.0
      %2654 = vmatpush1.msra.mxu0 0.0
      %2655 = vmatprep.subr.mxu0 0.0
      %2656 = vmatpush1.msra.mxu0 0.0
      %2657 = vmatprep.subr.mxu0 0.0
      %2658 = vmatpush1.msra.mxu0 0.0
      %2659 = vmatprep.subr.mxu0 0.0
      %2660 = vmatpush1.msra.mxu0 0.0
      %2661 = vmatprep.subr.mxu0 0.0
      %2662 = vmatpush1.msra.mxu0 0.0
      %2663 = vmatprep.subr.mxu0 0.0
      %2664 = vmatpush1.msra.mxu0 0.0
      %2665 = vmatprep.subr.mxu0 0.0
      %2666 = vmatpush1.msra.mxu0 0.0
      %2667 = vmatprep.subr.mxu0 0.0
      %2668 = vmatpush1.msra.mxu0 0.0
      %2669 = vmatprep.subr.mxu0 0.0
      %2670 = vmatpush1.msra.mxu0 0.0
      %2671 = vmatprep.subr.mxu0 0.0
      %2672 = vmatpush1.msra.mxu0 0.0
      %2673 = vmatprep.mubr.f32.mxu0 0.0
      %2674 = vmatmul.mubr.f32.gmra.mrb[0].mxu0 %v2607
      %v2675 = vpop.f32.mrb[0].mxu0
      %v2676 = vadd.f32 0.0, %v2675
      %v2677 = vpop.f32.mrb[0].mxu0
      %v2678 = vadd.f32 0.0, %v2677
      %2679 = vdwg.mxu0
      %v2680 = vadd.f32 %v2594, %v2676
      %v2681 = vadd.f32 %v2595, %v2678
      %2682 = vrot.lane.b32.xlu0 %v2348, 1
      %v2683 = vpop.permute.xlu0 %2682
      %2684 = vrot.lane.b32.xlu0 %v2349, 1
      %v2685 = vpop.permute.xlu0 %2684
      %v2686 = vsel %vm914, %v2683, %v2685
      %v2687 = vsel %vm914, %v2685, %v2683
      %v2688 = vmul.f32 %v2687, %v921
      %v2689 = vmul.f32 %v2686, %v925
      %s2690 = scalar_lea.vmem %s6, 24
      %v2691 = vld [vmem:[%s2690] sm:$0x3f]
      %v2693 = vsel %vm2361, %v2691, 0
      %2695 = vmatprep.subr.mxu0 %v2689
      %2696 = vmatpush1.msra.mxu0 %v2688
      %2697 = vmatprep.subr.mxu0 0.0
      %2698 = vmatpush1.msra.mxu0 0.0
      %2699 = vmatprep.subr.mxu0 0.0
      %2700 = vmatpush1.msra.mxu0 0.0
      %2701 = vmatprep.subr.mxu0 0.0
      %2702 = vmatpush1.msra.mxu0 0.0
      %2703 = vmatprep.subr.mxu0 0.0
      %2704 = vmatpush1.msra.mxu0 0.0
      %2705 = vmatprep.subr.mxu0 0.0
      %2706 = vmatpush1.msra.mxu0 0.0
      %2707 = vmatprep.subr.mxu0 0.0
      %2708 = vmatpush1.msra.mxu0 0.0
      %2709 = vmatprep.subr.mxu0 0.0
      %2710 = vmatpush1.msra.mxu0 0.0
      %2711 = vmatprep.subr.mxu0 0.0
      %2712 = vmatpush1.msra.mxu0 0.0
      %2713 = vmatprep.subr.mxu0 0.0
      %2714 = vmatpush1.msra.mxu0 0.0
      %2715 = vmatprep.subr.mxu0 0.0
      %2716 = vmatpush1.msra.mxu0 0.0
      %2717 = vmatprep.subr.mxu0 0.0
      %2718 = vmatpush1.msra.mxu0 0.0
      %2719 = vmatprep.subr.mxu0 0.0
      %2720 = vmatpush1.msra.mxu0 0.0
      %2721 = vmatprep.subr.mxu0 0.0
      %2722 = vmatpush1.msra.mxu0 0.0
      %2723 = vmatprep.subr.mxu0 0.0
      %2724 = vmatpush1.msra.mxu0 0.0
      %2725 = vmatprep.subr.mxu0 0.0
      %2726 = vmatpush1.msra.mxu0 0.0
      %2727 = vmatprep.subr.mxu0 0.0
      %2728 = vmatpush1.msra.mxu0 0.0
      %2729 = vmatprep.subr.mxu0 0.0
      %2730 = vmatpush1.msra.mxu0 0.0
      %2731 = vmatprep.subr.mxu0 0.0
      %2732 = vmatpush1.msra.mxu0 0.0
      %2733 = vmatprep.subr.mxu0 0.0
      %2734 = vmatpush1.msra.mxu0 0.0
      %2735 = vmatprep.subr.mxu0 0.0
      %2736 = vmatpush1.msra.mxu0 0.0
      %2737 = vmatprep.subr.mxu0 0.0
      %2738 = vmatpush1.msra.mxu0 0.0
      %2739 = vmatprep.subr.mxu0 0.0
      %2740 = vmatpush1.msra.mxu0 0.0
      %2741 = vmatprep.subr.mxu0 0.0
      %2742 = vmatpush1.msra.mxu0 0.0
      %2743 = vmatprep.subr.mxu0 0.0
      %2744 = vmatpush1.msra.mxu0 0.0
      %2745 = vmatprep.subr.mxu0 0.0
      %2746 = vmatpush1.msra.mxu0 0.0
      %2747 = vmatprep.subr.mxu0 0.0
      %2748 = vmatpush1.msra.mxu0 0.0
      %2749 = vmatprep.subr.mxu0 0.0
      %2750 = vmatpush1.msra.mxu0 0.0
      %2751 = vmatprep.subr.mxu0 0.0
      %2752 = vmatpush1.msra.mxu0 0.0
      %2753 = vmatprep.subr.mxu0 0.0
      %2754 = vmatpush1.msra.mxu0 0.0
      %2755 = vmatprep.subr.mxu0 0.0
      %2756 = vmatpush1.msra.mxu0 0.0
      %2757 = vmatprep.subr.mxu0 0.0
      %2758 = vmatpush1.msra.mxu0 0.0
      %2759 = vmatprep.mubr.f32.mxu0 0.0
      %2760 = vmatmul.mubr.f32.gmra.mrb[0].mxu0 %v2693
      %v2761 = vpop.f32.mrb[0].mxu0
      %v2762 = vadd.f32 0.0, %v2761
      %v2763 = vpop.f32.mrb[0].mxu0
      %v2764 = vadd.f32 0.0, %v2763
      %2765 = vdwg.mxu0
      %v2766 = vadd.f32 %v2680, %v2762
      %v2767 = vadd.f32 %v2681, %v2764
      %2768 = vrot.lane.b32.xlu0 %v2348, 127
      %v2769 = vpop.permute.xlu0 %2768
      %2770 = vrot.lane.b32.xlu0 %v2349, 127
      %v2771 = vpop.permute.xlu0 %2770
      %v2772 = vsel %vm1030, %v2769, %v2771
      %v2773 = vsel %vm1030, %v2771, %v2769
      %v2774 = vmul.f32 %v2772, %v1037
      %v2775 = vmul.f32 %v2773, %v1041
      %s2776 = scalar_lea.vmem %s6, 40
      %v2777 = vld [vmem:[%s2776] sm:$0x3f]
      %v2779 = vsel %vm2361, %v2777, 0
      %2781 = vmatprep.subr.mxu0 %v2775
      %2782 = vmatpush1.msra.mxu0 %v2774
      %2783 = vmatprep.subr.mxu0 0.0
      %2784 = vmatpush1.msra.mxu0 0.0
      %2785 = vmatprep.subr.mxu0 0.0
      %2786 = vmatpush1.msra.mxu0 0.0
      %2787 = vmatprep.subr.mxu0 0.0
      %2788 = vmatpush1.msra.mxu0 0.0
      %2789 = vmatprep.subr.mxu0 0.0
      %2790 = vmatpush1.msra.mxu0 0.0
      %2791 = vmatprep.subr.mxu0 0.0
      %2792 = vmatpush1.msra.mxu0 0.0
      %2793 = vmatprep.subr.mxu0 0.0
      %2794 = vmatpush1.msra.mxu0 0.0
      %2795 = vmatprep.subr.mxu0 0.0
      %2796 = vmatpush1.msra.mxu0 0.0
      %2797 = vmatprep.subr.mxu0 0.0
      %2798 = vmatpush1.msra.mxu0 0.0
      %2799 = vmatprep.subr.mxu0 0.0
      %2800 = vmatpush1.msra.mxu0 0.0
      %2801 = vmatprep.subr.mxu0 0.0
      %2802 = vmatpush1.msra.mxu0 0.0
      %2803 = vmatprep.subr.mxu0 0.0
      %2804 = vmatpush1.msra.mxu0 0.0
      %2805 = vmatprep.subr.mxu0 0.0
      %2806 = vmatpush1.msra.mxu0 0.0
      %2807 = vmatprep.subr.mxu0 0.0
      %2808 = vmatpush1.msra.mxu0 0.0
      %2809 = vmatprep.subr.mxu0 0.0
      %2810 = vmatpush1.msra.mxu0 0.0
      %2811 = vmatprep.subr.mxu0 0.0
      %2812 = vmatpush1.msra.mxu0 0.0
      %2813 = vmatprep.subr.mxu0 0.0
      %2814 = vmatpush1.msra.mxu0 0.0
      %2815 = vmatprep.subr.mxu0 0.0
      %2816 = vmatpush1.msra.mxu0 0.0
      %2817 = vmatprep.subr.mxu0 0.0
      %2818 = vmatpush1.msra.mxu0 0.0
      %2819 = vmatprep.subr.mxu0 0.0
      %2820 = vmatpush1.msra.mxu0 0.0
      %2821 = vmatprep.subr.mxu0 0.0
      %2822 = vmatpush1.msra.mxu0 0.0
      %2823 = vmatprep.subr.mxu0 0.0
      %2824 = vmatpush1.msra.mxu0 0.0
      %2825 = vmatprep.subr.mxu0 0.0
      %2826 = vmatpush1.msra.mxu0 0.0
      %2827 = vmatprep.subr.mxu0 0.0
      %2828 = vmatpush1.msra.mxu0 0.0
      %2829 = vmatprep.subr.mxu0 0.0
      %2830 = vmatpush1.msra.mxu0 0.0
      %2831 = vmatprep.subr.mxu0 0.0
      %2832 = vmatpush1.msra.mxu0 0.0
      %2833 = vmatprep.subr.mxu0 0.0
      %2834 = vmatpush1.msra.mxu0 0.0
      %2835 = vmatprep.subr.mxu0 0.0
      %2836 = vmatpush1.msra.mxu0 0.0
      %2837 = vmatprep.subr.mxu0 0.0
      %2838 = vmatpush1.msra.mxu0 0.0
      %2839 = vmatprep.subr.mxu0 0.0
      %2840 = vmatpush1.msra.mxu0 0.0
      %2841 = vmatprep.subr.mxu0 0.0
      %2842 = vmatpush1.msra.mxu0 0.0
      %2843 = vmatprep.subr.mxu0 0.0
      %2844 = vmatpush1.msra.mxu0 0.0
      %2845 = vmatprep.mubr.f32.mxu0 0.0
      %2846 = vmatmul.mubr.f32.gmra.mrb[0].mxu0 %v2779
      %v2847 = vpop.f32.mrb[0].mxu0
      %v2848 = vadd.f32 0.0, %v2847
      %v2849 = vpop.f32.mrb[0].mxu0
      %v2850 = vadd.f32 0.0, %v2849
      %2851 = vdwg.mxu0
      %v2852 = vadd.f32 %v2766, %v2848
      %v2853 = vadd.f32 %v2767, %v2850
      %2854 = vrot.lane.b32.xlu0 %v2348, 113
      %v2855 = vpop.permute.xlu0 %2854
      %2856 = vrot.lane.b32.xlu0 %v2349, 113
      %v2857 = vpop.permute.xlu0 %2856
      %v2858 = vsel %vm1146, %v2855, %v2857
      %v2859 = vsel %vm1146, %v2857, %v2855
      %v2860 = vmul.f32 %v2858, %v1153
      %v2861 = vmul.f32 %v2859, %v1157
      %s2862 = scalar_lea.vmem %s6, 48
      %v2863 = vld [vmem:[%s2862] sm:$0x3f]
      %v2865 = vsel %vm2361, %v2863, 0
      %2867 = vmatprep.subr.mxu0 %v2861
      %2868 = vmatpush1.msra.mxu0 %v2860
      %2869 = vmatprep.subr.mxu0 0.0
      %2870 = vmatpush1.msra.mxu0 0.0
      %2871 = vmatprep.subr.mxu0 0.0
      %2872 = vmatpush1.msra.mxu0 0.0
      %2873 = vmatprep.subr.mxu0 0.0
      %2874 = vmatpush1.msra.mxu0 0.0
      %2875 = vmatprep.subr.mxu0 0.0
      %2876 = vmatpush1.msra.mxu0 0.0
      %2877 = vmatprep.subr.mxu0 0.0
      %2878 = vmatpush1.msra.mxu0 0.0
      %2879 = vmatprep.subr.mxu0 0.0
      %2880 = vmatpush1.msra.mxu0 0.0
      %2881 = vmatprep.subr.mxu0 0.0
      %2882 = vmatpush1.msra.mxu0 0.0
      %2883 = vmatprep.subr.mxu0 0.0
      %2884 = vmatpush1.msra.mxu0 0.0
      %2885 = vmatprep.subr.mxu0 0.0
      %2886 = vmatpush1.msra.mxu0 0.0
      %2887 = vmatprep.subr.mxu0 0.0
      %2888 = vmatpush1.msra.mxu0 0.0
      %2889 = vmatprep.subr.mxu0 0.0
      %2890 = vmatpush1.msra.mxu0 0.0
      %2891 = vmatprep.subr.mxu0 0.0
      %2892 = vmatpush1.msra.mxu0 0.0
      %2893 = vmatprep.subr.mxu0 0.0
      %2894 = vmatpush1.msra.mxu0 0.0
      %2895 = vmatprep.subr.mxu0 0.0
      %2896 = vmatpush1.msra.mxu0 0.0
      %2897 = vmatprep.subr.mxu0 0.0
      %2898 = vmatpush1.msra.mxu0 0.0
      %2899 = vmatprep.subr.mxu0 0.0
      %2900 = vmatpush1.msra.mxu0 0.0
      %2901 = vmatprep.subr.mxu0 0.0
      %2902 = vmatpush1.msra.mxu0 0.0
      %2903 = vmatprep.subr.mxu0 0.0
      %2904 = vmatpush1.msra.mxu0 0.0
      %2905 = vmatprep.subr.mxu0 0.0
      %2906 = vmatpush1.msra.mxu0 0.0
      %2907 = vmatprep.subr.mxu0 0.0
      %2908 = vmatpush1.msra.mxu0 0.0
      %2909 = vmatprep.subr.mxu0 0.0
      %2910 = vmatpush1.msra.mxu0 0.0
      %2911 = vmatprep.subr.mxu0 0.0
      %2912 = vmatpush1.msra.mxu0 0.0
      %2913 = vmatprep.subr.mxu0 0.0
      %2914 = vmatpush1.msra.mxu0 0.0
      %2915 = vmatprep.subr.mxu0 0.0
      %2916 = vmatpush1.msra.mxu0 0.0
      %2917 = vmatprep.subr.mxu0 0.0
      %2918 = vmatpush1.msra.mxu0 0.0
      %2919 = vmatprep.subr.mxu0 0.0
      %2920 = vmatpush1.msra.mxu0 0.0
      %2921 = vmatprep.subr.mxu0 0.0
      %2922 = vmatpush1.msra.mxu0 0.0
      %2923 = vmatprep.subr.mxu0 0.0
      %2924 = vmatpush1.msra.mxu0 0.0
      %2925 = vmatprep.subr.mxu0 0.0
      %2926 = vmatpush1.msra.mxu0 0.0
      %2927 = vmatprep.subr.mxu0 0.0
      %2928 = vmatpush1.msra.mxu0 0.0
      %2929 = vmatprep.subr.mxu0 0.0
      %2930 = vmatpush1.msra.mxu0 0.0
      %2931 = vmatprep.mubr.f32.mxu0 0.0
      %2932 = vmatmul.mubr.f32.gmra.mrb[0].mxu0 %v2865
      %v2933 = vpop.f32.mrb[0].mxu0
      %v2934 = vadd.f32 0.0, %v2933
      %v2935 = vpop.f32.mrb[0].mxu0
      %v2936 = vadd.f32 0.0, %v2935
      %2937 = vdwg.mxu0
      %v2938 = vadd.f32 %v2852, %v2934
      %v2939 = vadd.f32 %v2853, %v2936
      %2940 = vrot.lane.b32.xlu0 %v2348, 112
      %v2941 = vpop.permute.xlu0 %2940
      %2942 = vrot.lane.b32.xlu0 %v2349, 112
      %v2943 = vpop.permute.xlu0 %2942
      %v2944 = vsel %vm1262, %v2941, %v2943
      %v2945 = vsel %vm1262, %v2943, %v2941
      %v2946 = vmul.f32 %v2944, %v1269
      %v2947 = vmul.f32 %v2945, %v1273
      %s2948 = scalar_lea.vmem %s6, 56
      %v2949 = vld [vmem:[%s2948] sm:$0x3f]
      %v2951 = vsel %vm2361, %v2949, 0
      %2953 = vmatprep.subr.mxu0 %v2947
      %2954 = vmatpush1.msra.mxu0 %v2946
      %2955 = vmatprep.subr.mxu0 0.0
      %2956 = vmatpush1.msra.mxu0 0.0
      %2957 = vmatprep.subr.mxu0 0.0
      %2958 = vmatpush1.msra.mxu0 0.0
      %2959 = vmatprep.subr.mxu0 0.0
      %2960 = vmatpush1.msra.mxu0 0.0
      %2961 = vmatprep.subr.mxu0 0.0
      %2962 = vmatpush1.msra.mxu0 0.0
      %2963 = vmatprep.subr.mxu0 0.0
      %2964 = vmatpush1.msra.mxu0 0.0
      %2965 = vmatprep.subr.mxu0 0.0
      %2966 = vmatpush1.msra.mxu0 0.0
      %2967 = vmatprep.subr.mxu0 0.0
      %2968 = vmatpush1.msra.mxu0 0.0
      %2969 = vmatprep.subr.mxu0 0.0
      %2970 = vmatpush1.msra.mxu0 0.0
      %2971 = vmatprep.subr.mxu0 0.0
      %2972 = vmatpush1.msra.mxu0 0.0
      %2973 = vmatprep.subr.mxu0 0.0
      %2974 = vmatpush1.msra.mxu0 0.0
      %2975 = vmatprep.subr.mxu0 0.0
      %2976 = vmatpush1.msra.mxu0 0.0
      %2977 = vmatprep.subr.mxu0 0.0
      %2978 = vmatpush1.msra.mxu0 0.0
      %2979 = vmatprep.subr.mxu0 0.0
      %2980 = vmatpush1.msra.mxu0 0.0
      %2981 = vmatprep.subr.mxu0 0.0
      %2982 = vmatpush1.msra.mxu0 0.0
      %2983 = vmatprep.subr.mxu0 0.0
      %2984 = vmatpush1.msra.mxu0 0.0
      %2985 = vmatprep.subr.mxu0 0.0
      %2986 = vmatpush1.msra.mxu0 0.0
      %2987 = vmatprep.subr.mxu0 0.0
      %2988 = vmatpush1.msra.mxu0 0.0
      %2989 = vmatprep.subr.mxu0 0.0
      %2990 = vmatpush1.msra.mxu0 0.0
      %2991 = vmatprep.subr.mxu0 0.0
      %2992 = vmatpush1.msra.mxu0 0.0
      %2993 = vmatprep.subr.mxu0 0.0
      %2994 = vmatpush1.msra.mxu0 0.0
      %2995 = vmatprep.subr.mxu0 0.0
      %2996 = vmatpush1.msra.mxu0 0.0
      %2997 = vmatprep.subr.mxu0 0.0
      %2998 = vmatpush1.msra.mxu0 0.0
      %2999 = vmatprep.subr.mxu0 0.0
      %3000 = vmatpush1.msra.mxu0 0.0
      %3001 = vmatprep.subr.mxu0 0.0
      %3002 = vmatpush1.msra.mxu0 0.0
      %3003 = vmatprep.subr.mxu0 0.0
      %3004 = vmatpush1.msra.mxu0 0.0
      %3005 = vmatprep.subr.mxu0 0.0
      %3006 = vmatpush1.msra.mxu0 0.0
      %3007 = vmatprep.subr.mxu0 0.0
      %3008 = vmatpush1.msra.mxu0 0.0
      %3009 = vmatprep.subr.mxu0 0.0
      %3010 = vmatpush1.msra.mxu0 0.0
      %3011 = vmatprep.subr.mxu0 0.0
      %3012 = vmatpush1.msra.mxu0 0.0
      %3013 = vmatprep.subr.mxu0 0.0
      %3014 = vmatpush1.msra.mxu0 0.0
      %3015 = vmatprep.subr.mxu0 0.0
      %3016 = vmatpush1.msra.mxu0 0.0
      %3017 = vmatprep.mubr.f32.mxu0 0.0
      %3018 = vmatmul.mubr.f32.gmra.mrb[0].mxu0 %v2951
      %v3019 = vpop.f32.mrb[0].mxu0
      %v3020 = vadd.f32 0.0, %v3019
      %v3021 = vpop.f32.mrb[0].mxu0
      %v3022 = vadd.f32 0.0, %v3021
      %3023 = vdwg.mxu0
      %v3024 = vadd.f32 %v2938, %v3020
      %v3025 = vadd.f32 %v2939, %v3022
      %3026 = vrot.lane.b32.xlu0 %v2348, 111
      %v3027 = vpop.permute.xlu0 %3026
      %3028 = vrot.lane.b32.xlu0 %v2349, 111
      %v3029 = vpop.permute.xlu0 %3028
      %v3030 = vsel %vm1378, %v3027, %v3029
      %v3031 = vsel %vm1378, %v3029, %v3027
      %v3032 = vmul.f32 %v3030, %v1385
      %v3033 = vmul.f32 %v3031, %v1389
      %s3034 = scalar_lea.vmem %s6, 64
      %v3035 = vld [vmem:[%s3034] sm:$0x3f]
      %v3037 = vsel %vm2361, %v3035, 0
      %3039 = vmatprep.subr.mxu0 %v3033
      %3040 = vmatpush1.msra.mxu0 %v3032
      %3041 = vmatprep.subr.mxu0 0.0
      %3042 = vmatpush1.msra.mxu0 0.0
      %3043 = vmatprep.subr.mxu0 0.0
      %3044 = vmatpush1.msra.mxu0 0.0
      %3045 = vmatprep.subr.mxu0 0.0
      %3046 = vmatpush1.msra.mxu0 0.0
      %3047 = vmatprep.subr.mxu0 0.0
      %3048 = vmatpush1.msra.mxu0 0.0
      %3049 = vmatprep.subr.mxu0 0.0
      %3050 = vmatpush1.msra.mxu0 0.0
      %3051 = vmatprep.subr.mxu0 0.0
      %3052 = vmatpush1.msra.mxu0 0.0
      %3053 = vmatprep.subr.mxu0 0.0
      %3054 = vmatpush1.msra.mxu0 0.0
      %3055 = vmatprep.subr.mxu0 0.0
      %3056 = vmatpush1.msra.mxu0 0.0
      %3057 = vmatprep.subr.mxu0 0.0
      %3058 = vmatpush1.msra.mxu0 0.0
      %3059 = vmatprep.subr.mxu0 0.0
      %3060 = vmatpush1.msra.mxu0 0.0
      %3061 = vmatprep.subr.mxu0 0.0
      %3062 = vmatpush1.msra.mxu0 0.0
      %3063 = vmatprep.subr.mxu0 0.0
      %3064 = vmatpush1.msra.mxu0 0.0
      %3065 = vmatprep.subr.mxu0 0.0
      %3066 = vmatpush1.msra.mxu0 0.0
      %3067 = vmatprep.subr.mxu0 0.0
      %3068 = vmatpush1.msra.mxu0 0.0
      %3069 = vmatprep.subr.mxu0 0.0
      %3070 = vmatpush1.msra.mxu0 0.0
      %3071 = vmatprep.subr.mxu0 0.0
      %3072 = vmatpush1.msra.mxu0 0.0
      %3073 = vmatprep.subr.mxu0 0.0
      %3074 = vmatpush1.msra.mxu0 0.0
      %3075 = vmatprep.subr.mxu0 0.0
      %3076 = vmatpush1.msra.mxu0 0.0
      %3077 = vmatprep.subr.mxu0 0.0
      %3078 = vmatpush1.msra.mxu0 0.0
      %3079 = vmatprep.subr.mxu0 0.0
      %3080 = vmatpush1.msra.mxu0 0.0
      %3081 = vmatprep.subr.mxu0 0.0
      %3082 = vmatpush1.msra.mxu0 0.0
      %3083 = vmatprep.subr.mxu0 0.0
      %3084 = vmatpush1.msra.mxu0 0.0
      %3085 = vmatprep.subr.mxu0 0.0
      %3086 = vmatpush1.msra.mxu0 0.0
      %3087 = vmatprep.subr.mxu0 0.0
      %3088 = vmatpush1.msra.mxu0 0.0
      %3089 = vmatprep.subr.mxu0 0.0
      %3090 = vmatpush1.msra.mxu0 0.0
      %3091 = vmatprep.subr.mxu0 0.0
      %3092 = vmatpush1.msra.mxu0 0.0
      %3093 = vmatprep.subr.mxu0 0.0
      %3094 = vmatpush1.msra.mxu0 0.0
      %3095 = vmatprep.subr.mxu0 0.0
      %3096 = vmatpush1.msra.mxu0 0.0
      %3097 = vmatprep.subr.mxu0 0.0
      %3098 = vmatpush1.msra.mxu0 0.0
      %3099 = vmatprep.subr.mxu0 0.0
      %3100 = vmatpush1.msra.mxu0 0.0
      %3101 = vmatprep.subr.mxu0 0.0
      %3102 = vmatpush1.msra.mxu0 0.0
      %3103 = vmatprep.mubr.f32.mxu0 0.0
      %3104 = vmatmul.mubr.f32.gmra.mrb[0].mxu0 %v3037
      %v3105 = vpop.f32.mrb[0].mxu0
      %v3106 = vadd.f32 0.0, %v3105
      %v3107 = vpop.f32.mrb[0].mxu0
      %v3108 = vadd.f32 0.0, %v3107
      %3109 = vdwg.mxu0
      %v3110 = vadd.f32 %v3024, %v3106
      %v3111 = vadd.f32 %v3025, %v3108
      %v3112 = vld [vmem:[%s7] sm:$0x3f]
      %3114 = vset.pattern.permute.xlu0 0
      %3115 = vperm.xlu0 %3114, %v3112
      %v3116 = vpop.permute.xlu0 %3115
      %v3118 = vadd.f32 %v3110, %v3116
      %v3119 = vadd.f32 %v3111, %v3116
      %v3120 = vmax.f32 %v3118, 0.0
      %v3121 = vmax.f32 %v3119, 0.0
      %s3122 = scalar_lea.vmem %s8, 32
      %v3123 = vld [vmem:[%s3122] sm:$0x3f]
      %3124 = vrot.lane.b32.xlu0 %v3120, 17
      %v3125 = vpop.permute.xlu0 %3124
      %3126 = vrot.lane.b32.xlu0 %v3121, 17
      %v3127 = vpop.permute.xlu0 %3126
      %v3128 = vsel %vm480, %v3125, %v3127
      %v3129 = vsel %vm480, %v3127, %v3125
      %v3130 = vmul.f32 %v3129, %v487
      %v3131 = vmul.f32 %v3128, %v491
      %v3132 = vld [vmem:[%s8] sm:$0x3f]
      %vm3133 = vcmask 48128
      %v3135 = vsel %vm3133, %v3132, 0
      %vm3137 = vcmask 1045504
      %v3139 = vsel %vm3137, %v3130, 0
      %v3142 = vsel %vm3137, %v3131, 0
      %3144 = vmatprep.subr.mxu0 %v3142
      %3145 = vmatpush1.msra.mxu0 %v3139
      %3146 = vmatprep.subr.mxu0 0.0
      %3147 = vmatpush1.msra.mxu0 0.0
      %3148 = vmatprep.subr.mxu0 0.0
      %3149 = vmatpush1.msra.mxu0 0.0
      %3150 = vmatprep.subr.mxu0 0.0
      %3151 = vmatpush1.msra.mxu0 0.0
      %3152 = vmatprep.subr.mxu0 0.0
      %3153 = vmatpush1.msra.mxu0 0.0
      %3154 = vmatprep.subr.mxu0 0.0
      %3155 = vmatpush1.msra.mxu0 0.0
      %3156 = vmatprep.subr.mxu0 0.0
      %3157 = vmatpush1.msra.mxu0 0.0
      %3158 = vmatprep.subr.mxu0 0.0
      %3159 = vmatpush1.msra.mxu0 0.0
      %3160 = vmatprep.subr.mxu0 0.0
      %3161 = vmatpush1.msra.mxu0 0.0
      %3162 = vmatprep.subr.mxu0 0.0
      %3163 = vmatpush1.msra.mxu0 0.0
      %3164 = vmatprep.subr.mxu0 0.0
      %3165 = vmatpush1.msra.mxu0 0.0
      %3166 = vmatprep.subr.mxu0 0.0
      %3167 = vmatpush1.msra.mxu0 0.0
      %3168 = vmatprep.subr.mxu0 0.0
      %3169 = vmatpush1.msra.mxu0 0.0
      %3170 = vmatprep.subr.mxu0 0.0
      %3171 = vmatpush1.msra.mxu0 0.0
      %3172 = vmatprep.subr.mxu0 0.0
      %3173 = vmatpush1.msra.mxu0 0.0
      %3174 = vmatprep.subr.mxu0 0.0
      %3175 = vmatpush1.msra.mxu0 0.0
      %3176 = vmatprep.subr.mxu0 0.0
      %3177 = vmatpush1.msra.mxu0 0.0
      %3178 = vmatprep.subr.mxu0 0.0
      %3179 = vmatpush1.msra.mxu0 0.0
      %3180 = vmatprep.subr.mxu0 0.0
      %3181 = vmatpush1.msra.mxu0 0.0
      %3182 = vmatprep.subr.mxu0 0.0
      %3183 = vmatpush1.msra.mxu0 0.0
      %3184 = vmatprep.subr.mxu0 0.0
      %3185 = vmatpush1.msra.mxu0 0.0
      %3186 = vmatprep.subr.mxu0 0.0
      %3187 = vmatpush1.msra.mxu0 0.0
      %3188 = vmatprep.subr.mxu0 0.0
      %3189 = vmatpush1.msra.mxu0 0.0
      %3190 = vmatprep.subr.mxu0 0.0
      %3191 = vmatpush1.msra.mxu0 0.0
      %3192 = vmatprep.subr.mxu0 0.0
      %3193 = vmatpush1.msra.mxu0 0.0
      %3194 = vmatprep.subr.mxu0 0.0
      %3195 = vmatpush1.msra.mxu0 0.0
      %3196 = vmatprep.subr.mxu0 0.0
      %3197 = vmatpush1.msra.mxu0 0.0
      %3198 = vmatprep.subr.mxu0 0.0
      %3199 = vmatpush1.msra.mxu0 0.0
      %3200 = vmatprep.subr.mxu0 0.0
      %3201 = vmatpush1.msra.mxu0 0.0
      %3202 = vmatprep.subr.mxu0 0.0
      %3203 = vmatpush1.msra.mxu0 0.0
      %3204 = vmatprep.subr.mxu0 0.0
      %3205 = vmatpush1.msra.mxu0 0.0
      %3206 = vmatprep.subr.mxu0 0.0
      %3207 = vmatpush1.msra.mxu0 0.0
      %3208 = vmatprep.mubr.f32.mxu0 0.0
      %3209 = vmatmul.mubr.f32.gmra.mrb[0].mxu0 %v3135
      %v3210 = vpop.f32.mrb[0].mxu0
      %v3211 = vadd.f32 0.0, %v3210
      %v3212 = vpop.f32.mrb[0].mxu0
      %v3213 = vadd.f32 0.0, %v3212
      %3214 = vdwg.mxu0
      %v3216 = vsel %vm3133, %v3123, 0
      %v3219 = vsel %vm3137, %v3120, 0
      %v3222 = vsel %vm3137, %v3121, 0
      %3224 = vmatprep.subr.mxu0 %v3222
      %3225 = vmatpush1.msra.mxu0 %v3219
      %3226 = vmatprep.subr.mxu0 0.0
      %3227 = vmatpush1.msra.mxu0 0.0
      %3228 = vmatprep.subr.mxu0 0.0
      %3229 = vmatpush1.msra.mxu0 0.0
      %3230 = vmatprep.subr.mxu0 0.0
      %3231 = vmatpush1.msra.mxu0 0.0
      %3232 = vmatprep.subr.mxu0 0.0
      %3233 = vmatpush1.msra.mxu0 0.0
      %3234 = vmatprep.subr.mxu0 0.0
      %3235 = vmatpush1.msra.mxu0 0.0
      %3236 = vmatprep.subr.mxu0 0.0
      %3237 = vmatpush1.msra.mxu0 0.0
      %3238 = vmatprep.subr.mxu0 0.0
      %3239 = vmatpush1.msra.mxu0 0.0
      %3240 = vmatprep.subr.mxu0 0.0
      %3241 = vmatpush1.msra.mxu0 0.0
      %3242 = vmatprep.subr.mxu0 0.0
      %3243 = vmatpush1.msra.mxu0 0.0
      %3244 = vmatprep.subr.mxu0 0.0
      %3245 = vmatpush1.msra.mxu0 0.0
      %3246 = vmatprep.subr.mxu0 0.0
      %3247 = vmatpush1.msra.mxu0 0.0
      %3248 = vmatprep.subr.mxu0 0.0
      %3249 = vmatpush1.msra.mxu0 0.0
      %3250 = vmatprep.subr.mxu0 0.0
      %3251 = vmatpush1.msra.mxu0 0.0
      %3252 = vmatprep.subr.mxu0 0.0
      %3253 = vmatpush1.msra.mxu0 0.0
      %3254 = vmatprep.subr.mxu0 0.0
      %3255 = vmatpush1.msra.mxu0 0.0
      %3256 = vmatprep.subr.mxu0 0.0
      %3257 = vmatpush1.msra.mxu0 0.0
      %3258 = vmatprep.subr.mxu0 0.0
      %3259 = vmatpush1.msra.mxu0 0.0
      %3260 = vmatprep.subr.mxu0 0.0
      %3261 = vmatpush1.msra.mxu0 0.0
      %3262 = vmatprep.subr.mxu0 0.0
      %3263 = vmatpush1.msra.mxu0 0.0
      %3264 = vmatprep.subr.mxu0 0.0
      %3265 = vmatpush1.msra.mxu0 0.0
      %3266 = vmatprep.subr.mxu0 0.0
      %3267 = vmatpush1.msra.mxu0 0.0
      %3268 = vmatprep.subr.mxu0 0.0
      %3269 = vmatpush1.msra.mxu0 0.0
      %3270 = vmatprep.subr.mxu0 0.0
      %3271 = vmatpush1.msra.mxu0 0.0
      %3272 = vmatprep.subr.mxu0 0.0
      %3273 = vmatpush1.msra.mxu0 0.0
      %3274 = vmatprep.subr.mxu0 0.0
      %3275 = vmatpush1.msra.mxu0 0.0
      %3276 = vmatprep.subr.mxu0 0.0
      %3277 = vmatpush1.msra.mxu0 0.0
      %3278 = vmatprep.subr.mxu0 0.0
      %3279 = vmatpush1.msra.mxu0 0.0
      %3280 = vmatprep.subr.mxu0 0.0
      %3281 = vmatpush1.msra.mxu0 0.0
      %3282 = vmatprep.subr.mxu0 0.0
      %3283 = vmatpush1.msra.mxu0 0.0
      %3284 = vmatprep.subr.mxu0 0.0
      %3285 = vmatpush1.msra.mxu0 0.0
      %3286 = vmatprep.subr.mxu0 0.0
      %3287 = vmatpush1.msra.mxu0 0.0
      %3288 = vmatprep.mubr.f32.mxu0 0.0
      %3289 = vmatmul.mubr.f32.gmra.mrb[0].mxu0 %v3216
      %v3290 = vpop.f32.mrb[0].mxu0
      %v3291 = vadd.f32 %v3211, %v3290
      %v3292 = vpop.f32.mrb[0].mxu0
      %v3293 = vadd.f32 %v3213, %v3292
      %3294 = vdwg.mxu0
      %3295 = vrot.lane.b32.xlu0 %v3120, 16
      %v3296 = vpop.permute.xlu0 %3295
      %3297 = vrot.lane.b32.xlu0 %v3121, 16
      %v3298 = vpop.permute.xlu0 %3297
      %v3299 = vsel %vm682, %v3296, %v3298
      %v3300 = vsel %vm682, %v3298, %v3296
      %v3301 = vmul.f32 %v3300, %v689
      %v3302 = vmul.f32 %v3299, %v693
      %s3303 = scalar_lea.vmem %s8, 8
      %v3304 = vld [vmem:[%s3303] sm:$0x3f]
      %v3306 = vsel %vm3133, %v3304, 0
      %v3309 = vsel %vm3137, %v3301, 0
      %v3312 = vsel %vm3137, %v3302, 0
      %3314 = vmatprep.subr.mxu0 %v3312
      %3315 = vmatpush1.msra.mxu0 %v3309
      %3316 = vmatprep.subr.mxu0 0.0
      %3317 = vmatpush1.msra.mxu0 0.0
      %3318 = vmatprep.subr.mxu0 0.0
      %3319 = vmatpush1.msra.mxu0 0.0
      %3320 = vmatprep.subr.mxu0 0.0
      %3321 = vmatpush1.msra.mxu0 0.0
      %3322 = vmatprep.subr.mxu0 0.0
      %3323 = vmatpush1.msra.mxu0 0.0
      %3324 = vmatprep.subr.mxu0 0.0
      %3325 = vmatpush1.msra.mxu0 0.0
      %3326 = vmatprep.subr.mxu0 0.0
      %3327 = vmatpush1.msra.mxu0 0.0
      %3328 = vmatprep.subr.mxu0 0.0
      %3329 = vmatpush1.msra.mxu0 0.0
      %3330 = vmatprep.subr.mxu0 0.0
      %3331 = vmatpush1.msra.mxu0 0.0
      %3332 = vmatprep.subr.mxu0 0.0
      %3333 = vmatpush1.msra.mxu0 0.0
      %3334 = vmatprep.subr.mxu0 0.0
      %3335 = vmatpush1.msra.mxu0 0.0
      %3336 = vmatprep.subr.mxu0 0.0
      %3337 = vmatpush1.msra.mxu0 0.0
      %3338 = vmatprep.subr.mxu0 0.0
      %3339 = vmatpush1.msra.mxu0 0.0
      %3340 = vmatprep.subr.mxu0 0.0
      %3341 = vmatpush1.msra.mxu0 0.0
      %3342 = vmatprep.subr.mxu0 0.0
      %3343 = vmatpush1.msra.mxu0 0.0
      %3344 = vmatprep.subr.mxu0 0.0
      %3345 = vmatpush1.msra.mxu0 0.0
      %3346 = vmatprep.subr.mxu0 0.0
      %3347 = vmatpush1.msra.mxu0 0.0
      %3348 = vmatprep.subr.mxu0 0.0
      %3349 = vmatpush1.msra.mxu0 0.0
      %3350 = vmatprep.subr.mxu0 0.0
      %3351 = vmatpush1.msra.mxu0 0.0
      %3352 = vmatprep.subr.mxu0 0.0
      %3353 = vmatpush1.msra.mxu0 0.0
      %3354 = vmatprep.subr.mxu0 0.0
      %3355 = vmatpush1.msra.mxu0 0.0
      %3356 = vmatprep.subr.mxu0 0.0
      %3357 = vmatpush1.msra.mxu0 0.0
      %3358 = vmatprep.subr.mxu0 0.0
      %3359 = vmatpush1.msra.mxu0 0.0
      %3360 = vmatprep.subr.mxu0 0.0
      %3361 = vmatpush1.msra.mxu0 0.0
      %3362 = vmatprep.subr.mxu0 0.0
      %3363 = vmatpush1.msra.mxu0 0.0
      %3364 = vmatprep.subr.mxu0 0.0
      %3365 = vmatpush1.msra.mxu0 0.0
      %3366 = vmatprep.subr.mxu0 0.0
      %3367 = vmatpush1.msra.mxu0 0.0
      %3368 = vmatprep.subr.mxu0 0.0
      %3369 = vmatpush1.msra.mxu0 0.0
      %3370 = vmatprep.subr.mxu0 0.0
      %3371 = vmatpush1.msra.mxu0 0.0
      %3372 = vmatprep.subr.mxu0 0.0
      %3373 = vmatpush1.msra.mxu0 0.0
      %3374 = vmatprep.subr.mxu0 0.0
      %3375 = vmatpush1.msra.mxu0 0.0
      %3376 = vmatprep.subr.mxu0 0.0
      %3377 = vmatpush1.msra.mxu0 0.0
      %3378 = vmatprep.mubr.f32.mxu0 0.0
      %3379 = vmatmul.mubr.f32.gmra.mrb[0].mxu0 %v3306
      %v3380 = vpop.f32.mrb[0].mxu0
      %v3381 = vadd.f32 0.0, %v3380
      %v3382 = vpop.f32.mrb[0].mxu0
      %v3383 = vadd.f32 0.0, %v3382
      %3384 = vdwg.mxu0
      %v3385 = vadd.f32 %v3291, %v3381
      %v3386 = vadd.f32 %v3293, %v3383
      %3387 = vrot.lane.b32.xlu0 %v3120, 15
      %v3388 = vpop.permute.xlu0 %3387
      %3389 = vrot.lane.b32.xlu0 %v3121, 15
      %v3390 = vpop.permute.xlu0 %3389
      %v3391 = vsel %vm798, %v3388, %v3390
      %v3392 = vsel %vm798, %v3390, %v3388
      %v3393 = vmul.f32 %v3392, %v805
      %v3394 = vmul.f32 %v3391, %v809
      %s3395 = scalar_lea.vmem %s8, 16
      %v3396 = vld [vmem:[%s3395] sm:$0x3f]
      %v3398 = vsel %vm3133, %v3396, 0
      %v3401 = vsel %vm3137, %v3393, 0
      %v3404 = vsel %vm3137, %v3394, 0
      %3406 = vmatprep.subr.mxu0 %v3404
      %3407 = vmatpush1.msra.mxu0 %v3401
      %3408 = vmatprep.subr.mxu0 0.0
      %3409 = vmatpush1.msra.mxu0 0.0
      %3410 = vmatprep.subr.mxu0 0.0
      %3411 = vmatpush1.msra.mxu0 0.0
      %3412 = vmatprep.subr.mxu0 0.0
      %3413 = vmatpush1.msra.mxu0 0.0
      %3414 = vmatprep.subr.mxu0 0.0
      %3415 = vmatpush1.msra.mxu0 0.0
      %3416 = vmatprep.subr.mxu0 0.0
      %3417 = vmatpush1.msra.mxu0 0.0
      %3418 = vmatprep.subr.mxu0 0.0
      %3419 = vmatpush1.msra.mxu0 0.0
      %3420 = vmatprep.subr.mxu0 0.0
      %3421 = vmatpush1.msra.mxu0 0.0
      %3422 = vmatprep.subr.mxu0 0.0
      %3423 = vmatpush1.msra.mxu0 0.0
      %3424 = vmatprep.subr.mxu0 0.0
      %3425 = vmatpush1.msra.mxu0 0.0
      %3426 = vmatprep.subr.mxu0 0.0
      %3427 = vmatpush1.msra.mxu0 0.0
      %3428 = vmatprep.subr.mxu0 0.0
      %3429 = vmatpush1.msra.mxu0 0.0
      %3430 = vmatprep.subr.mxu0 0.0
      %3431 = vmatpush1.msra.mxu0 0.0
      %3432 = vmatprep.subr.mxu0 0.0
      %3433 = vmatpush1.msra.mxu0 0.0
      %3434 = vmatprep.subr.mxu0 0.0
      %3435 = vmatpush1.msra.mxu0 0.0
      %3436 = vmatprep.subr.mxu0 0.0
      %3437 = vmatpush1.msra.mxu0 0.0
      %3438 = vmatprep.subr.mxu0 0.0
      %3439 = vmatpush1.msra.mxu0 0.0
      %3440 = vmatprep.subr.mxu0 0.0
      %3441 = vmatpush1.msra.mxu0 0.0
      %3442 = vmatprep.subr.mxu0 0.0
      %3443 = vmatpush1.msra.mxu0 0.0
      %3444 = vmatprep.subr.mxu0 0.0
      %3445 = vmatpush1.msra.mxu0 0.0
      %3446 = vmatprep.subr.mxu0 0.0
      %3447 = vmatpush1.msra.mxu0 0.0
      %3448 = vmatprep.subr.mxu0 0.0
      %3449 = vmatpush1.msra.mxu0 0.0
      %3450 = vmatprep.subr.mxu0 0.0
      %3451 = vmatpush1.msra.mxu0 0.0
      %3452 = vmatprep.subr.mxu0 0.0
      %3453 = vmatpush1.msra.mxu0 0.0
      %3454 = vmatprep.subr.mxu0 0.0
      %3455 = vmatpush1.msra.mxu0 0.0
      %3456 = vmatprep.subr.mxu0 0.0
      %3457 = vmatpush1.msra.mxu0 0.0
      %3458 = vmatprep.subr.mxu0 0.0
      %3459 = vmatpush1.msra.mxu0 0.0
      %3460 = vmatprep.subr.mxu0 0.0
      %3461 = vmatpush1.msra.mxu0 0.0
      %3462 = vmatprep.subr.mxu0 0.0
      %3463 = vmatpush1.msra.mxu0 0.0
      %3464 = vmatprep.subr.mxu0 0.0
      %3465 = vmatpush1.msra.mxu0 0.0
      %3466 = vmatprep.subr.mxu0 0.0
      %3467 = vmatpush1.msra.mxu0 0.0
      %3468 = vmatprep.subr.mxu0 0.0
      %3469 = vmatpush1.msra.mxu0 0.0
      %3470 = vmatprep.mubr.f32.mxu0 0.0
      %3471 = vmatmul.mubr.f32.gmra.mrb[0].mxu0 %v3398
      %v3472 = vpop.f32.mrb[0].mxu0
      %v3473 = vadd.f32 0.0, %v3472
      %v3474 = vpop.f32.mrb[0].mxu0
      %v3475 = vadd.f32 0.0, %v3474
      %3476 = vdwg.mxu0
      %v3477 = vadd.f32 %v3385, %v3473
      %v3478 = vadd.f32 %v3386, %v3475
      %3479 = vrot.lane.b32.xlu0 %v3120, 1
      %v3480 = vpop.permute.xlu0 %3479
      %3481 = vrot.lane.b32.xlu0 %v3121, 1
      %v3482 = vpop.permute.xlu0 %3481
      %v3483 = vsel %vm914, %v3480, %v3482
      %v3484 = vsel %vm914, %v3482, %v3480
      %v3485 = vmul.f32 %v3484, %v921
      %v3486 = vmul.f32 %v3483, %v925
      %s3487 = scalar_lea.vmem %s8, 24
      %v3488 = vld [vmem:[%s3487] sm:$0x3f]
      %v3490 = vsel %vm3133, %v3488, 0
      %v3493 = vsel %vm3137, %v3485, 0
      %v3496 = vsel %vm3137, %v3486, 0
      %3498 = vmatprep.subr.mxu0 %v3496
      %3499 = vmatpush1.msra.mxu0 %v3493
      %3500 = vmatprep.subr.mxu0 0.0
      %3501 = vmatpush1.msra.mxu0 0.0
      %3502 = vmatprep.subr.mxu0 0.0
      %3503 = vmatpush1.msra.mxu0 0.0
      %3504 = vmatprep.subr.mxu0 0.0
      %3505 = vmatpush1.msra.mxu0 0.0
      %3506 = vmatprep.subr.mxu0 0.0
      %3507 = vmatpush1.msra.mxu0 0.0
      %3508 = vmatprep.subr.mxu0 0.0
      %3509 = vmatpush1.msra.mxu0 0.0
      %3510 = vmatprep.subr.mxu0 0.0
      %3511 = vmatpush1.msra.mxu0 0.0
      %3512 = vmatprep.subr.mxu0 0.0
      %3513 = vmatpush1.msra.mxu0 0.0
      %3514 = vmatprep.subr.mxu0 0.0
      %3515 = vmatpush1.msra.mxu0 0.0
      %3516 = vmatprep.subr.mxu0 0.0
      %3517 = vmatpush1.msra.mxu0 0.0
      %3518 = vmatprep.subr.mxu0 0.0
      %3519 = vmatpush1.msra.mxu0 0.0
      %3520 = vmatprep.subr.mxu0 0.0
      %3521 = vmatpush1.msra.mxu0 0.0
      %3522 = vmatprep.subr.mxu0 0.0
      %3523 = vmatpush1.msra.mxu0 0.0
      %3524 = vmatprep.subr.mxu0 0.0
      %3525 = vmatpush1.msra.mxu0 0.0
      %3526 = vmatprep.subr.mxu0 0.0
      %3527 = vmatpush1.msra.mxu0 0.0
      %3528 = vmatprep.subr.mxu0 0.0
      %3529 = vmatpush1.msra.mxu0 0.0
      %3530 = vmatprep.subr.mxu0 0.0
      %3531 = vmatpush1.msra.mxu0 0.0
      %3532 = vmatprep.subr.mxu0 0.0
      %3533 = vmatpush1.msra.mxu0 0.0
      %3534 = vmatprep.subr.mxu0 0.0
      %3535 = vmatpush1.msra.mxu0 0.0
      %3536 = vmatprep.subr.mxu0 0.0
      %3537 = vmatpush1.msra.mxu0 0.0
      %3538 = vmatprep.subr.mxu0 0.0
      %3539 = vmatpush1.msra.mxu0 0.0
      %3540 = vmatprep.subr.mxu0 0.0
      %3541 = vmatpush1.msra.mxu0 0.0
      %3542 = vmatprep.subr.mxu0 0.0
      %3543 = vmatpush1.msra.mxu0 0.0
      %3544 = vmatprep.subr.mxu0 0.0
      %3545 = vmatpush1.msra.mxu0 0.0
      %3546 = vmatprep.subr.mxu0 0.0
      %3547 = vmatpush1.msra.mxu0 0.0
      %3548 = vmatprep.subr.mxu0 0.0
      %3549 = vmatpush1.msra.mxu0 0.0
      %3550 = vmatprep.subr.mxu0 0.0
      %3551 = vmatpush1.msra.mxu0 0.0
      %3552 = vmatprep.subr.mxu0 0.0
      %3553 = vmatpush1.msra.mxu0 0.0
      %3554 = vmatprep.subr.mxu0 0.0
      %3555 = vmatpush1.msra.mxu0 0.0
      %3556 = vmatprep.subr.mxu0 0.0
      %3557 = vmatpush1.msra.mxu0 0.0
      %3558 = vmatprep.subr.mxu0 0.0
      %3559 = vmatpush1.msra.mxu0 0.0
      %3560 = vmatprep.subr.mxu0 0.0
      %3561 = vmatpush1.msra.mxu0 0.0
      %3562 = vmatprep.mubr.f32.mxu0 0.0
      %3563 = vmatmul.mubr.f32.gmra.mrb[0].mxu0 %v3490
      %v3564 = vpop.f32.mrb[0].mxu0
      %v3565 = vadd.f32 0.0, %v3564
      %v3566 = vpop.f32.mrb[0].mxu0
      %v3567 = vadd.f32 0.0, %v3566
      %3568 = vdwg.mxu0
      %v3569 = vadd.f32 %v3477, %v3565
      %v3570 = vadd.f32 %v3478, %v3567
      %3571 = vrot.lane.b32.xlu0 %v3120, 127
      %v3572 = vpop.permute.xlu0 %3571
      %3573 = vrot.lane.b32.xlu0 %v3121, 127
      %v3574 = vpop.permute.xlu0 %3573
      %v3575 = vsel %vm1030, %v3572, %v3574
      %v3576 = vsel %vm1030, %v3574, %v3572
      %v3577 = vmul.f32 %v3575, %v1037
      %v3578 = vmul.f32 %v3576, %v1041
      %s3579 = scalar_lea.vmem %s8, 40
      %v3580 = vld [vmem:[%s3579] sm:$0x3f]
      %v3582 = vsel %vm3133, %v3580, 0
      %v3585 = vsel %vm3137, %v3577, 0
      %v3588 = vsel %vm3137, %v3578, 0
      %3590 = vmatprep.subr.mxu0 %v3588
      %3591 = vmatpush1.msra.mxu0 %v3585
      %3592 = vmatprep.subr.mxu0 0.0
      %3593 = vmatpush1.msra.mxu0 0.0
      %3594 = vmatprep.subr.mxu0 0.0
      %3595 = vmatpush1.msra.mxu0 0.0
      %3596 = vmatprep.subr.mxu0 0.0
      %3597 = vmatpush1.msra.mxu0 0.0
      %3598 = vmatprep.subr.mxu0 0.0
      %3599 = vmatpush1.msra.mxu0 0.0
      %3600 = vmatprep.subr.mxu0 0.0
      %3601 = vmatpush1.msra.mxu0 0.0
      %3602 = vmatprep.subr.mxu0 0.0
      %3603 = vmatpush1.msra.mxu0 0.0
      %3604 = vmatprep.subr.mxu0 0.0
      %3605 = vmatpush1.msra.mxu0 0.0
      %3606 = vmatprep.subr.mxu0 0.0
      %3607 = vmatpush1.msra.mxu0 0.0
      %3608 = vmatprep.subr.mxu0 0.0
      %3609 = vmatpush1.msra.mxu0 0.0
      %3610 = vmatprep.subr.mxu0 0.0
      %3611 = vmatpush1.msra.mxu0 0.0
      %3612 = vmatprep.subr.mxu0 0.0
      %3613 = vmatpush1.msra.mxu0 0.0
      %3614 = vmatprep.subr.mxu0 0.0
      %3615 = vmatpush1.msra.mxu0 0.0
      %3616 = vmatprep.subr.mxu0 0.0
      %3617 = vmatpush1.msra.mxu0 0.0
      %3618 = vmatprep.subr.mxu0 0.0
      %3619 = vmatpush1.msra.mxu0 0.0
      %3620 = vmatprep.subr.mxu0 0.0
      %3621 = vmatpush1.msra.mxu0 0.0
      %3622 = vmatprep.subr.mxu0 0.0
      %3623 = vmatpush1.msra.mxu0 0.0
      %3624 = vmatprep.subr.mxu0 0.0
      %3625 = vmatpush1.msra.mxu0 0.0
      %3626 = vmatprep.subr.mxu0 0.0
      %3627 = vmatpush1.msra.mxu0 0.0
      %3628 = vmatprep.subr.mxu0 0.0
      %3629 = vmatpush1.msra.mxu0 0.0
      %3630 = vmatprep.subr.mxu0 0.0
      %3631 = vmatpush1.msra.mxu0 0.0
      %3632 = vmatprep.subr.mxu0 0.0
      %3633 = vmatpush1.msra.mxu0 0.0
      %3634 = vmatprep.subr.mxu0 0.0
      %3635 = vmatpush1.msra.mxu0 0.0
      %3636 = vmatprep.subr.mxu0 0.0
      %3637 = vmatpush1.msra.mxu0 0.0
      %3638 = vmatprep.subr.mxu0 0.0
      %3639 = vmatpush1.msra.mxu0 0.0
      %3640 = vmatprep.subr.mxu0 0.0
      %3641 = vmatpush1.msra.mxu0 0.0
      %3642 = vmatprep.subr.mxu0 0.0
      %3643 = vmatpush1.msra.mxu0 0.0
      %3644 = vmatprep.subr.mxu0 0.0
      %3645 = vmatpush1.msra.mxu0 0.0
      %3646 = vmatprep.subr.mxu0 0.0
      %3647 = vmatpush1.msra.mxu0 0.0
      %3648 = vmatprep.subr.mxu0 0.0
      %3649 = vmatpush1.msra.mxu0 0.0
      %3650 = vmatprep.subr.mxu0 0.0
      %3651 = vmatpush1.msra.mxu0 0.0
      %3652 = vmatprep.subr.mxu0 0.0
      %3653 = vmatpush1.msra.mxu0 0.0
      %3654 = vmatprep.mubr.f32.mxu0 0.0
      %3655 = vmatmul.mubr.f32.gmra.mrb[0].mxu0 %v3582
      %v3656 = vpop.f32.mrb[0].mxu0
      %v3657 = vadd.f32 0.0, %v3656
      %v3658 = vpop.f32.mrb[0].mxu0
      %v3659 = vadd.f32 0.0, %v3658
      %3660 = vdwg.mxu0
      %v3661 = vadd.f32 %v3569, %v3657
      %v3662 = vadd.f32 %v3570, %v3659
      %3663 = vrot.lane.b32.xlu0 %v3120, 113
      %v3664 = vpop.permute.xlu0 %3663
      %3665 = vrot.lane.b32.xlu0 %v3121, 113
      %v3666 = vpop.permute.xlu0 %3665
      %v3667 = vsel %vm1146, %v3664, %v3666
      %v3668 = vsel %vm1146, %v3666, %v3664
      %v3669 = vmul.f32 %v3667, %v1153
      %v3670 = vmul.f32 %v3668, %v1157
      %s3671 = scalar_lea.vmem %s8, 48
      %v3672 = vld [vmem:[%s3671] sm:$0x3f]
      %v3674 = vsel %vm3133, %v3672, 0
      %v3677 = vsel %vm3137, %v3669, 0
      %v3680 = vsel %vm3137, %v3670, 0
      %3682 = vmatprep.subr.mxu0 %v3680
      %3683 = vmatpush1.msra.mxu0 %v3677
      %3684 = vmatprep.subr.mxu0 0.0
      %3685 = vmatpush1.msra.mxu0 0.0
      %3686 = vmatprep.subr.mxu0 0.0
      %3687 = vmatpush1.msra.mxu0 0.0
      %3688 = vmatprep.subr.mxu0 0.0
      %3689 = vmatpush1.msra.mxu0 0.0
      %3690 = vmatprep.subr.mxu0 0.0
      %3691 = vmatpush1.msra.mxu0 0.0
      %3692 = vmatprep.subr.mxu0 0.0
      %3693 = vmatpush1.msra.mxu0 0.0
      %3694 = vmatprep.subr.mxu0 0.0
      %3695 = vmatpush1.msra.mxu0 0.0
      %3696 = vmatprep.subr.mxu0 0.0
      %3697 = vmatpush1.msra.mxu0 0.0
      %3698 = vmatprep.subr.mxu0 0.0
      %3699 = vmatpush1.msra.mxu0 0.0
      %3700 = vmatprep.subr.mxu0 0.0
      %3701 = vmatpush1.msra.mxu0 0.0
      %3702 = vmatprep.subr.mxu0 0.0
      %3703 = vmatpush1.msra.mxu0 0.0
      %3704 = vmatprep.subr.mxu0 0.0
      %3705 = vmatpush1.msra.mxu0 0.0
      %3706 = vmatprep.subr.mxu0 0.0
      %3707 = vmatpush1.msra.mxu0 0.0
      %3708 = vmatprep.subr.mxu0 0.0
      %3709 = vmatpush1.msra.mxu0 0.0
      %3710 = vmatprep.subr.mxu0 0.0
      %3711 = vmatpush1.msra.mxu0 0.0
      %3712 = vmatprep.subr.mxu0 0.0
      %3713 = vmatpush1.msra.mxu0 0.0
      %3714 = vmatprep.subr.mxu0 0.0
      %3715 = vmatpush1.msra.mxu0 0.0
      %3716 = vmatprep.subr.mxu0 0.0
      %3717 = vmatpush1.msra.mxu0 0.0
      %3718 = vmatprep.subr.mxu0 0.0
      %3719 = vmatpush1.msra.mxu0 0.0
      %3720 = vmatprep.subr.mxu0 0.0
      %3721 = vmatpush1.msra.mxu0 0.0
      %3722 = vmatprep.subr.mxu0 0.0
      %3723 = vmatpush1.msra.mxu0 0.0
      %3724 = vmatprep.subr.mxu0 0.0
      %3725 = vmatpush1.msra.mxu0 0.0
      %3726 = vmatprep.subr.mxu0 0.0
      %3727 = vmatpush1.msra.mxu0 0.0
      %3728 = vmatprep.subr.mxu0 0.0
      %3729 = vmatpush1.msra.mxu0 0.0
      %3730 = vmatprep.subr.mxu0 0.0
      %3731 = vmatpush1.msra.mxu0 0.0
      %3732 = vmatprep.subr.mxu0 0.0
      %3733 = vmatpush1.msra.mxu0 0.0
      %3734 = vmatprep.subr.mxu0 0.0
      %3735 = vmatpush1.msra.mxu0 0.0
      %3736 = vmatprep.subr.mxu0 0.0
      %3737 = vmatpush1.msra.mxu0 0.0
      %3738 = vmatprep.subr.mxu0 0.0
      %3739 = vmatpush1.msra.mxu0 0.0
      %3740 = vmatprep.subr.mxu0 0.0
      %3741 = vmatpush1.msra.mxu0 0.0
      %3742 = vmatprep.subr.mxu0 0.0
      %3743 = vmatpush1.msra.mxu0 0.0
      %3744 = vmatprep.subr.mxu0 0.0
      %3745 = vmatpush1.msra.mxu0 0.0
      %3746 = vmatprep.mubr.f32.mxu0 0.0
      %3747 = vmatmul.mubr.f32.gmra.mrb[0].mxu0 %v3674
      %v3748 = vpop.f32.mrb[0].mxu0
      %v3749 = vadd.f32 0.0, %v3748
      %v3750 = vpop.f32.mrb[0].mxu0
      %v3751 = vadd.f32 0.0, %v3750
      %3752 = vdwg.mxu0
      %v3753 = vadd.f32 %v3661, %v3749
      %v3754 = vadd.f32 %v3662, %v3751
      %3755 = vrot.lane.b32.xlu0 %v3120, 112
      %v3756 = vpop.permute.xlu0 %3755
      %3757 = vrot.lane.b32.xlu0 %v3121, 112
      %v3758 = vpop.permute.xlu0 %3757
      %v3759 = vsel %vm1262, %v3756, %v3758
      %v3760 = vsel %vm1262, %v3758, %v3756
      %v3761 = vmul.f32 %v3759, %v1269
      %v3762 = vmul.f32 %v3760, %v1273
      %s3763 = scalar_lea.vmem %s8, 56
      %v3764 = vld [vmem:[%s3763] sm:$0x3f]
      %v3766 = vsel %vm3133, %v3764, 0
      %v3769 = vsel %vm3137, %v3761, 0
      %v3772 = vsel %vm3137, %v3762, 0
      %3774 = vmatprep.subr.mxu0 %v3772
      %3775 = vmatpush1.msra.mxu0 %v3769
      %3776 = vmatprep.subr.mxu0 0.0
      %3777 = vmatpush1.msra.mxu0 0.0
      %3778 = vmatprep.subr.mxu0 0.0
      %3779 = vmatpush1.msra.mxu0 0.0
      %3780 = vmatprep.subr.mxu0 0.0
      %3781 = vmatpush1.msra.mxu0 0.0
      %3782 = vmatprep.subr.mxu0 0.0
      %3783 = vmatpush1.msra.mxu0 0.0
      %3784 = vmatprep.subr.mxu0 0.0
      %3785 = vmatpush1.msra.mxu0 0.0
      %3786 = vmatprep.subr.mxu0 0.0
      %3787 = vmatpush1.msra.mxu0 0.0
      %3788 = vmatprep.subr.mxu0 0.0
      %3789 = vmatpush1.msra.mxu0 0.0
      %3790 = vmatprep.subr.mxu0 0.0
      %3791 = vmatpush1.msra.mxu0 0.0
      %3792 = vmatprep.subr.mxu0 0.0
      %3793 = vmatpush1.msra.mxu0 0.0
      %3794 = vmatprep.subr.mxu0 0.0
      %3795 = vmatpush1.msra.mxu0 0.0
      %3796 = vmatprep.subr.mxu0 0.0
      %3797 = vmatpush1.msra.mxu0 0.0
      %3798 = vmatprep.subr.mxu0 0.0
      %3799 = vmatpush1.msra.mxu0 0.0
      %3800 = vmatprep.subr.mxu0 0.0
      %3801 = vmatpush1.msra.mxu0 0.0
      %3802 = vmatprep.subr.mxu0 0.0
      %3803 = vmatpush1.msra.mxu0 0.0
      %3804 = vmatprep.subr.mxu0 0.0
      %3805 = vmatpush1.msra.mxu0 0.0
      %3806 = vmatprep.subr.mxu0 0.0
      %3807 = vmatpush1.msra.mxu0 0.0
      %3808 = vmatprep.subr.mxu0 0.0
      %3809 = vmatpush1.msra.mxu0 0.0
      %3810 = vmatprep.subr.mxu0 0.0
      %3811 = vmatpush1.msra.mxu0 0.0
      %3812 = vmatprep.subr.mxu0 0.0
      %3813 = vmatpush1.msra.mxu0 0.0
      %3814 = vmatprep.subr.mxu0 0.0
      %3815 = vmatpush1.msra.mxu0 0.0
      %3816 = vmatprep.subr.mxu0 0.0
      %3817 = vmatpush1.msra.mxu0 0.0
      %3818 = vmatprep.subr.mxu0 0.0
      %3819 = vmatpush1.msra.mxu0 0.0
      %3820 = vmatprep.subr.mxu0 0.0
      %3821 = vmatpush1.msra.mxu0 0.0
      %3822 = vmatprep.subr.mxu0 0.0
      %3823 = vmatpush1.msra.mxu0 0.0
      %3824 = vmatprep.subr.mxu0 0.0
      %3825 = vmatpush1.msra.mxu0 0.0
      %3826 = vmatprep.subr.mxu0 0.0
      %3827 = vmatpush1.msra.mxu0 0.0
      %3828 = vmatprep.subr.mxu0 0.0
      %3829 = vmatpush1.msra.mxu0 0.0
      %3830 = vmatprep.subr.mxu0 0.0
      %3831 = vmatpush1.msra.mxu0 0.0
      %3832 = vmatprep.subr.mxu0 0.0
      %3833 = vmatpush1.msra.mxu0 0.0
      %3834 = vmatprep.subr.mxu0 0.0
      %3835 = vmatpush1.msra.mxu0 0.0
      %3836 = vmatprep.subr.mxu0 0.0
      %3837 = vmatpush1.msra.mxu0 0.0
      %3838 = vmatprep.mubr.f32.mxu0 0.0
      %3839 = vmatmul.mubr.f32.gmra.mrb[0].mxu0 %v3766
      %v3840 = vpop.f32.mrb[0].mxu0
      %v3841 = vadd.f32 0.0, %v3840
      %v3842 = vpop.f32.mrb[0].mxu0
      %v3843 = vadd.f32 0.0, %v3842
      %3844 = vdwg.mxu0
      %v3845 = vadd.f32 %v3753, %v3841
      %v3846 = vadd.f32 %v3754, %v3843
      %3847 = vrot.lane.b32.xlu0 %v3120, 111
      %v3848 = vpop.permute.xlu0 %3847
      %3849 = vrot.lane.b32.xlu0 %v3121, 111
      %v3850 = vpop.permute.xlu0 %3849
      %v3851 = vsel %vm1378, %v3848, %v3850
      %v3852 = vsel %vm1378, %v3850, %v3848
      %v3853 = vmul.f32 %v3851, %v1385
      %v3854 = vmul.f32 %v3852, %v1389
      %s3855 = scalar_lea.vmem %s8, 64
      %v3856 = vld [vmem:[%s3855] sm:$0x3f]
      %v3858 = vsel %vm3133, %v3856, 0
      %v3861 = vsel %vm3137, %v3853, 0
      %v3864 = vsel %vm3137, %v3854, 0
      %3866 = vmatprep.subr.mxu0 %v3864
      %3867 = vmatpush1.msra.mxu0 %v3861
      %3868 = vmatprep.subr.mxu0 0.0
      %3869 = vmatpush1.msra.mxu0 0.0
      %3870 = vmatprep.subr.mxu0 0.0
      %3871 = vmatpush1.msra.mxu0 0.0
      %3872 = vmatprep.subr.mxu0 0.0
      %3873 = vmatpush1.msra.mxu0 0.0
      %3874 = vmatprep.subr.mxu0 0.0
      %3875 = vmatpush1.msra.mxu0 0.0
      %3876 = vmatprep.subr.mxu0 0.0
      %3877 = vmatpush1.msra.mxu0 0.0
      %3878 = vmatprep.subr.mxu0 0.0
      %3879 = vmatpush1.msra.mxu0 0.0
      %3880 = vmatprep.subr.mxu0 0.0
      %3881 = vmatpush1.msra.mxu0 0.0
      %3882 = vmatprep.subr.mxu0 0.0
      %3883 = vmatpush1.msra.mxu0 0.0
      %3884 = vmatprep.subr.mxu0 0.0
      %3885 = vmatpush1.msra.mxu0 0.0
      %3886 = vmatprep.subr.mxu0 0.0
      %3887 = vmatpush1.msra.mxu0 0.0
      %3888 = vmatprep.subr.mxu0 0.0
      %3889 = vmatpush1.msra.mxu0 0.0
      %3890 = vmatprep.subr.mxu0 0.0
      %3891 = vmatpush1.msra.mxu0 0.0
      %3892 = vmatprep.subr.mxu0 0.0
      %3893 = vmatpush1.msra.mxu0 0.0
      %3894 = vmatprep.subr.mxu0 0.0
      %3895 = vmatpush1.msra.mxu0 0.0
      %3896 = vmatprep.subr.mxu0 0.0
      %3897 = vmatpush1.msra.mxu0 0.0
      %3898 = vmatprep.subr.mxu0 0.0
      %3899 = vmatpush1.msra.mxu0 0.0
      %3900 = vmatprep.subr.mxu0 0.0
      %3901 = vmatpush1.msra.mxu0 0.0
      %3902 = vmatprep.subr.mxu0 0.0
      %3903 = vmatpush1.msra.mxu0 0.0
      %3904 = vmatprep.subr.mxu0 0.0
      %3905 = vmatpush1.msra.mxu0 0.0
      %3906 = vmatprep.subr.mxu0 0.0
      %3907 = vmatpush1.msra.mxu0 0.0
      %3908 = vmatprep.subr.mxu0 0.0
      %3909 = vmatpush1.msra.mxu0 0.0
      %3910 = vmatprep.subr.mxu0 0.0
      %3911 = vmatpush1.msra.mxu0 0.0
      %3912 = vmatprep.subr.mxu0 0.0
      %3913 = vmatpush1.msra.mxu0 0.0
      %3914 = vmatprep.subr.mxu0 0.0
      %3915 = vmatpush1.msra.mxu0 0.0
      %3916 = vmatprep.subr.mxu0 0.0
      %3917 = vmatpush1.msra.mxu0 0.0
      %3918 = vmatprep.subr.mxu0 0.0
      %3919 = vmatpush1.msra.mxu0 0.0
      %3920 = vmatprep.subr.mxu0 0.0
      %3921 = vmatpush1.msra.mxu0 0.0
      %3922 = vmatprep.subr.mxu0 0.0
      %3923 = vmatpush1.msra.mxu0 0.0
      %3924 = vmatprep.subr.mxu0 0.0
      %3925 = vmatpush1.msra.mxu0 0.0
      %3926 = vmatprep.subr.mxu0 0.0
      %3927 = vmatpush1.msra.mxu0 0.0
      %3928 = vmatprep.subr.mxu0 0.0
      %3929 = vmatpush1.msra.mxu0 0.0
      %3930 = vmatprep.mubr.f32.mxu0 0.0
      %3931 = vmatmul.mubr.f32.gmra.mrb[0].mxu0 %v3858
      %v3932 = vpop.f32.mrb[0].mxu0
      %v3933 = vadd.f32 0.0, %v3932
      %v3934 = vpop.f32.mrb[0].mxu0
      %v3935 = vadd.f32 0.0, %v3934
      %3936 = vdwg.mxu0
      %v3937 = vadd.f32 %v3845, %v3933
      %v3938 = vadd.f32 %v3846, %v3935
      %v3939 = vld [vmem:[%s9] sm:$0x3f]
      %3941 = vset.pattern.permute.xlu0 0
      %3942 = vperm.xlu0 %3941, %v3939
      %v3943 = vpop.permute.xlu0 %3942
      %v3945 = vadd.f32 %v3937, %v3943
      %v3946 = vadd.f32 %v3938, %v3943
      %v3947 = vmax.f32 %v3945, 0.0
      %v3948 = vmax.f32 %v3946, 0.0
      %s3949 = scalar_lea.vmem %s10, 32
      %v3950 = vld [vmem:[%s3949] sm:$0xff]
      %3951 = vrot.lane.b32.xlu0 %v3947, 17
      %v3952 = vpop.permute.xlu0 %3951
      %3953 = vrot.lane.b32.xlu0 %v3948, 17
      %v3954 = vpop.permute.xlu0 %3953
      %v3955 = vsel %vm480, %v3952, %v3954
      %v3956 = vsel %vm480, %v3954, %v3952
      %v3957 = vmul.f32 %v3956, %v487
      %v3958 = vmul.f32 %v3955, %v491
      %v3959 = vld [vmem:[%s10] sm:$0xff]
      %v3961 = vsel %vm3133, %v3959, 0
      %v3964 = vsel %vm3137, %v3957, 0
      %v3967 = vsel %vm3137, %v3958, 0
      %3969 = vmatprep.subr.mxu0 %v3967
      %3970 = vmatpush1.msra.mxu0 %v3964
      %3971 = vmatprep.subr.mxu0 0.0
      %3972 = vmatpush1.msra.mxu0 0.0
      %3973 = vmatprep.subr.mxu0 0.0
      %3974 = vmatpush1.msra.mxu0 0.0
      %3975 = vmatprep.subr.mxu0 0.0
      %3976 = vmatpush1.msra.mxu0 0.0
      %3977 = vmatprep.subr.mxu0 0.0
      %3978 = vmatpush1.msra.mxu0 0.0
      %3979 = vmatprep.subr.mxu0 0.0
      %3980 = vmatpush1.msra.mxu0 0.0
      %3981 = vmatprep.subr.mxu0 0.0
      %3982 = vmatpush1.msra.mxu0 0.0
      %3983 = vmatprep.subr.mxu0 0.0
      %3984 = vmatpush1.msra.mxu0 0.0
      %3985 = vmatprep.subr.mxu0 0.0
      %3986 = vmatpush1.msra.mxu0 0.0
      %3987 = vmatprep.subr.mxu0 0.0
      %3988 = vmatpush1.msra.mxu0 0.0
      %3989 = vmatprep.subr.mxu0 0.0
      %3990 = vmatpush1.msra.mxu0 0.0
      %3991 = vmatprep.subr.mxu0 0.0
      %3992 = vmatpush1.msra.mxu0 0.0
      %3993 = vmatprep.subr.mxu0 0.0
      %3994 = vmatpush1.msra.mxu0 0.0
      %3995 = vmatprep.subr.mxu0 0.0
      %3996 = vmatpush1.msra.mxu0 0.0
      %3997 = vmatprep.subr.mxu0 0.0
      %3998 = vmatpush1.msra.mxu0 0.0
      %3999 = vmatprep.subr.mxu0 0.0
      %4000 = vmatpush1.msra.mxu0 0.0
      %4001 = vmatprep.subr.mxu0 0.0
      %4002 = vmatpush1.msra.mxu0 0.0
      %4003 = vmatprep.subr.mxu0 0.0
      %4004 = vmatpush1.msra.mxu0 0.0
      %4005 = vmatprep.subr.mxu0 0.0
      %4006 = vmatpush1.msra.mxu0 0.0
      %4007 = vmatprep.subr.mxu0 0.0
      %4008 = vmatpush1.msra.mxu0 0.0
      %4009 = vmatprep.subr.mxu0 0.0
      %4010 = vmatpush1.msra.mxu0 0.0
      %4011 = vmatprep.subr.mxu0 0.0
      %4012 = vmatpush1.msra.mxu0 0.0
      %4013 = vmatprep.subr.mxu0 0.0
      %4014 = vmatpush1.msra.mxu0 0.0
      %4015 = vmatprep.subr.mxu0 0.0
      %4016 = vmatpush1.msra.mxu0 0.0
      %4017 = vmatprep.subr.mxu0 0.0
      %4018 = vmatpush1.msra.mxu0 0.0
      %4019 = vmatprep.subr.mxu0 0.0
      %4020 = vmatpush1.msra.mxu0 0.0
      %4021 = vmatprep.subr.mxu0 0.0
      %4022 = vmatpush1.msra.mxu0 0.0
      %4023 = vmatprep.subr.mxu0 0.0
      %4024 = vmatpush1.msra.mxu0 0.0
      %4025 = vmatprep.subr.mxu0 0.0
      %4026 = vmatpush1.msra.mxu0 0.0
      %4027 = vmatprep.subr.mxu0 0.0
      %4028 = vmatpush1.msra.mxu0 0.0
      %4029 = vmatprep.subr.mxu0 0.0
      %4030 = vmatpush1.msra.mxu0 0.0
      %4031 = vmatprep.subr.mxu0 0.0
      %4032 = vmatpush1.msra.mxu0 0.0
      %4033 = vmatprep.mubr.f32.mxu0 0.0
      %4034 = vmatmul.mubr.f32.gmra.mrb[0].mxu0 %v3961
      %v4035 = vpop.f32.mrb[0].mxu0
      %v4036 = vadd.f32 0.0, %v4035
      %v4037 = vpop.f32.mrb[0].mxu0
      %v4038 = vadd.f32 0.0, %v4037
      %4039 = vdwg.mxu0
      %v4041 = vsel %vm3133, %v3950, 0
      %v4044 = vsel %vm3137, %v3947, 0
      %v4047 = vsel %vm3137, %v3948, 0
      %4049 = vmatprep.subr.mxu0 %v4047
      %4050 = vmatpush1.msra.mxu0 %v4044
      %4051 = vmatprep.subr.mxu0 0.0
      %4052 = vmatpush1.msra.mxu0 0.0
      %4053 = vmatprep.subr.mxu0 0.0
      %4054 = vmatpush1.msra.mxu0 0.0
      %4055 = vmatprep.subr.mxu0 0.0
      %4056 = vmatpush1.msra.mxu0 0.0
      %4057 = vmatprep.subr.mxu0 0.0
      %4058 = vmatpush1.msra.mxu0 0.0
      %4059 = vmatprep.subr.mxu0 0.0
      %4060 = vmatpush1.msra.mxu0 0.0
      %4061 = vmatprep.subr.mxu0 0.0
      %4062 = vmatpush1.msra.mxu0 0.0
      %4063 = vmatprep.subr.mxu0 0.0
      %4064 = vmatpush1.msra.mxu0 0.0
      %4065 = vmatprep.subr.mxu0 0.0
      %4066 = vmatpush1.msra.mxu0 0.0
      %4067 = vmatprep.subr.mxu0 0.0
      %4068 = vmatpush1.msra.mxu0 0.0
      %4069 = vmatprep.subr.mxu0 0.0
      %4070 = vmatpush1.msra.mxu0 0.0
      %4071 = vmatprep.subr.mxu0 0.0
      %4072 = vmatpush1.msra.mxu0 0.0
      %4073 = vmatprep.subr.mxu0 0.0
      %4074 = vmatpush1.msra.mxu0 0.0
      %4075 = vmatprep.subr.mxu0 0.0
      %4076 = vmatpush1.msra.mxu0 0.0
      %4077 = vmatprep.subr.mxu0 0.0
      %4078 = vmatpush1.msra.mxu0 0.0
      %4079 = vmatprep.subr.mxu0 0.0
      %4080 = vmatpush1.msra.mxu0 0.0
      %4081 = vmatprep.subr.mxu0 0.0
      %4082 = vmatpush1.msra.mxu0 0.0
      %4083 = vmatprep.subr.mxu0 0.0
      %4084 = vmatpush1.msra.mxu0 0.0
      %4085 = vmatprep.subr.mxu0 0.0
      %4086 = vmatpush1.msra.mxu0 0.0
      %4087 = vmatprep.subr.mxu0 0.0
      %4088 = vmatpush1.msra.mxu0 0.0
      %4089 = vmatprep.subr.mxu0 0.0
      %4090 = vmatpush1.msra.mxu0 0.0
      %4091 = vmatprep.subr.mxu0 0.0
      %4092 = vmatpush1.msra.mxu0 0.0
      %4093 = vmatprep.subr.mxu0 0.0
      %4094 = vmatpush1.msra.mxu0 0.0
      %4095 = vmatprep.subr.mxu0 0.0
      %4096 = vmatpush1.msra.mxu0 0.0
      %4097 = vmatprep.subr.mxu0 0.0
      %4098 = vmatpush1.msra.mxu0 0.0
      %4099 = vmatprep.subr.mxu0 0.0
      %4100 = vmatpush1.msra.mxu0 0.0
      %4101 = vmatprep.subr.mxu0 0.0
      %4102 = vmatpush1.msra.mxu0 0.0
      %4103 = vmatprep.subr.mxu0 0.0
      %4104 = vmatpush1.msra.mxu0 0.0
      %4105 = vmatprep.subr.mxu0 0.0
      %4106 = vmatpush1.msra.mxu0 0.0
      %4107 = vmatprep.subr.mxu0 0.0
      %4108 = vmatpush1.msra.mxu0 0.0
      %4109 = vmatprep.subr.mxu0 0.0
      %4110 = vmatpush1.msra.mxu0 0.0
      %4111 = vmatprep.subr.mxu0 0.0
      %4112 = vmatpush1.msra.mxu0 0.0
      %4113 = vmatprep.mubr.f32.mxu0 0.0
      %4114 = vmatmul.mubr.f32.gmra.mrb[0].mxu0 %v4041
      %v4115 = vpop.f32.mrb[0].mxu0
      %v4116 = vadd.f32 %v4036, %v4115
      %v4117 = vpop.f32.mrb[0].mxu0
      %v4118 = vadd.f32 %v4038, %v4117
      %4119 = vdwg.mxu0
      %4120 = vrot.lane.b32.xlu0 %v3947, 16
      %v4121 = vpop.permute.xlu0 %4120
      %4122 = vrot.lane.b32.xlu0 %v3948, 16
      %v4123 = vpop.permute.xlu0 %4122
      %v4124 = vsel %vm682, %v4121, %v4123
      %v4125 = vsel %vm682, %v4123, %v4121
      %v4126 = vmul.f32 %v4125, %v689
      %v4127 = vmul.f32 %v4124, %v693
      %s4128 = scalar_lea.vmem %s10, 8
      %v4129 = vld [vmem:[%s4128] sm:$0xff]
      %v4131 = vsel %vm3133, %v4129, 0
      %v4134 = vsel %vm3137, %v4126, 0
      %v4137 = vsel %vm3137, %v4127, 0
      %4139 = vmatprep.subr.mxu0 %v4137
      %4140 = vmatpush1.msra.mxu0 %v4134
      %4141 = vmatprep.subr.mxu0 0.0
      %4142 = vmatpush1.msra.mxu0 0.0
      %4143 = vmatprep.subr.mxu0 0.0
      %4144 = vmatpush1.msra.mxu0 0.0
      %4145 = vmatprep.subr.mxu0 0.0
      %4146 = vmatpush1.msra.mxu0 0.0
      %4147 = vmatprep.subr.mxu0 0.0
      %4148 = vmatpush1.msra.mxu0 0.0
      %4149 = vmatprep.subr.mxu0 0.0
      %4150 = vmatpush1.msra.mxu0 0.0
      %4151 = vmatprep.subr.mxu0 0.0
      %4152 = vmatpush1.msra.mxu0 0.0
      %4153 = vmatprep.subr.mxu0 0.0
      %4154 = vmatpush1.msra.mxu0 0.0
      %4155 = vmatprep.subr.mxu0 0.0
      %4156 = vmatpush1.msra.mxu0 0.0
      %4157 = vmatprep.subr.mxu0 0.0
      %4158 = vmatpush1.msra.mxu0 0.0
      %4159 = vmatprep.subr.mxu0 0.0
      %4160 = vmatpush1.msra.mxu0 0.0
      %4161 = vmatprep.subr.mxu0 0.0
      %4162 = vmatpush1.msra.mxu0 0.0
      %4163 = vmatprep.subr.mxu0 0.0
      %4164 = vmatpush1.msra.mxu0 0.0
      %4165 = vmatprep.subr.mxu0 0.0
      %4166 = vmatpush1.msra.mxu0 0.0
      %4167 = vmatprep.subr.mxu0 0.0
      %4168 = vmatpush1.msra.mxu0 0.0
      %4169 = vmatprep.subr.mxu0 0.0
      %4170 = vmatpush1.msra.mxu0 0.0
      %4171 = vmatprep.subr.mxu0 0.0
      %4172 = vmatpush1.msra.mxu0 0.0
      %4173 = vmatprep.subr.mxu0 0.0
      %4174 = vmatpush1.msra.mxu0 0.0
      %4175 = vmatprep.subr.mxu0 0.0
      %4176 = vmatpush1.msra.mxu0 0.0
      %4177 = vmatprep.subr.mxu0 0.0
      %4178 = vmatpush1.msra.mxu0 0.0
      %4179 = vmatprep.subr.mxu0 0.0
      %4180 = vmatpush1.msra.mxu0 0.0
      %4181 = vmatprep.subr.mxu0 0.0
      %4182 = vmatpush1.msra.mxu0 0.0
      %4183 = vmatprep.subr.mxu0 0.0
      %4184 = vmatpush1.msra.mxu0 0.0
      %4185 = vmatprep.subr.mxu0 0.0
      %4186 = vmatpush1.msra.mxu0 0.0
      %4187 = vmatprep.subr.mxu0 0.0
      %4188 = vmatpush1.msra.mxu0 0.0
      %4189 = vmatprep.subr.mxu0 0.0
      %4190 = vmatpush1.msra.mxu0 0.0
      %4191 = vmatprep.subr.mxu0 0.0
      %4192 = vmatpush1.msra.mxu0 0.0
      %4193 = vmatprep.subr.mxu0 0.0
      %4194 = vmatpush1.msra.mxu0 0.0
      %4195 = vmatprep.subr.mxu0 0.0
      %4196 = vmatpush1.msra.mxu0 0.0
      %4197 = vmatprep.subr.mxu0 0.0
      %4198 = vmatpush1.msra.mxu0 0.0
      %4199 = vmatprep.subr.mxu0 0.0
      %4200 = vmatpush1.msra.mxu0 0.0
      %4201 = vmatprep.subr.mxu0 0.0
      %4202 = vmatpush1.msra.mxu0 0.0
      %4203 = vmatprep.mubr.f32.mxu0 0.0
      %4204 = vmatmul.mubr.f32.gmra.mrb[0].mxu0 %v4131
      %v4205 = vpop.f32.mrb[0].mxu0
      %v4206 = vadd.f32 0.0, %v4205
      %v4207 = vpop.f32.mrb[0].mxu0
      %v4208 = vadd.f32 0.0, %v4207
      %4209 = vdwg.mxu0
      %v4210 = vadd.f32 %v4116, %v4206
      %v4211 = vadd.f32 %v4118, %v4208
      %4212 = vrot.lane.b32.xlu0 %v3947, 15
      %v4213 = vpop.permute.xlu0 %4212
      %4214 = vrot.lane.b32.xlu0 %v3948, 15
      %v4215 = vpop.permute.xlu0 %4214
      %v4216 = vsel %vm798, %v4213, %v4215
      %v4217 = vsel %vm798, %v4215, %v4213
      %v4218 = vmul.f32 %v4217, %v805
      %v4219 = vmul.f32 %v4216, %v809
      %s4220 = scalar_lea.vmem %s10, 16
      %v4221 = vld [vmem:[%s4220] sm:$0xff]
      %v4223 = vsel %vm3133, %v4221, 0
      %v4226 = vsel %vm3137, %v4218, 0
      %v4229 = vsel %vm3137, %v4219, 0
      %4231 = vmatprep.subr.mxu0 %v4229
      %4232 = vmatpush1.msra.mxu0 %v4226
      %4233 = vmatprep.subr.mxu0 0.0
      %4234 = vmatpush1.msra.mxu0 0.0
      %4235 = vmatprep.subr.mxu0 0.0
      %4236 = vmatpush1.msra.mxu0 0.0
      %4237 = vmatprep.subr.mxu0 0.0
      %4238 = vmatpush1.msra.mxu0 0.0
      %4239 = vmatprep.subr.mxu0 0.0
      %4240 = vmatpush1.msra.mxu0 0.0
      %4241 = vmatprep.subr.mxu0 0.0
      %4242 = vmatpush1.msra.mxu0 0.0
      %4243 = vmatprep.subr.mxu0 0.0
      %4244 = vmatpush1.msra.mxu0 0.0
      %4245 = vmatprep.subr.mxu0 0.0
      %4246 = vmatpush1.msra.mxu0 0.0
      %4247 = vmatprep.subr.mxu0 0.0
      %4248 = vmatpush1.msra.mxu0 0.0
      %4249 = vmatprep.subr.mxu0 0.0
      %4250 = vmatpush1.msra.mxu0 0.0
      %4251 = vmatprep.subr.mxu0 0.0
      %4252 = vmatpush1.msra.mxu0 0.0
      %4253 = vmatprep.subr.mxu0 0.0
      %4254 = vmatpush1.msra.mxu0 0.0
      %4255 = vmatprep.subr.mxu0 0.0
      %4256 = vmatpush1.msra.mxu0 0.0
      %4257 = vmatprep.subr.mxu0 0.0
      %4258 = vmatpush1.msra.mxu0 0.0
      %4259 = vmatprep.subr.mxu0 0.0
      %4260 = vmatpush1.msra.mxu0 0.0
      %4261 = vmatprep.subr.mxu0 0.0
      %4262 = vmatpush1.msra.mxu0 0.0
      %4263 = vmatprep.subr.mxu0 0.0
      %4264 = vmatpush1.msra.mxu0 0.0
      %4265 = vmatprep.subr.mxu0 0.0
      %4266 = vmatpush1.msra.mxu0 0.0
      %4267 = vmatprep.subr.mxu0 0.0
      %4268 = vmatpush1.msra.mxu0 0.0
      %4269 = vmatprep.subr.mxu0 0.0
      %4270 = vmatpush1.msra.mxu0 0.0
      %4271 = vmatprep.subr.mxu0 0.0
      %4272 = vmatpush1.msra.mxu0 0.0
      %4273 = vmatprep.subr.mxu0 0.0
      %4274 = vmatpush1.msra.mxu0 0.0
      %4275 = vmatprep.subr.mxu0 0.0
      %4276 = vmatpush1.msra.mxu0 0.0
      %4277 = vmatprep.subr.mxu0 0.0
      %4278 = vmatpush1.msra.mxu0 0.0
      %4279 = vmatprep.subr.mxu0 0.0
      %4280 = vmatpush1.msra.mxu0 0.0
      %4281 = vmatprep.subr.mxu0 0.0
      %4282 = vmatpush1.msra.mxu0 0.0
      %4283 = vmatprep.subr.mxu0 0.0
      %4284 = vmatpush1.msra.mxu0 0.0
      %4285 = vmatprep.subr.mxu0 0.0
      %4286 = vmatpush1.msra.mxu0 0.0
      %4287 = vmatprep.subr.mxu0 0.0
      %4288 = vmatpush1.msra.mxu0 0.0
      %4289 = vmatprep.subr.mxu0 0.0
      %4290 = vmatpush1.msra.mxu0 0.0
      %4291 = vmatprep.subr.mxu0 0.0
      %4292 = vmatpush1.msra.mxu0 0.0
      %4293 = vmatprep.subr.mxu0 0.0
      %4294 = vmatpush1.msra.mxu0 0.0
      %4295 = vmatprep.mubr.f32.mxu0 0.0
      %4296 = vmatmul.mubr.f32.gmra.mrb[0].mxu0 %v4223
      %v4297 = vpop.f32.mrb[0].mxu0
      %v4298 = vadd.f32 0.0, %v4297
      %v4299 = vpop.f32.mrb[0].mxu0
      %v4300 = vadd.f32 0.0, %v4299
      %4301 = vdwg.mxu0
      %v4302 = vadd.f32 %v4210, %v4298
      %v4303 = vadd.f32 %v4211, %v4300
      %4304 = vrot.lane.b32.xlu0 %v3947, 1
      %v4305 = vpop.permute.xlu0 %4304
      %4306 = vrot.lane.b32.xlu0 %v3948, 1
      %v4307 = vpop.permute.xlu0 %4306
      %v4308 = vsel %vm914, %v4305, %v4307
      %v4309 = vsel %vm914, %v4307, %v4305
      %v4310 = vmul.f32 %v4309, %v921
      %v4311 = vmul.f32 %v4308, %v925
      %s4312 = scalar_lea.vmem %s10, 24
      %v4313 = vld [vmem:[%s4312] sm:$0xff]
      %v4315 = vsel %vm3133, %v4313, 0
      %v4318 = vsel %vm3137, %v4310, 0
      %v4321 = vsel %vm3137, %v4311, 0
      %4323 = vmatprep.subr.mxu0 %v4321
      %4324 = vmatpush1.msra.mxu0 %v4318
      %4325 = vmatprep.subr.mxu0 0.0
      %4326 = vmatpush1.msra.mxu0 0.0
      %4327 = vmatprep.subr.mxu0 0.0
      %4328 = vmatpush1.msra.mxu0 0.0
      %4329 = vmatprep.subr.mxu0 0.0
      %4330 = vmatpush1.msra.mxu0 0.0
      %4331 = vmatprep.subr.mxu0 0.0
      %4332 = vmatpush1.msra.mxu0 0.0
      %4333 = vmatprep.subr.mxu0 0.0
      %4334 = vmatpush1.msra.mxu0 0.0
      %4335 = vmatprep.subr.mxu0 0.0
      %4336 = vmatpush1.msra.mxu0 0.0
      %4337 = vmatprep.subr.mxu0 0.0
      %4338 = vmatpush1.msra.mxu0 0.0
      %4339 = vmatprep.subr.mxu0 0.0
      %4340 = vmatpush1.msra.mxu0 0.0
      %4341 = vmatprep.subr.mxu0 0.0
      %4342 = vmatpush1.msra.mxu0 0.0
      %4343 = vmatprep.subr.mxu0 0.0
      %4344 = vmatpush1.msra.mxu0 0.0
      %4345 = vmatprep.subr.mxu0 0.0
      %4346 = vmatpush1.msra.mxu0 0.0
      %4347 = vmatprep.subr.mxu0 0.0
      %4348 = vmatpush1.msra.mxu0 0.0
      %4349 = vmatprep.subr.mxu0 0.0
      %4350 = vmatpush1.msra.mxu0 0.0
      %4351 = vmatprep.subr.mxu0 0.0
      %4352 = vmatpush1.msra.mxu0 0.0
      %4353 = vmatprep.subr.mxu0 0.0
      %4354 = vmatpush1.msra.mxu0 0.0
      %4355 = vmatprep.subr.mxu0 0.0
      %4356 = vmatpush1.msra.mxu0 0.0
      %4357 = vmatprep.subr.mxu0 0.0
      %4358 = vmatpush1.msra.mxu0 0.0
      %4359 = vmatprep.subr.mxu0 0.0
      %4360 = vmatpush1.msra.mxu0 0.0
      %4361 = vmatprep.subr.mxu0 0.0
      %4362 = vmatpush1.msra.mxu0 0.0
      %4363 = vmatprep.subr.mxu0 0.0
      %4364 = vmatpush1.msra.mxu0 0.0
      %4365 = vmatprep.subr.mxu0 0.0
      %4366 = vmatpush1.msra.mxu0 0.0
      %4367 = vmatprep.subr.mxu0 0.0
      %4368 = vmatpush1.msra.mxu0 0.0
      %4369 = vmatprep.subr.mxu0 0.0
      %4370 = vmatpush1.msra.mxu0 0.0
      %4371 = vmatprep.subr.mxu0 0.0
      %4372 = vmatpush1.msra.mxu0 0.0
      %4373 = vmatprep.subr.mxu0 0.0
      %4374 = vmatpush1.msra.mxu0 0.0
      %4375 = vmatprep.subr.mxu0 0.0
      %4376 = vmatpush1.msra.mxu0 0.0
      %4377 = vmatprep.subr.mxu0 0.0
      %4378 = vmatpush1.msra.mxu0 0.0
      %4379 = vmatprep.subr.mxu0 0.0
      %4380 = vmatpush1.msra.mxu0 0.0
      %4381 = vmatprep.subr.mxu0 0.0
      %4382 = vmatpush1.msra.mxu0 0.0
      %4383 = vmatprep.subr.mxu0 0.0
      %4384 = vmatpush1.msra.mxu0 0.0
      %4385 = vmatprep.subr.mxu0 0.0
      %4386 = vmatpush1.msra.mxu0 0.0
      %4387 = vmatprep.mubr.f32.mxu0 0.0
      %4388 = vmatmul.mubr.f32.gmra.mrb[0].mxu0 %v4315
      %v4389 = vpop.f32.mrb[0].mxu0
      %v4390 = vadd.f32 0.0, %v4389
      %v4391 = vpop.f32.mrb[0].mxu0
      %v4392 = vadd.f32 0.0, %v4391
      %4393 = vdwg.mxu0
      %v4394 = vadd.f32 %v4302, %v4390
      %v4395 = vadd.f32 %v4303, %v4392
      %4396 = vrot.lane.b32.xlu0 %v3947, 127
      %v4397 = vpop.permute.xlu0 %4396
      %4398 = vrot.lane.b32.xlu0 %v3948, 127
      %v4399 = vpop.permute.xlu0 %4398
      %v4400 = vsel %vm1030, %v4397, %v4399
      %v4401 = vsel %vm1030, %v4399, %v4397
      %v4402 = vmul.f32 %v4400, %v1037
      %v4403 = vmul.f32 %v4401, %v1041
      %s4404 = scalar_lea.vmem %s10, 40
      %v4405 = vld [vmem:[%s4404] sm:$0xff]
      %v4407 = vsel %vm3133, %v4405, 0
      %v4410 = vsel %vm3137, %v4402, 0
      %v4413 = vsel %vm3137, %v4403, 0
      %4415 = vmatprep.subr.mxu0 %v4413
      %4416 = vmatpush1.msra.mxu0 %v4410
      %4417 = vmatprep.subr.mxu0 0.0
      %4418 = vmatpush1.msra.mxu0 0.0
      %4419 = vmatprep.subr.mxu0 0.0
      %4420 = vmatpush1.msra.mxu0 0.0
      %4421 = vmatprep.subr.mxu0 0.0
      %4422 = vmatpush1.msra.mxu0 0.0
      %4423 = vmatprep.subr.mxu0 0.0
      %4424 = vmatpush1.msra.mxu0 0.0
      %4425 = vmatprep.subr.mxu0 0.0
      %4426 = vmatpush1.msra.mxu0 0.0
      %4427 = vmatprep.subr.mxu0 0.0
      %4428 = vmatpush1.msra.mxu0 0.0
      %4429 = vmatprep.subr.mxu0 0.0
      %4430 = vmatpush1.msra.mxu0 0.0
      %4431 = vmatprep.subr.mxu0 0.0
      %4432 = vmatpush1.msra.mxu0 0.0
      %4433 = vmatprep.subr.mxu0 0.0
      %4434 = vmatpush1.msra.mxu0 0.0
      %4435 = vmatprep.subr.mxu0 0.0
      %4436 = vmatpush1.msra.mxu0 0.0
      %4437 = vmatprep.subr.mxu0 0.0
      %4438 = vmatpush1.msra.mxu0 0.0
      %4439 = vmatprep.subr.mxu0 0.0
      %4440 = vmatpush1.msra.mxu0 0.0
      %4441 = vmatprep.subr.mxu0 0.0
      %4442 = vmatpush1.msra.mxu0 0.0
      %4443 = vmatprep.subr.mxu0 0.0
      %4444 = vmatpush1.msra.mxu0 0.0
      %4445 = vmatprep.subr.mxu0 0.0
      %4446 = vmatpush1.msra.mxu0 0.0
      %4447 = vmatprep.subr.mxu0 0.0
      %4448 = vmatpush1.msra.mxu0 0.0
      %4449 = vmatprep.subr.mxu0 0.0
      %4450 = vmatpush1.msra.mxu0 0.0
      %4451 = vmatprep.subr.mxu0 0.0
      %4452 = vmatpush1.msra.mxu0 0.0
      %4453 = vmatprep.subr.mxu0 0.0
      %4454 = vmatpush1.msra.mxu0 0.0
      %4455 = vmatprep.subr.mxu0 0.0
      %4456 = vmatpush1.msra.mxu0 0.0
      %4457 = vmatprep.subr.mxu0 0.0
      %4458 = vmatpush1.msra.mxu0 0.0
      %4459 = vmatprep.subr.mxu0 0.0
      %4460 = vmatpush1.msra.mxu0 0.0
      %4461 = vmatprep.subr.mxu0 0.0
      %4462 = vmatpush1.msra.mxu0 0.0
      %4463 = vmatprep.subr.mxu0 0.0
      %4464 = vmatpush1.msra.mxu0 0.0
      %4465 = vmatprep.subr.mxu0 0.0
      %4466 = vmatpush1.msra.mxu0 0.0
      %4467 = vmatprep.subr.mxu0 0.0
      %4468 = vmatpush1.msra.mxu0 0.0
      %4469 = vmatprep.subr.mxu0 0.0
      %4470 = vmatpush1.msra.mxu0 0.0
      %4471 = vmatprep.subr.mxu0 0.0
      %4472 = vmatpush1.msra.mxu0 0.0
      %4473 = vmatprep.subr.mxu0 0.0
      %4474 = vmatpush1.msra.mxu0 0.0
      %4475 = vmatprep.subr.mxu0 0.0
      %4476 = vmatpush1.msra.mxu0 0.0
      %4477 = vmatprep.subr.mxu0 0.0
      %4478 = vmatpush1.msra.mxu0 0.0
      %4479 = vmatprep.mubr.f32.mxu0 0.0
      %4480 = vmatmul.mubr.f32.gmra.mrb[0].mxu0 %v4407
      %v4481 = vpop.f32.mrb[0].mxu0
      %v4482 = vadd.f32 0.0, %v4481
      %v4483 = vpop.f32.mrb[0].mxu0
      %v4484 = vadd.f32 0.0, %v4483
      %4485 = vdwg.mxu0
      %v4486 = vadd.f32 %v4394, %v4482
      %v4487 = vadd.f32 %v4395, %v4484
      %4488 = vrot.lane.b32.xlu0 %v3947, 113
      %v4489 = vpop.permute.xlu0 %4488
      %4490 = vrot.lane.b32.xlu0 %v3948, 113
      %v4491 = vpop.permute.xlu0 %4490
      %v4492 = vsel %vm1146, %v4489, %v4491
      %v4493 = vsel %vm1146, %v4491, %v4489
      %v4494 = vmul.f32 %v4492, %v1153
      %v4495 = vmul.f32 %v4493, %v1157
      %s4496 = scalar_lea.vmem %s10, 48
      %v4497 = vld [vmem:[%s4496] sm:$0xff]
      %v4499 = vsel %vm3133, %v4497, 0
      %v4502 = vsel %vm3137, %v4494, 0
      %v4505 = vsel %vm3137, %v4495, 0
      %4507 = vmatprep.subr.mxu0 %v4505
      %4508 = vmatpush1.msra.mxu0 %v4502
      %4509 = vmatprep.subr.mxu0 0.0
      %4510 = vmatpush1.msra.mxu0 0.0
      %4511 = vmatprep.subr.mxu0 0.0
      %4512 = vmatpush1.msra.mxu0 0.0
      %4513 = vmatprep.subr.mxu0 0.0
      %4514 = vmatpush1.msra.mxu0 0.0
      %4515 = vmatprep.subr.mxu0 0.0
      %4516 = vmatpush1.msra.mxu0 0.0
      %4517 = vmatprep.subr.mxu0 0.0
      %4518 = vmatpush1.msra.mxu0 0.0
      %4519 = vmatprep.subr.mxu0 0.0
      %4520 = vmatpush1.msra.mxu0 0.0
      %4521 = vmatprep.subr.mxu0 0.0
      %4522 = vmatpush1.msra.mxu0 0.0
      %4523 = vmatprep.subr.mxu0 0.0
      %4524 = vmatpush1.msra.mxu0 0.0
      %4525 = vmatprep.subr.mxu0 0.0
      %4526 = vmatpush1.msra.mxu0 0.0
      %4527 = vmatprep.subr.mxu0 0.0
      %4528 = vmatpush1.msra.mxu0 0.0
      %4529 = vmatprep.subr.mxu0 0.0
      %4530 = vmatpush1.msra.mxu0 0.0
      %4531 = vmatprep.subr.mxu0 0.0
      %4532 = vmatpush1.msra.mxu0 0.0
      %4533 = vmatprep.subr.mxu0 0.0
      %4534 = vmatpush1.msra.mxu0 0.0
      %4535 = vmatprep.subr.mxu0 0.0
      %4536 = vmatpush1.msra.mxu0 0.0
      %4537 = vmatprep.subr.mxu0 0.0
      %4538 = vmatpush1.msra.mxu0 0.0
      %4539 = vmatprep.subr.mxu0 0.0
      %4540 = vmatpush1.msra.mxu0 0.0
      %4541 = vmatprep.subr.mxu0 0.0
      %4542 = vmatpush1.msra.mxu0 0.0
      %4543 = vmatprep.subr.mxu0 0.0
      %4544 = vmatpush1.msra.mxu0 0.0
      %4545 = vmatprep.subr.mxu0 0.0
      %4546 = vmatpush1.msra.mxu0 0.0
      %4547 = vmatprep.subr.mxu0 0.0
      %4548 = vmatpush1.msra.mxu0 0.0
      %4549 = vmatprep.subr.mxu0 0.0
      %4550 = vmatpush1.msra.mxu0 0.0
      %4551 = vmatprep.subr.mxu0 0.0
      %4552 = vmatpush1.msra.mxu0 0.0
      %4553 = vmatprep.subr.mxu0 0.0
      %4554 = vmatpush1.msra.mxu0 0.0
      %4555 = vmatprep.subr.mxu0 0.0
      %4556 = vmatpush1.msra.mxu0 0.0
      %4557 = vmatprep.subr.mxu0 0.0
      %4558 = vmatpush1.msra.mxu0 0.0
      %4559 = vmatprep.subr.mxu0 0.0
      %4560 = vmatpush1.msra.mxu0 0.0
      %4561 = vmatprep.subr.mxu0 0.0
      %4562 = vmatpush1.msra.mxu0 0.0
      %4563 = vmatprep.subr.mxu0 0.0
      %4564 = vmatpush1.msra.mxu0 0.0
      %4565 = vmatprep.subr.mxu0 0.0
      %4566 = vmatpush1.msra.mxu0 0.0
      %4567 = vmatprep.subr.mxu0 0.0
      %4568 = vmatpush1.msra.mxu0 0.0
      %4569 = vmatprep.subr.mxu0 0.0
      %4570 = vmatpush1.msra.mxu0 0.0
      %4571 = vmatprep.mubr.f32.mxu0 0.0
      %4572 = vmatmul.mubr.f32.gmra.mrb[0].mxu0 %v4499
      %v4573 = vpop.f32.mrb[0].mxu0
      %v4574 = vadd.f32 0.0, %v4573
      %v4575 = vpop.f32.mrb[0].mxu0
      %v4576 = vadd.f32 0.0, %v4575
      %4577 = vdwg.mxu0
      %v4578 = vadd.f32 %v4486, %v4574
      %v4579 = vadd.f32 %v4487, %v4576
      %4580 = vrot.lane.b32.xlu0 %v3947, 112
      %v4581 = vpop.permute.xlu0 %4580
      %4582 = vrot.lane.b32.xlu0 %v3948, 112
      %v4583 = vpop.permute.xlu0 %4582
      %v4584 = vsel %vm1262, %v4581, %v4583
      %v4585 = vsel %vm1262, %v4583, %v4581
      %v4586 = vmul.f32 %v4584, %v1269
      %v4587 = vmul.f32 %v4585, %v1273
      %s4588 = scalar_lea.vmem %s10, 56
      %v4589 = vld [vmem:[%s4588] sm:$0xff]
      %v4591 = vsel %vm3133, %v4589, 0
      %v4594 = vsel %vm3137, %v4586, 0
      %v4597 = vsel %vm3137, %v4587, 0
      %4599 = vmatprep.subr.mxu0 %v4597
      %4600 = vmatpush1.msra.mxu0 %v4594
      %4601 = vmatprep.subr.mxu0 0.0
      %4602 = vmatpush1.msra.mxu0 0.0
      %4603 = vmatprep.subr.mxu0 0.0
      %4604 = vmatpush1.msra.mxu0 0.0
      %4605 = vmatprep.subr.mxu0 0.0
      %4606 = vmatpush1.msra.mxu0 0.0
      %4607 = vmatprep.subr.mxu0 0.0
      %4608 = vmatpush1.msra.mxu0 0.0
      %4609 = vmatprep.subr.mxu0 0.0
      %4610 = vmatpush1.msra.mxu0 0.0
      %4611 = vmatprep.subr.mxu0 0.0
      %4612 = vmatpush1.msra.mxu0 0.0
      %4613 = vmatprep.subr.mxu0 0.0
      %4614 = vmatpush1.msra.mxu0 0.0
      %4615 = vmatprep.subr.mxu0 0.0
      %4616 = vmatpush1.msra.mxu0 0.0
      %4617 = vmatprep.subr.mxu0 0.0
      %4618 = vmatpush1.msra.mxu0 0.0
      %4619 = vmatprep.subr.mxu0 0.0
      %4620 = vmatpush1.msra.mxu0 0.0
      %4621 = vmatprep.subr.mxu0 0.0
      %4622 = vmatpush1.msra.mxu0 0.0
      %4623 = vmatprep.subr.mxu0 0.0
      %4624 = vmatpush1.msra.mxu0 0.0
      %4625 = vmatprep.subr.mxu0 0.0
      %4626 = vmatpush1.msra.mxu0 0.0
      %4627 = vmatprep.subr.mxu0 0.0
      %4628 = vmatpush1.msra.mxu0 0.0
      %4629 = vmatprep.subr.mxu0 0.0
      %4630 = vmatpush1.msra.mxu0 0.0
      %4631 = vmatprep.subr.mxu0 0.0
      %4632 = vmatpush1.msra.mxu0 0.0
      %4633 = vmatprep.subr.mxu0 0.0
      %4634 = vmatpush1.msra.mxu0 0.0
      %4635 = vmatprep.subr.mxu0 0.0
      %4636 = vmatpush1.msra.mxu0 0.0
      %4637 = vmatprep.subr.mxu0 0.0
      %4638 = vmatpush1.msra.mxu0 0.0
      %4639 = vmatprep.subr.mxu0 0.0
      %4640 = vmatpush1.msra.mxu0 0.0
      %4641 = vmatprep.subr.mxu0 0.0
      %4642 = vmatpush1.msra.mxu0 0.0
      %4643 = vmatprep.subr.mxu0 0.0
      %4644 = vmatpush1.msra.mxu0 0.0
      %4645 = vmatprep.subr.mxu0 0.0
      %4646 = vmatpush1.msra.mxu0 0.0
      %4647 = vmatprep.subr.mxu0 0.0
      %4648 = vmatpush1.msra.mxu0 0.0
      %4649 = vmatprep.subr.mxu0 0.0
      %4650 = vmatpush1.msra.mxu0 0.0
      %4651 = vmatprep.subr.mxu0 0.0
      %4652 = vmatpush1.msra.mxu0 0.0
      %4653 = vmatprep.subr.mxu0 0.0
      %4654 = vmatpush1.msra.mxu0 0.0
      %4655 = vmatprep.subr.mxu0 0.0
      %4656 = vmatpush1.msra.mxu0 0.0
      %4657 = vmatprep.subr.mxu0 0.0
      %4658 = vmatpush1.msra.mxu0 0.0
      %4659 = vmatprep.subr.mxu0 0.0
      %4660 = vmatpush1.msra.mxu0 0.0
      %4661 = vmatprep.subr.mxu0 0.0
      %4662 = vmatpush1.msra.mxu0 0.0
      %4663 = vmatprep.mubr.f32.mxu0 0.0
      %4664 = vmatmul.mubr.f32.gmra.mrb[0].mxu0 %v4591
      %v4665 = vpop.f32.mrb[0].mxu0
      %v4666 = vadd.f32 0.0, %v4665
      %v4667 = vpop.f32.mrb[0].mxu0
      %v4668 = vadd.f32 0.0, %v4667
      %4669 = vdwg.mxu0
      %v4670 = vadd.f32 %v4578, %v4666
      %v4671 = vadd.f32 %v4579, %v4668
      %4672 = vrot.lane.b32.xlu0 %v3947, 111
      %v4673 = vpop.permute.xlu0 %4672
      %4674 = vrot.lane.b32.xlu0 %v3948, 111
      %v4675 = vpop.permute.xlu0 %4674
      %v4676 = vsel %vm1378, %v4673, %v4675
      %v4677 = vsel %vm1378, %v4675, %v4673
      %v4678 = vmul.f32 %v4676, %v1385
      %v4679 = vmul.f32 %v4677, %v1389
      %s4680 = scalar_lea.vmem %s10, 64
      %v4681 = vld [vmem:[%s4680] sm:$0xff]
      %v4683 = vsel %vm3133, %v4681, 0
      %v4686 = vsel %vm3137, %v4678, 0
      %v4689 = vsel %vm3137, %v4679, 0
      %4691 = vmatprep.subr.mxu0 %v4689
      %4692 = vmatpush1.msra.mxu0 %v4686
      %4693 = vmatprep.subr.mxu0 0.0
      %4694 = vmatpush1.msra.mxu0 0.0
      %4695 = vmatprep.subr.mxu0 0.0
      %4696 = vmatpush1.msra.mxu0 0.0
      %4697 = vmatprep.subr.mxu0 0.0
      %4698 = vmatpush1.msra.mxu0 0.0
      %4699 = vmatprep.subr.mxu0 0.0
      %4700 = vmatpush1.msra.mxu0 0.0
      %4701 = vmatprep.subr.mxu0 0.0
      %4702 = vmatpush1.msra.mxu0 0.0
      %4703 = vmatprep.subr.mxu0 0.0
      %4704 = vmatpush1.msra.mxu0 0.0
      %4705 = vmatprep.subr.mxu0 0.0
      %4706 = vmatpush1.msra.mxu0 0.0
      %4707 = vmatprep.subr.mxu0 0.0
      %4708 = vmatpush1.msra.mxu0 0.0
      %4709 = vmatprep.subr.mxu0 0.0
      %4710 = vmatpush1.msra.mxu0 0.0
      %4711 = vmatprep.subr.mxu0 0.0
      %4712 = vmatpush1.msra.mxu0 0.0
      %4713 = vmatprep.subr.mxu0 0.0
      %4714 = vmatpush1.msra.mxu0 0.0
      %4715 = vmatprep.subr.mxu0 0.0
      %4716 = vmatpush1.msra.mxu0 0.0
      %4717 = vmatprep.subr.mxu0 0.0
      %4718 = vmatpush1.msra.mxu0 0.0
      %4719 = vmatprep.subr.mxu0 0.0
      %4720 = vmatpush1.msra.mxu0 0.0
      %4721 = vmatprep.subr.mxu0 0.0
      %4722 = vmatpush1.msra.mxu0 0.0
      %4723 = vmatprep.subr.mxu0 0.0
      %4724 = vmatpush1.msra.mxu0 0.0
      %4725 = vmatprep.subr.mxu0 0.0
      %4726 = vmatpush1.msra.mxu0 0.0
      %4727 = vmatprep.subr.mxu0 0.0
      %4728 = vmatpush1.msra.mxu0 0.0
      %4729 = vmatprep.subr.mxu0 0.0
      %4730 = vmatpush1.msra.mxu0 0.0
      %4731 = vmatprep.subr.mxu0 0.0
      %4732 = vmatpush1.msra.mxu0 0.0
      %4733 = vmatprep.subr.mxu0 0.0
      %4734 = vmatpush1.msra.mxu0 0.0
      %4735 = vmatprep.subr.mxu0 0.0
      %4736 = vmatpush1.msra.mxu0 0.0
      %4737 = vmatprep.subr.mxu0 0.0
      %4738 = vmatpush1.msra.mxu0 0.0
      %4739 = vmatprep.subr.mxu0 0.0
      %4740 = vmatpush1.msra.mxu0 0.0
      %4741 = vmatprep.subr.mxu0 0.0
      %4742 = vmatpush1.msra.mxu0 0.0
      %4743 = vmatprep.subr.mxu0 0.0
      %4744 = vmatpush1.msra.mxu0 0.0
      %4745 = vmatprep.subr.mxu0 0.0
      %4746 = vmatpush1.msra.mxu0 0.0
      %4747 = vmatprep.subr.mxu0 0.0
      %4748 = vmatpush1.msra.mxu0 0.0
      %4749 = vmatprep.subr.mxu0 0.0
      %4750 = vmatpush1.msra.mxu0 0.0
      %4751 = vmatprep.subr.mxu0 0.0
      %4752 = vmatpush1.msra.mxu0 0.0
      %4753 = vmatprep.subr.mxu0 0.0
      %4754 = vmatpush1.msra.mxu0 0.0
      %4755 = vmatprep.mubr.f32.mxu0 0.0
      %4756 = vmatmul.mubr.f32.gmra.mrb[0].mxu0 %v4683
      %v4757 = vpop.f32.mrb[0].mxu0
      %v4758 = vadd.f32 0.0, %v4757
      %v4759 = vpop.f32.mrb[0].mxu0
      %v4760 = vadd.f32 0.0, %v4759
      %4761 = vdwg.mxu0
      %v4762 = vadd.f32 %v4670, %v4758
      %v4763 = vadd.f32 %v4671, %v4760
      %v4764 = vld [vmem:[%s11] sm:$0xff]
      %4766 = vset.pattern.permute.xlu0 0
      %4767 = vperm.xlu0 %4766, %v4764
      %v4768 = vpop.permute.xlu0 %4767
      %v4770 = vadd.f32 %v4762, %v4768
      %v4771 = vadd.f32 %v4763, %v4768
      %v4772 = vmax.f32 %v4770, 0.0
      %v4773 = vmax.f32 %v4771, 0.0
      %4774 = vst [vmem:[%s453] sm:$0xff] %v4772
      %4775 = vst [vmem:[%s453 + $0x8] sm:$0xff] %v4773
      %p4776 = scmp.lt.s32.totalorder %s25, 1
      %s4777 = scalar_select %p4776, %s25, 1
      %s4778 = smul.addr %s4777, 4
      %s4779 = smul.addr %s4778, 8
      %s4780 = scalar_lea.vmem %s12, %s4779
      %p4781 = scmp.lt.s32.totalorder %s25, 1
      %s4782 = scalar_select %p4781, %s25, 1
      %s4783 = smul.addr %s4782, 2
      %s4784 = smul.addr %s4783, 8
      %s4785 = scalar_lea.vmem %s13, %s4784
      // Predicated region
      $region69: #{encoder_forward_pallas.1} parent=67 // pred_check
        %p4786 = pneg %p300
      $region70: #{encoder_forward_pallas.1} parent=67 // pred_check_branch
        %4788 = sbr.rel (%p4786) target = $region72
      $region71: #{encoder_forward_pallas.1} parent=67 // pred_region
        _
      $region72: #{encoder_forward_pallas.1} parent=67 // pred_fallthru
        _
      // Predicated region
      $region73: #{encoder_forward_pallas.1} parent=67 // pred_check
        %p4789 = pneg %p326
      $region74: #{encoder_forward_pallas.1} parent=67 // pred_check_branch
        %4791 = sbr.rel (%p4789) target = $region76
      $region75: #{encoder_forward_pallas.1} parent=67 // pred_region
        _
      $region76: #{encoder_forward_pallas.1} parent=67 // pred_fallthru
        _
    $region68: #{encoder_forward_pallas.1} parent=5 // pred_fallthru
      _
    %p4792 = scmp.le.s32.totalorder 2, %s20
    // Predicated region
    $region77: #{encoder_forward_pallas.1} parent=5 // pred_check
      %p4793 = pneg %p4792
    $region78: #{encoder_forward_pallas.1} parent=5 // pred_check_branch
      %4795 = sbr.rel (%p4793) target = $region80
    $region79: #{encoder_forward_pallas.1} parent=5 // pred_region
      %s4796 = ssub.s32 %s20, 2
      // Predicated region
      $region81: #{encoder_forward_pallas.1} parent=79 // pred_check
        %p4797 = pneg %p306
      $region82: #{encoder_forward_pallas.1} parent=79 // pred_check_branch
        %4799 = sbr.rel (%p4797) target = $region84
      $region83: #{encoder_forward_pallas.1} parent=79 // pred_region
        %p4800 = scmp.lt.s32.totalorder %s26, 1
        %s4801 = scalar_select %p4800, %s26, 1
        %s4802 = smul.addr %s4801, 4
        %s4803 = smul.addr %s4802, 8
        %s4804 = scalar_lea.vmem %s12, %s4803
      $region84: #{encoder_forward_pallas.1} parent=79 // pred_fallthru
        _
      // Predicated region
      $region85: #{encoder_forward_pallas.1} parent=79 // pred_check
        %p4805 = pneg %p332
      $region86: #{encoder_forward_pallas.1} parent=79 // pred_check_branch
        %4807 = sbr.rel (%p4805) target = $region88
      $region87: #{encoder_forward_pallas.1} parent=79 // pred_region
        %p4808 = scmp.lt.s32.totalorder %s26, 1
        %s4809 = scalar_select %p4808, %s26, 1
        %s4810 = smul.addr %s4809, 2
        %s4811 = smul.addr %s4810, 8
        %s4812 = scalar_lea.vmem %s13, %s4811
      $region88: #{encoder_forward_pallas.1} parent=79 // pred_fallthru
        _
    $region80: #{encoder_forward_pallas.1} parent=5 // pred_fallthru
      _
  $region6: #{encoder_forward_pallas.1} parent=0 // loop_footer
    %s24 = sadd.s32 1, %s20
  $region7: #{encoder_forward_pallas.1} parent=0 // loop_footer_branch
    %19 = sbr.rel target = $region3
  $region8: #{encoder_forward_pallas.1} parent=0 // loop_exit
    _

</llo_original>
